<compile_context>
chip_gen: v7x
topology: tpu7x:2x2x1
jax: 0.10.0
libtpu: 0.0.40
codegen_flags: <defaults>
</compile_context>

<pallas_src>
import functools
import math

import jax
import jax.numpy as jnp
from jax.experimental import pallas as pl
from jax.experimental.pallas import tpu as pltpu

LN_EPS = 1e-5
_INV_SQRT2 = 1.0 / math.sqrt(2.0)

# Matmul operands are fed to the MXU in bf16 with f32 accumulation (per perf feedback).
# Set to jnp.float32 to recover exact f32 matmul semantics.
MM_DTYPE = jnp.bfloat16


# ----------------------------------------------------------------------------
# Shared math helpers (pure jnp + pl; used inside the kernels; the f32/bf16
# mixed-precision ones are reused by the pure-JAX reference as well)
# ----------------------------------------------------------------------------
def _mm(a, w):
    """MXU matmul: bf16 operands, f32 accumulation."""
    return jnp.dot(a.astype(MM_DTYPE), w.astype(MM_DTYPE),
                   preferred_element_type=jnp.float32)


def _layernorm(h, g, b):
    m = jnp.mean(h, axis=-1, keepdims=True)
    v = jnp.mean(jnp.square(h - m), axis=-1, keepdims=True)
    return (h - m) * jax.lax.rsqrt(v + LN_EPS) * g + b


def _geglu_ff(xn, w1h, b1h, w1g, b1g, w2, b2):
    """GEGLU FF with the projection weight pre-split into value/gate halves."""
    hidden = _mm(xn, w1h) + b1h
    gate = _mm(xn, w1g) + b1g
    gate = 0.5 * gate * (1.0 + jax.lax.erf(gate * _INV_SQRT2))   # exact-erf GELU
    return _mm(hidden * gate, w2) + b2


def _mha_proj(xq, xkv, wq_h, wk_h, wv_h, wo_h, bo, *, n_heads, d_head):
    """Multi-head attention + output projection for one batch element.

    All head matmuls are batched over the leading head dim (single dot_generals per step,
    no per-head Python loop, no misaligned sub-lane slices).
      xq:  (nq, Dq) f32     xkv: (nk, Dkv) f32
      wq_h: (H, Dq, dh)  wk_h/wv_h: (H, Dkv, dh)  wo_h: (H, dh, Dout)   [bf16]
      bo:  (1, Dout) f32
    """
    nq, dq = xq.shape
    nk, dkv = xkv.shape
    qb = jnp.broadcast_to(xq.astype(MM_DTYPE)[None], (n_heads, nq, dq))
    kb = jnp.broadcast_to(xkv.astype(MM_DTYPE)[None], (n_heads, nk, dkv))
    q = jnp.einsum('hnd,hdk->hnk', qb, wq_h, preferred_element_type=jnp.float32)
    k = jnp.einsum('hnd,hdk->hnk', kb, wk_h, preferred_element_type=jnp.float32)
    v = jnp.einsum('hnd,hdk->hnk', kb, wv_h, preferred_element_type=jnp.float32)

    s = jnp.einsum('hqd,hkd->hqk', q.astype(MM_DTYPE), k.astype(MM_DTYPE),
                   preferred_element_type=jnp.float32)
    s = s * (1.0 / math.sqrt(d_head))
    s = s - jnp.max(s, axis=-1, keepdims=True)
    p = jnp.exp(s)
    # softmax denominator on the EUP reciprocal slot instead of a VPU divide
    p = p * pl.reciprocal(jnp.sum(p, axis=-1, keepdims=True), approx=True)

    o = jnp.einsum('hqk,hkd->hqd', p.astype(MM_DTYPE), v.astype(MM_DTYPE),
                   preferred_element_type=jnp.float32)
    # output projection applied per head and summed (== concat(heads) @ Wo)
    out = jnp.einsum('hqd,hdD->hqD', o.astype(MM_DTYPE), wo_h,
                     preferred_element_type=jnp.float32)
    return jnp.sum(out, axis=0) + bo


# ----------------------------------------------------------------------------
# Kernel 1: norm1 + self-attention + residual, with KVCopy extraction
# ----------------------------------------------------------------------------
def _self_attn_kv_kernel(x_ref, g_ref, b_ref, wq_ref, wk_ref, wv_ref, wo_ref, bo_ref,
                         wke_ref, wve_ref, o_ref, k_ref, v_ref, *, n_heads, d_head):
    x = x_ref[0].astype(jnp.float32)                      # (S, D)
    hn = _layernorm(x, g_ref[...], b_ref[...])
    # extract_kv1 (KVCopy.to_k / to_v, no bias) on the norm1 output
    k_ref[0] = _mm(hn, wke_ref[...]).astype(k_ref.dtype)
    v_ref[0] = _mm(hn, wve_ref[...]).astype(v_ref.dtype)
    out = _mha_proj(hn, hn, wq_ref[...], wk_ref[...], wv_ref[...], wo_ref[...],
                    bo_ref[...], n_heads=n_heads, d_head=d_head)
    o_ref[0] = (x + out).astype(o_ref.dtype)


# ----------------------------------------------------------------------------
# Kernel 2: GatedSelfAttentionDense (GLIGEN fuser), fully fused
# ----------------------------------------------------------------------------
def _fuser_kernel(x_ref, objs_ref, linw_ref, linb_ref, g1_ref, b1_ref,
                  wq_ref, wk_ref, wv_ref, wo_ref, bo_ref,
                  g2_ref, b2_ref, w1h_ref, b1h_ref, w1g_ref, b1g_ref,
                  w2_ref, fb2_ref, gates_ref, o_ref, h_scratch,
                  *, n_heads, d_head):
    n_vis = x_ref.shape[1]
    n_tot = h_scratch.shape[0]
    x = x_ref[0].astype(jnp.float32)                      # (n_vis, D)
    objs = objs_ref[0].astype(jnp.float32)                # (n_obj, Dc)

    # objs = linear(objs)  (fused; no extra pallas_call / HBM round-trip)
    objs_p = _mm(objs, linw_ref[...]) + linb_ref[...]

    # norm1(cat([x, objs])): LayerNorm is row-wise -> normalize each part and write both
    # into a shared VMEM scratch instead of an in-kernel concatenate copy.
    g1 = g1_ref[...]
    b1 = b1_ref[...]
    xn = _layernorm(x, g1, b1)
    h_scratch[0:n_vis, :] = xn
    h_scratch[n_vis:n_tot, :] = _layernorm(objs_p, g1, b1)
    hn_all = h_scratch[...]                               # (n_vis + n_obj, D)

    # gated self-attention: queries only for the visual rows (the module discards the
    # obj rows of the attention output anyway), keys/values over all rows.
    out = _mha_proj(xn, hn_all, wq_ref[...], wk_ref[...], wv_ref[...], wo_ref[...],
                    bo_ref[...], n_heads=n_heads, d_head=d_head)
    x = x + gates_ref[0] * out                            # gates_ref[0] = tanh(alpha_attn)

    # norm2 + GEGLU FF + gated residual
    x2n = _layernorm(x, g2_ref[...], b2_ref[...])
    ff = _geglu_ff(x2n, w1h_ref[...], b1h_ref[...], w1g_ref[...], b1g_ref[...],
                   w2_ref[...], fb2_ref[...])
    o_ref[0] = (x + gates_ref[1] * ff).astype(o_ref.dtype)   # gates_ref[1] = tanh(alpha_dense)


# ----------------------------------------------------------------------------
# Kernel 3: norm2 + cross-attention + residual + KV extraction + norm3 + GEGLU FF
# ----------------------------------------------------------------------------
def _cross_attn_ff_kernel(x_ref, enc_ref, g2_ref, b2_ref,
                          wq_ref, wk_ref, wv_ref, wo_ref, bo_ref,
                          wke_ref, wve_ref,
                          g3_ref, b3_ref, w1h_ref, b1h_ref, w1g_ref, b1g_ref,
                          w2_ref, fb2_ref,
                          o_ref, k_ref, v_ref, *, n_heads, d_head):
    x = x_ref[0].astype(jnp.float32)                      # (S, D)
    enc = enc_ref[0].astype(jnp.float32)                  # (S_enc, Dc)

    # norm2 + cross-attention (K/V from encoder states) + residual
    hn = _layernorm(x, g2_ref[...], b2_ref[...])
    out = _mha_proj(hn, enc, wq_ref[...], wk_ref[...], wv_ref[...], wo_ref[...],
                    bo_ref[...], n_heads=n_heads, d_head=d_head)
    h2 = x + out

    # extract_kv2 (KVCopy, no bias) on the post-cross-attention hidden states
    k_ref[0] = _mm(h2, wke_ref[...]).astype(k_ref.dtype)
    v_ref[0] = _mm(h2, wve_ref[...]).astype(v_ref.dtype)

    # norm3 + GEGLU feed-forward + residual
    h2n = _layernorm(h2, g3_ref[...], b3_ref[...])
    ff = _geglu_ff(h2n, w1h_ref[...], b1h_ref[...], w1g_ref[...], b1g_ref[...],
                   w2_ref[...], fb2_ref[...])
    o_ref[0] = (h2 + ff).astype(o_ref.dtype)


# ----------------------------------------------------------------------------
# BlockSpec helpers and wrappers
# ----------------------------------------------------------------------------
def _b_spec(arr):
    nd = arr.ndim
    blk = (1,) + tuple(arr.shape[1:])
    return pl.BlockSpec(blk, lambda b: (b,) + (0,) * (nd - 1))


def _w_spec(arr):
    nd = arr.ndim
    return pl.BlockSpec(tuple(arr.shape), lambda b: (0,) * nd)


def _split_heads_in(w, n_heads, d_head):
    # (D_in, H*dh) -> (H, D_in, dh), done once in the wrapper (XLA), not per grid step.
    d_in = w.shape[0]
    return w.reshape(d_in, n_heads, d_head).transpose(1, 0, 2)


def _split_heads_out(w, n_heads, d_head):
    # (H*dh, D_out) -> (H, dh, D_out)
    return w.reshape(n_heads, d_head, w.shape[1])


def self_attn_kv_pallas(x, p, *, n_heads, d_head):
    B, S, D = x.shape
    args = (
        x,
        p["ln1_g"].reshape(1, D), p["ln1_b"].reshape(1, D),
        _split_heads_in(p["attn1_wq"], n_heads, d_head).astype(MM_DTYPE),
        _split_heads_in(p["attn1_wk"], n_heads, d_head).astype(MM_DTYPE),
        _split_heads_in(p["attn1_wv"], n_heads, d_head).astype(MM_DTYPE),
        _split_heads_out(p["attn1_wo"], n_heads, d_head).astype(MM_DTYPE),
        p["attn1_bo"].reshape(1, D),
        p["kv1_wk"].astype(MM_DTYPE), p["kv1_wv"].astype(MM_DTYPE),
    )
    bs = _b_spec(x)
    out_sds = jax.ShapeDtypeStruct((B, S, D), x.dtype)
    kernel = functools.partial(_self_attn_kv_kernel, n_heads=n_heads, d_head=d_head)
    return pl.pallas_call(
        kernel,
        grid=(B,),
        out_shape=(out_sds, out_sds, out_sds),
        in_specs=[bs] + [_w_spec(a) for a in args[1:]],
        out_specs=(bs, bs, bs),
        compiler_params=pltpu.CompilerParams(dimension_semantics=("parallel",)),
    )(*args)


def fuser_pallas(x, objs, p, *, n_heads, d_head):
    """Standalone GatedSelfAttentionDense forward (single fused kernel)."""
    B, n_vis, D = x.shape
    n_obj = objs.shape[1]
    ffi = p["f_w2"].shape[0]
    # tanh of the gate scalars computed once on the host side; passed via SMEM.
    gates = jnp.tanh(jnp.stack([p["alpha_attn"], p["alpha_dense"]]).astype(jnp.float32))
    args = (
        x, objs,
        p["f_lin_w"].astype(MM_DTYPE), p["f_lin_b"].reshape(1, D),
        p["f_ln1_g"].reshape(1, D), p["f_ln1_b"].reshape(1, D),
        _split_heads_in(p["f_wq"], n_heads, d_head).astype(MM_DTYPE),
        _split_heads_in(p["f_wk"], n_heads, d_head).astype(MM_DTYPE),
        _split_heads_in(p["f_wv"], n_heads, d_head).astype(MM_DTYPE),
        _split_heads_out(p["f_wo"], n_heads, d_head).astype(MM_DTYPE),
        p["f_bo"].reshape(1, D),
        p["f_ln2_g"].reshape(1, D), p["f_ln2_b"].reshape(1, D),
        p["f_w1h"].astype(MM_DTYPE), p["f_b1h"].reshape(1, ffi),
        p["f_w1g"].astype(MM_DTYPE), p["f_b1g"].reshape(1, ffi),
        p["f_w2"].astype(MM_DTYPE), p["f_b2"].reshape(1, D),
        gates,
    )
    in_specs = ([_b_spec(x), _b_spec(objs)]
                + [_w_spec(a) for a in args[2:-1]]
                + [pl.BlockSpec(memory_space=pltpu.MemorySpace.SMEM)])
    kernel = functools.partial(_fuser_kernel, n_heads=n_heads, d_head=d_head)
    return pl.pallas_call(
        kernel,
        grid=(B,),
        out_shape=jax.ShapeDtypeStruct((B, n_vis, D), x.dtype),
        in_specs=in_specs,
        out_specs=_b_spec(x),
        scratch_shapes=[pltpu.VMEM((n_vis + n_obj, D), jnp.float32)],
        compiler_params=pltpu.CompilerParams(dimension_semantics=("parallel",)),
    )(*args)


def cross_attn_ff_pallas(x, enc, p, *, n_heads, d_head):
    B, S, D = x.shape
    ffi = p["ff_w2"].shape[0]
    args = (
        x, enc,
        p["ln2_g"].reshape(1, D), p["ln2_b"].reshape(1, D),
        _split_heads_in(p["attn2_wq"], n_heads, d_head).astype(MM_DTYPE),
        _split_heads_in(p["attn2_wk"], n_heads, d_head).astype(MM_DTYPE),
        _split_heads_in(p["attn2_wv"], n_heads, d_head).astype(MM_DTYPE),
        _split_heads_out(p["attn2_wo"], n_heads, d_head).astype(MM_DTYPE),
        p["attn2_bo"].reshape(1, D),
        p["kv2_wk"].astype(MM_DTYPE), p["kv2_wv"].astype(MM_DTYPE),
        p["ln3_g"].reshape(1, D), p["ln3_b"].reshape(1, D),
        p["ff_w1h"].astype(MM_DTYPE), p["ff_b1h"].reshape(1, ffi),
        p["ff_w1g"].astype(MM_DTYPE), p["ff_b1g"].reshape(1, ffi),
        p["ff_w2"].astype(MM_DTYPE), p["ff_b2"].reshape(1, D),
    )
    bs = _b_spec(x)
    out_sds = jax.ShapeDtypeStruct((B, S, D), x.dtype)
    kernel = functools.partial(_cross_attn_ff_kernel, n_heads=n_heads, d_head=d_head)
    return pl.pallas_call(
        kernel,
        grid=(B,),
        out_shape=(out_sds, out_sds, out_sds),
        in_specs=[bs, _b_spec(enc)] + [_w_spec(a) for a in args[2:]],
        out_specs=(bs, bs, bs),
        compiler_params=pltpu.CompilerParams(dimension_semantics=("parallel",)),
    )(*args)


# ----------------------------------------------------------------------------
# Full module forward
# ----------------------------------------------------------------------------
def extract_kv_transformer_block(params, hidden_states, encoder_hidden_states, objs,
                                 *, n_heads, d_head):
    """Returns (hidden_states, (k_self, v_self), (k_cross, v_cross)), mirroring
    (hidden_states, AttentionCache(self_attention=KVCache, cross_attention=KVCache))."""
    # TODO(synk): dropout (inference no-op), kv_drop_idx zero-masking of the extracted KV,
    # and the ada_norm*/pos_embed/chunked-FF config branches (not taken here) are omitted.
    h, k_self, v_self = self_attn_kv_pallas(hidden_states, params,
                                            n_heads=n_heads, d_head=d_head)
    h = fuser_pallas(h, objs, params, n_heads=n_heads, d_head=d_head)
    h, k_cross, v_cross = cross_attn_ff_pallas(h, encoder_hidden_states, params,
                                               n_heads=n_heads, d_head=d_head)
    return h, (k_self, v_self), (k_cross, v_cross)


# ----------------------------------------------------------------------------
# Pure-JAX reference (mirrors the kernels' mixed-precision choices)
# ----------------------------------------------------------------------------
def _mha_ref(q, k, v, *, n_heads, d_head):
    B, nq, inner = q.shape
    nk = k.shape[1]
    qh = q.reshape(B, nq, n_heads, d_head).astype(MM_DTYPE)
    kh = k.reshape(B, nk, n_heads, d_head).astype(MM_DTYPE)
    vh = v.reshape(B, nk, n_heads, d_head).astype(MM_DTYPE)
    s = jnp.einsum('bqhd,bkhd->bhqk', qh, kh, preferred_element_type=jnp.float32)
    p_ = jax.nn.softmax(s / math.sqrt(d_head), axis=-1)
    o = jnp.einsum('bhqk,bkhd->bqhd', p_.astype(MM_DTYPE), vh,
                   preferred_element_type=jnp.float32)
    return o.reshape(B, nq, inner)


def reference_forward(p, x, enc, objs, *, n_heads, d_head):
    H, dh = n_heads, d_head
    # norm1 + self-attention + residual; KV extraction of the norm1 output
    hn = _layernorm(x, p["ln1_g"], p["ln1_b"])
    k_self = _mm(hn, p["kv1_wk"])
    v_self = _mm(hn, p["kv1_wv"])
    attn = _mha_ref(_mm(hn, p["attn1_wq"]), _mm(hn, p["attn1_wk"]), _mm(hn, p["attn1_wv"]),
                    n_heads=H, d_head=dh)
    h = x + _mm(attn, p["attn1_wo"]) + p["attn1_bo"]
    # GLIGEN fuser (GatedSelfAttentionDense)
    n_vis = h.shape[1]
    objs_p = _mm(objs, p["f_lin_w"]) + p["f_lin_b"]
    cn = _layernorm(jnp.concatenate([h, objs_p], axis=1), p["f_ln1_g"], p["f_ln1_b"])
    attn = _mha_ref(_mm(cn[:, :n_vis], p["f_wq"]), _mm(cn, p["f_wk"]), _mm(cn, p["f_wv"]),
                    n_heads=H, d_head=dh)
    h = h + jnp.tanh(p["alpha_attn"]) * (_mm(attn, p["f_wo"]) + p["f_bo"])
    ff = _geglu_ff(_layernorm(h, p["f_ln2_g"], p["f_ln2_b"]),
                   p["f_w1h"], p["f_b1h"], p["f_w1g"], p["f_b1g"], p["f_w2"], p["f_b2"])
    h = h + jnp.tanh(p["alpha_dense"]) * ff
    # norm2 + cross-attention + residual; KV extraction of the post-attn2 states
    hn = _layernorm(h, p["ln2_g"], p["ln2_b"])
    attn = _mha_ref(_mm(hn, p["attn2_wq"]), _mm(enc, p["attn2_wk"]), _mm(enc, p["attn2_wv"]),
                    n_heads=H, d_head=dh)
    h = h + _mm(attn, p["attn2_wo"]) + p["attn2_bo"]
    k_cross = _mm(h, p["kv2_wk"])
    v_cross = _mm(h, p["kv2_wv"])
    # norm3 + GEGLU feed-forward + residual
    h = h + _geglu_ff(_layernorm(h, p["ln3_g"], p["ln3_b"]),
                      p["ff_w1h"], p["ff_b1h"], p["ff_w1g"], p["ff_b1g"],
                      p["ff_w2"], p["ff_b2"])
    return h, k_self, v_self, k_cross, v_cross


# ----------------------------------------------------------------------------
# Parameters
# ----------------------------------------------------------------------------
def make_params(key, dim, cross_dim, n_heads, d_head):
    inner = n_heads * d_head
    ffi = 4 * dim
    keys = iter(jax.random.split(key, 64))

    def w(shape):
        return jax.random.normal(next(keys), shape, jnp.float32) / math.sqrt(shape[0])

    def b(*shape):
        return 0.02 * jax.random.normal(next(keys), shape, jnp.float32)

    def g(*shape):
        return 1.0 + 0.1 * jax.random.normal(next(keys), shape, jnp.float32)

    return {
        # norm1 + attn1 (self-attention) + extract_kv1 (KVCopy, no bias)
        "ln1_g": g(dim), "ln1_b": b(dim),
        "attn1_wq": w((dim, inner)), "attn1_wk": w((dim, inner)), "attn1_wv": w((dim, inner)),
        "attn1_wo": w((inner, dim)), "attn1_bo": b(dim),
        "kv1_wk": w((dim, dim)), "kv1_wv": w((dim, dim)),
        # fuser: GatedSelfAttentionDense(dim, cross_dim, n_heads, d_head)
        "f_lin_w": w((cross_dim, dim)), "f_lin_b": b(dim),
        "f_ln1_g": g(dim), "f_ln1_b": b(dim),
        "f_wq": w((dim, inner)), "f_wk": w((dim, inner)), "f_wv": w((dim, inner)),
        "f_wo": w((inner, dim)), "f_bo": b(dim),
        "f_ln2_g": g(dim), "f_ln2_b": b(dim),
        "f_w1h": w((dim, ffi)), "f_b1h": b(ffi),
        "f_w1g": w((dim, ffi)), "f_b1g": b(ffi),
        "f_w2": w((ffi, dim)), "f_b2": b(dim),
        # PyTorch inits these to 0.0 (which zeroes both gated branches); non-zero here
        # so the fuser kernel's compute is actually exercised.
        "alpha_attn": jnp.array(0.75, jnp.float32),
        "alpha_dense": jnp.array(0.5, jnp.float32),
        # norm2 + attn2 (cross-attention) + extract_kv2 (KVCopy, no bias)
        "ln2_g": g(dim), "ln2_b": b(dim),
        "attn2_wq": w((dim, inner)), "attn2_wk": w((cross_dim, inner)),
        "attn2_wv": w((cross_dim, inner)),
        "attn2_wo": w((inner, dim)), "attn2_bo": b(dim),
        "kv2_wk": w((dim, dim)), "kv2_wv": w((dim, dim)),
        # norm3 + GEGLU feed-forward
        "ln3_g": g(dim), "ln3_b": b(dim),
        "ff_w1h": w((dim, ffi)), "ff_b1h": b(ffi),
        "ff_w1g": w((dim, ffi)), "ff_b1g": b(ffi),
        "ff_w2": w((ffi, dim)), "ff_b2": b(dim),
    }


if __name__ == "__main__":
    B = 2
    n_visual = 64      # visual tokens (multiple of 8 -> sublane aligned)
    n_objs = 8         # GLIGEN grounding tokens
    enc_len = 16       # encoder (text) tokens for cross-attention
    dim = 128          # lane-dense channel dim (multiple of 128 -> unmasked stores)
    cross_dim = 64
    n_heads = 4
    d_head = 32

    key = jax.random.PRNGKey(0)
    kx, ke, ko, kp = jax.random.split(key, 4)
    x = jax.random.normal(kx, (B, n_visual, dim), jnp.float32)
    enc = jax.random.normal(ke, (B, enc_len, cross_dim), jnp.float32)
    objs = jax.random.normal(ko, (B, n_objs, cross_dim), jnp.float32)
    params = make_params(kp, dim, cross_dim, n_heads, d_head)

    h, (k_self, v_self), (k_cross, v_cross) = extract_kv_transformer_block(
        params, x, enc, objs, n_heads=n_heads, d_head=d_head)
    h = jax.block_until_ready(h)

    ref_h, rks, rvs, rkc, rvc = reference_forward(params, x, enc, objs,
                                                  n_heads=n_heads, d_head=d_head)
    assert h.shape == (B, n_visual, dim)
    checks = ((h, ref_h, "hidden"), (k_self, rks, "k_self"), (v_self, rvs, "v_self"),
              (k_cross, rkc, "k_cross"), (v_cross, rvc, "v_cross"))
    for got, want, name in checks:
        assert got.shape == want.shape, f"shape mismatch: {name}"
        # tolerance covers the approx-reciprocal softmax and bf16 accumulation-order diffs
        assert jnp.allclose(got, want, rtol=2e-2, atol=2e-2), f"mismatch vs reference: {name}"

    print("KERNEL_OK")
</pallas_src>

<mosaic_0001>
module attributes {stable_mosaic.version = 11 : i64} {
  func.func @_self_attn_kv_kernel(%arg0: i32, %arg1: memref<1x64x128xf32, #tpu.memory_space<vmem>>, %arg2: memref<1x128xf32, #tpu.memory_space<vmem>>, %arg3: memref<1x128xf32, #tpu.memory_space<vmem>>, %arg4: memref<4x128x32xbf16, #tpu.memory_space<vmem>>, %arg5: memref<4x128x32xbf16, #tpu.memory_space<vmem>>, %arg6: memref<4x128x32xbf16, #tpu.memory_space<vmem>>, %arg7: memref<4x32x128xbf16, #tpu.memory_space<vmem>>, %arg8: memref<1x128xf32, #tpu.memory_space<vmem>>, %arg9: memref<128x128xbf16, #tpu.memory_space<vmem>>, %arg10: memref<128x128xbf16, #tpu.memory_space<vmem>>, %arg11: memref<1x64x128xf32, #tpu.memory_space<vmem>>, %arg12: memref<1x64x128xf32, #tpu.memory_space<vmem>>, %arg13: memref<1x64x128xf32, #tpu.memory_space<vmem>>) attributes {dimension_semantics = [#tpu.dimension_semantics<parallel>], iteration_bounds = array<i64: 2>, scalar_prefetch = 0 : i64, scratch_operands = 0 : i64, tpu.core_type = #tpu.core_type<tc>, window_params = [{transform_indices = @transform_0, window_bounds = array<i64: 1, 64, 128>}, {pipeline_mode = #tpu.pipeline_mode<synchronous>, transform_indices = @transform_1, window_bounds = array<i64: 1, 128>}, {pipeline_mode = #tpu.pipeline_mode<synchronous>, transform_indices = @transform_2, window_bounds = array<i64: 1, 128>}, {pipeline_mode = #tpu.pipeline_mode<synchronous>, transform_indices = @transform_3, window_bounds = array<i64: 4, 128, 32>}, {pipeline_mode = #tpu.pipeline_mode<synchronous>, transform_indices = @transform_4, window_bounds = array<i64: 4, 128, 32>}, {pipeline_mode = #tpu.pipeline_mode<synchronous>, transform_indices = @transform_5, window_bounds = array<i64: 4, 128, 32>}, {pipeline_mode = #tpu.pipeline_mode<synchronous>, transform_indices = @transform_6, window_bounds = array<i64: 4, 32, 128>}, {pipeline_mode = #tpu.pipeline_mode<synchronous>, transform_indices = @transform_7, window_bounds = array<i64: 1, 128>}, {pipeline_mode = #tpu.pipeline_mode<synchronous>, transform_indices = @transform_8, window_bounds = array<i64: 128, 128>}, {pipeline_mode = #tpu.pipeline_mode<synchronous>, transform_indices = @transform_9, window_bounds = array<i64: 128, 128>}, {transform_indices = @transform_10, window_bounds = array<i64: 1, 64, 128>}, {transform_indices = @transform_11, window_bounds = array<i64: 1, 64, 128>}, {transform_indices = @transform_12, window_bounds = array<i64: 1, 64, 128>}]} {
    %c0 = arith.constant 0 : index
    %c0_0 = arith.constant 0 : index
    %c0_1 = arith.constant 0 : index
    %0 = vector.load %arg1[%c0, %c0_0, %c0_1] : memref<1x64x128xf32, #tpu.memory_space<vmem>>, vector<1x64x128xf32>
    %1 = vector.shape_cast %0 : vector<1x64x128xf32> to vector<64x128xf32>
    %c0_2 = arith.constant 0 : index
    %c0_3 = arith.constant 0 : index
    %2 = vector.load %arg2[%c0_2, %c0_3] : memref<1x128xf32, #tpu.memory_space<vmem>>, vector<1x128xf32>
    %c0_4 = arith.constant 0 : index
    %c0_5 = arith.constant 0 : index
    %3 = vector.load %arg3[%c0_4, %c0_5] : memref<1x128xf32, #tpu.memory_space<vmem>>, vector<1x128xf32>
    %cst = arith.constant dense<0.000000e+00> : vector<64xf32>
    %4 = vector.multi_reduction <add>, %1, %cst [1] : vector<64x128xf32> to vector<64xf32>
    %5 = vector.shape_cast %4 : vector<64xf32> to vector<64x1xf32>
    %cst_6 = arith.constant 1.280000e+02 : f32
    %6 = vector.broadcast %cst_6 : f32 to vector<64x1xf32>
    %7 = arith.divf %5, %6 : vector<64x1xf32>
    %8 = vector.broadcast %7 : vector<64x1xf32> to vector<64x128xf32>
    %9 = arith.subf %1, %8 : vector<64x128xf32>
    %10 = arith.mulf %9, %9 : vector<64x128xf32>
    %cst_7 = arith.constant dense<0.000000e+00> : vector<64xf32>
    %11 = vector.multi_reduction <add>, %10, %cst_7 [1] : vector<64x128xf32> to vector<64xf32>
    %12 = vector.shape_cast %11 : vector<64xf32> to vector<64x1xf32>
    %cst_8 = arith.constant 1.280000e+02 : f32
    %13 = vector.broadcast %cst_8 : f32 to vector<64x1xf32>
    %14 = arith.divf %12, %13 : vector<64x1xf32>
    %15 = vector.broadcast %7 : vector<64x1xf32> to vector<64x128xf32>
    %16 = arith.subf %1, %15 : vector<64x128xf32>
    %cst_9 = arith.constant 9.99999974E-6 : f32
    %17 = vector.broadcast %cst_9 : f32 to vector<64x1xf32>
    %18 = arith.addf %14, %17 : vector<64x1xf32>
    %19 = math.rsqrt %18 : vector<64x1xf32>
    %20 = vector.broadcast %19 : vector<64x1xf32> to vector<64x128xf32>
    %21 = arith.mulf %16, %20 : vector<64x128xf32>
    %22 = vector.broadcast %2 : vector<1x128xf32> to vector<64x128xf32>
    %23 = arith.mulf %21, %22 : vector<64x128xf32>
    %24 = vector.broadcast %3 : vector<1x128xf32> to vector<64x128xf32>
    %25 = arith.addf %23, %24 : vector<64x128xf32>
    %c0_10 = arith.constant 0 : index
    %c0_11 = arith.constant 0 : index
    %26 = vector.load %arg9[%c0_10, %c0_11] : memref<128x128xbf16, #tpu.memory_space<vmem>>, vector<128x128xbf16>
    %27 = arith.truncf %25 : vector<64x128xf32> to vector<64x128xbf16>
    %cst_12 = arith.constant dense<0.000000e+00> : vector<64x128xf32>
    %28 = tpu.matmul %27, %26, %cst_12 {dimension_numbers = #tpu.dot_dimension_numbers<[1], [0], [0], [1], [0, 0, 1, 1], [], []>} : vector<64x128xbf16>, vector<128x128xbf16>, vector<64x128xf32> -> vector<64x128xf32>
    %c0_13 = arith.constant 0 : index
    %c0_14 = arith.constant 0 : index
    %c0_15 = arith.constant 0 : index
    %29 = vector.load %arg12[%c0_13, %c0_14, %c0_15] : memref<1x64x128xf32, #tpu.memory_space<vmem>>, vector<1x64x128xf32>
    %30 = vector.shape_cast %29 : vector<1x64x128xf32> to vector<64x128xf32>
    %31 = vector.shape_cast %28 : vector<64x128xf32> to vector<1x64x128xf32>
    tpu.vector_store %arg12[%c0_13, %c0_14, %c0_15], %31 {strides = array<i32>} : memref<1x64x128xf32, #tpu.memory_space<vmem>>, vector<1x64x128xf32>,
    %c0_16 = arith.constant 0 : index
    %c0_17 = arith.constant 0 : index
    %32 = vector.load %arg10[%c0_16, %c0_17] : memref<128x128xbf16, #tpu.memory_space<vmem>>, vector<128x128xbf16>
    %33 = arith.truncf %25 : vector<64x128xf32> to vector<64x128xbf16>
    %cst_18 = arith.constant dense<0.000000e+00> : vector<64x128xf32>
    %34 = tpu.matmul %33, %32, %cst_18 {dimension_numbers = #tpu.dot_dimension_numbers<[1], [0], [0], [1], [0, 0, 1, 1], [], []>} : vector<64x128xbf16>, vector<128x128xbf16>, vector<64x128xf32> -> vector<64x128xf32>
    %c0_19 = arith.constant 0 : index
    %c0_20 = arith.constant 0 : index
    %c0_21 = arith.constant 0 : index
    %35 = vector.load %arg13[%c0_19, %c0_20, %c0_21] : memref<1x64x128xf32, #tpu.memory_space<vmem>>, vector<1x64x128xf32>
    %36 = vector.shape_cast %35 : vector<1x64x128xf32> to vector<64x128xf32>
    %37 = vector.shape_cast %34 : vector<64x128xf32> to vector<1x64x128xf32>
    tpu.vector_store %arg13[%c0_19, %c0_20, %c0_21], %37 {strides = array<i32>} : memref<1x64x128xf32, #tpu.memory_space<vmem>>, vector<1x64x128xf32>,
    %c0_22 = arith.constant 0 : index
    %c0_23 = arith.constant 0 : index
    %c0_24 = arith.constant 0 : index
    %38 = vector.load %arg4[%c0_22, %c0_23, %c0_24] : memref<4x128x32xbf16, #tpu.memory_space<vmem>>, vector<4x128x32xbf16>
    %c0_25 = arith.constant 0 : index
    %c0_26 = arith.constant 0 : index
    %c0_27 = arith.constant 0 : index
    %39 = vector.load %arg5[%c0_25, %c0_26, %c0_27] : memref<4x128x32xbf16, #tpu.memory_space<vmem>>, vector<4x128x32xbf16>
    %c0_28 = arith.constant 0 : index
    %c0_29 = arith.constant 0 : index
    %c0_30 = arith.constant 0 : index
    %40 = vector.load %arg6[%c0_28, %c0_29, %c0_30] : memref<4x128x32xbf16, #tpu.memory_space<vmem>>, vector<4x128x32xbf16>
    %c0_31 = arith.constant 0 : index
    %c0_32 = arith.constant 0 : index
    %c0_33 = arith.constant 0 : index
    %41 = vector.load %arg7[%c0_31, %c0_32, %c0_33] : memref<4x32x128xbf16, #tpu.memory_space<vmem>>, vector<4x32x128xbf16>
    %c0_34 = arith.constant 0 : index
    %c0_35 = arith.constant 0 : index
    %42 = vector.load %arg8[%c0_34, %c0_35] : memref<1x128xf32, #tpu.memory_space<vmem>>, vector<1x128xf32>
    %43 = arith.truncf %25 : vector<64x128xf32> to vector<64x128xbf16>
    %44 = vector.shape_cast %43 : vector<64x128xbf16> to vector<1x64x128xbf16>
    %45 = vector.shape_cast %44 : vector<1x64x128xbf16> to vector<1x64x128xbf16>
    %46 = vector.broadcast %45 : vector<1x64x128xbf16> to vector<4x64x128xbf16>
    %47 = arith.truncf %25 : vector<64x128xf32> to vector<64x128xbf16>
    %48 = vector.shape_cast %47 : vector<64x128xbf16> to vector<1x64x128xbf16>
    %49 = vector.shape_cast %48 : vector<1x64x128xbf16> to vector<1x64x128xbf16>
    %50 = vector.broadcast %49 : vector<1x64x128xbf16> to vector<4x64x128xbf16>
    "tpu.trace_start"() <{level = 10 : i32, message = "hnd,hdk->hnk"}> : () -> ()
    %cst_36 = arith.constant dense<0.000000e+00> : vector<4x64x32xf32>
    %51 = tpu.matmul %46, %38, %cst_36 {dimension_numbers = #tpu.dot_dimension_numbers<[2], [1], [1], [2], [0, 0, 0, 1, 1, 2], [0], [0]>} : vector<4x64x128xbf16>, vector<4x128x32xbf16>, vector<4x64x32xf32> -> vector<4x64x32xf32>
    %cst_37 = arith.constant dense<0.000000e+00> : vector<4x64x32xf32>
    %52 = tpu.matmul %50, %39, %cst_37 {dimension_numbers = #tpu.dot_dimension_numbers<[2], [1], [1], [2], [0, 0, 0, 1, 1, 2], [0], [0]>} : vector<4x64x128xbf16>, vector<4x128x32xbf16>, vector<4x64x32xf32> -> vector<4x64x32xf32>
    %cst_38 = arith.constant dense<0.000000e+00> : vector<4x64x32xf32>
    %53 = tpu.matmul %50, %40, %cst_38 {dimension_numbers = #tpu.dot_dimension_numbers<[2], [1], [1], [2], [0, 0, 0, 1, 1, 2], [0], [0]>} : vector<4x64x128xbf16>, vector<4x128x32xbf16>, vector<4x64x32xf32> -> vector<4x64x32xf32>
    "tpu.trace_stop"() : () -> ()
    %54 = arith.truncf %51 : vector<4x64x32xf32> to vector<4x64x32xbf16>
    %55 = arith.truncf %52 : vector<4x64x32xf32> to vector<4x64x32xbf16>
    "tpu.trace_start"() <{level = 10 : i32, message = "hqd,hkd->hqk"}> : () -> ()
    %cst_39 = arith.constant dense<0.000000e+00> : vector<4x64x64xf32>
    %56 = tpu.matmul %54, %55, %cst_39 {dimension_numbers = #tpu.dot_dimension_numbers<[2], [2], [1], [1], [0, 0, 0, 1, 1, 1], [0], [0]>} : vector<4x64x32xbf16>, vector<4x64x32xbf16>, vector<4x64x64xf32> -> vector<4x64x64xf32>
    "tpu.trace_stop"() : () -> ()
    %cst_40 = arith.constant 0.176776692 : f32
    %57 = vector.broadcast %cst_40 : f32 to vector<4x64x64xf32>
    %58 = arith.mulf %56, %57 : vector<4x64x64xf32>
    %cst_41 = arith.constant dense<0xFF800000> : vector<4x64xf32>
    %59 = vector.multi_reduction <maximumf>, %58, %cst_41 [2] : vector<4x64x64xf32> to vector<4x64xf32>
    %60 = vector.shape_cast %59 : vector<4x64xf32> to vector<4x64x1xf32>
    %61 = vector.broadcast %60 : vector<4x64x1xf32> to vector<4x64x64xf32>
    %62 = arith.subf %58, %61 : vector<4x64x64xf32>
    %63 = math.exp %62 : vector<4x64x64xf32>
    %cst_42 = arith.constant dense<0.000000e+00> : vector<4x64xf32>
    %64 = vector.multi_reduction <add>, %63, %cst_42 [2] : vector<4x64x64xf32> to vector<4x64xf32>
    %65 = vector.shape_cast %64 : vector<4x64xf32> to vector<4x64x1xf32>
    %66 = tpu.reciprocal %65 {approx = true} : vector<4x64x1xf32> -> vector<4x64x1xf32>
    %67 = vector.broadcast %66 : vector<4x64x1xf32> to vector<4x64x64xf32>
    %68 = arith.mulf %63, %67 : vector<4x64x64xf32>
    %69 = arith.truncf %68 : vector<4x64x64xf32> to vector<4x64x64xbf16>
    %70 = arith.truncf %53 : vector<4x64x32xf32> to vector<4x64x32xbf16>
    "tpu.trace_start"() <{level = 10 : i32, message = "hqk,hkd->hqd"}> : () -> ()
    %cst_43 = arith.constant dense<0.000000e+00> : vector<4x64x32xf32>
    %71 = tpu.matmul %69, %70, %cst_43 {dimension_numbers = #tpu.dot_dimension_numbers<[2], [1], [1], [2], [0, 0, 0, 1, 1, 2], [0], [0]>} : vector<4x64x64xbf16>, vector<4x64x32xbf16>, vector<4x64x32xf32> -> vector<4x64x32xf32>
    "tpu.trace_stop"() : () -> ()
    %72 = arith.truncf %71 : vector<4x64x32xf32> to vector<4x64x32xbf16>
    "tpu.trace_start"() <{level = 10 : i32, message = "hqd,hdD->hqD"}> : () -> ()
    %cst_44 = arith.constant dense<0.000000e+00> : vector<4x64x128xf32>
    %73 = tpu.matmul %72, %41, %cst_44 {dimension_numbers = #tpu.dot_dimension_numbers<[2], [1], [1], [2], [0, 0, 0, 1, 1, 2], [0], [0]>} : vector<4x64x32xbf16>, vector<4x32x128xbf16>, vector<4x64x128xf32> -> vector<4x64x128xf32>
    "tpu.trace_stop"() : () -> ()
    %cst_45 = arith.constant dense<0.000000e+00> : vector<64x128xf32>
    %74 = vector.multi_reduction <add>, %73, %cst_45 [0] : vector<4x64x128xf32> to vector<64x128xf32>
    %75 = vector.broadcast %42 : vector<1x128xf32> to vector<64x128xf32>
    %76 = arith.addf %74, %75 : vector<64x128xf32>
    %77 = arith.addf %1, %76 : vector<64x128xf32>
    %c0_46 = arith.constant 0 : index
    %c0_47 = arith.constant 0 : index
    %c0_48 = arith.constant 0 : index
    %78 = vector.load %arg11[%c0_46, %c0_47, %c0_48] : memref<1x64x128xf32, #tpu.memory_space<vmem>>, vector<1x64x128xf32>
    %79 = vector.shape_cast %78 : vector<1x64x128xf32> to vector<64x128xf32>
    %80 = vector.shape_cast %77 : vector<64x128xf32> to vector<1x64x128xf32>
    tpu.vector_store %arg11[%c0_46, %c0_47, %c0_48], %80 {strides = array<i32>} : memref<1x64x128xf32, #tpu.memory_space<vmem>>, vector<1x64x128xf32>,
    return
  }
  func.func @transform_0(%arg0: i32) -> (i32, i32, i32) {
    %c0_i32 = arith.constant 0 : i32
    %c0_i32_0 = arith.constant 0 : i32
    %c0_i32_1 = arith.constant 0 : i32
    return %arg0, %c0_i32, %c0_i32_0 : i32, i32, i32
  }
  func.func @transform_1(%arg0: i32) -> (i32, i32) {
    %c0_i32 = arith.constant 0 : i32
    %c0_i32_0 = arith.constant 0 : i32
    %c0_i32_1 = arith.constant 0 : i32
    return %c0_i32, %c0_i32_0 : i32, i32
  }
  func.func @transform_2(%arg0: i32) -> (i32, i32) {
    %c0_i32 = arith.constant 0 : i32
    %c0_i32_0 = arith.constant 0 : i32
    %c0_i32_1 = arith.constant 0 : i32
    return %c0_i32, %c0_i32_0 : i32, i32
  }
  func.func @transform_3(%arg0: i32) -> (i32, i32, i32) {
    %c0_i32 = arith.constant 0 : i32
    %c0_i32_0 = arith.constant 0 : i32
    %c0_i32_1 = arith.constant 0 : i32
    %c0_i32_2 = arith.constant 0 : i32
    return %c0_i32, %c0_i32_0, %c0_i32_1 : i32, i32, i32
  }
  func.func @transform_4(%arg0: i32) -> (i32, i32, i32) {
    %c0_i32 = arith.constant 0 : i32
    %c0_i32_0 = arith.constant 0 : i32
    %c0_i32_1 = arith.constant 0 : i32
    %c0_i32_2 = arith.constant 0 : i32
    return %c0_i32, %c0_i32_0, %c0_i32_1 : i32, i32, i32
  }
  func.func @transform_5(%arg0: i32) -> (i32, i32, i32) {
    %c0_i32 = arith.constant 0 : i32
    %c0_i32_0 = arith.constant 0 : i32
    %c0_i32_1 = arith.constant 0 : i32
    %c0_i32_2 = arith.constant 0 : i32
    return %c0_i32, %c0_i32_0, %c0_i32_1 : i32, i32, i32
  }
  func.func @transform_6(%arg0: i32) -> (i32, i32, i32) {
    %c0_i32 = arith.constant 0 : i32
    %c0_i32_0 = arith.constant 0 : i32
    %c0_i32_1 = arith.constant 0 : i32
    %c0_i32_2 = arith.constant 0 : i32
    return %c0_i32, %c0_i32_0, %c0_i32_1 : i32, i32, i32
  }
  func.func @transform_7(%arg0: i32) -> (i32, i32) {
    %c0_i32 = arith.constant 0 : i32
    %c0_i32_0 = arith.constant 0 : i32
    %c0_i32_1 = arith.constant 0 : i32
    return %c0_i32, %c0_i32_0 : i32, i32
  }
  func.func @transform_8(%arg0: i32) -> (i32, i32) {
    %c0_i32 = arith.constant 0 : i32
    %c0_i32_0 = arith.constant 0 : i32
    %c0_i32_1 = arith.constant 0 : i32
    return %c0_i32, %c0_i32_0 : i32, i32
  }
  func.func @transform_9(%arg0: i32) -> (i32, i32) {
    %c0_i32 = arith.constant 0 : i32
    %c0_i32_0 = arith.constant 0 : i32
    %c0_i32_1 = arith.constant 0 : i32
    return %c0_i32, %c0_i32_0 : i32, i32
  }
  func.func @transform_10(%arg0: i32) -> (i32, i32, i32) {
    %c0_i32 = arith.constant 0 : i32
    %c0_i32_0 = arith.constant 0 : i32
    %c0_i32_1 = arith.constant 0 : i32
    return %arg0, %c0_i32, %c0_i32_0 : i32, i32, i32
  }
  func.func @transform_11(%arg0: i32) -> (i32, i32, i32) {
    %c0_i32 = arith.constant 0 : i32
    %c0_i32_0 = arith.constant 0 : i32
    %c0_i32_1 = arith.constant 0 : i32
    return %arg0, %c0_i32, %c0_i32_0 : i32, i32, i32
  }
  func.func @transform_12(%arg0: i32) -> (i32, i32, i32) {
    %c0_i32 = arith.constant 0 : i32
    %c0_i32_0 = arith.constant 0 : i32
    %c0_i32_1 = arith.constant 0 : i32
    return %arg0, %c0_i32, %c0_i32_0 : i32, i32, i32
  }
}

</mosaic_0001>

<llo_original>
// kernel: tpu_custom_call.1
$region0: #{tpu_custom_call.1}
  #allocation0 [shape = 'u32[]', space=smem, size = 0x4, offset = 0x4, fixed_abs, tag = 'smem constant byte address 0x4 - core index']
  #allocation1 [shape = 'u32[144,128]{1,0:T(1,128)}', space=vmem, size = 0x12000, scoped, tag = 'internal scratch']
  %s0 = inlined_call_operand.vmem [shape: f32[2,64,128], index: 0, kind: input, shape index: {}]
  %s1 = inlined_call_operand.vmem [shape: f32[1,128], index: 1, kind: input, shape index: {}]
  %s2 = inlined_call_operand.vmem [shape: f32[1,128], index: 2, kind: input, shape index: {}]
  %s3 = inlined_call_operand.vmem [shape: bf16[4,128,32], index: 3, kind: input, shape index: {}]
  %s4 = inlined_call_operand.vmem [shape: bf16[4,128,32], index: 4, kind: input, shape index: {}]
  %s5 = inlined_call_operand.vmem [shape: bf16[4,128,32], index: 5, kind: input, shape index: {}]
  %s6 = inlined_call_operand.vmem [shape: bf16[4,32,128], index: 6, kind: input, shape index: {}]
  %s7 = inlined_call_operand.vmem [shape: f32[1,128], index: 7, kind: input, shape index: {}]
  %s8 = inlined_call_operand.vmem [shape: bf16[128,128], index: 8, kind: input, shape index: {}]
  %s9 = inlined_call_operand.vmem [shape: bf16[128,128], index: 9, kind: input, shape index: {}]
  %s10 = inlined_call_operand.hbm [shape: f32[2,64,128], index: 10, kind: output, shape index: {0}]
  %s11 = inlined_call_operand.hbm [shape: f32[2,64,128], index: 11, kind: output, shape index: {1}]
  %s12 = inlined_call_operand.hbm [shape: f32[2,64,128], index: 12, kind: output, shape index: {2}]
  %13 = xla_tuple %s10, %s11, %s12
  %s14 = sld [smem:[#allocation0]]
  $region89: #{tpu_custom_call.1} parent=0
    _
  %s16 = ssub.s32 1, %s14
  %s17 = scalar_select 0, %s16, %s14
  $region1: #{tpu_custom_call.1} parent=0
    #allocation2 [shape = 'u8[65536]{0}', space=vmem, size = 0x10000, scoped, tag = 'output window, operand 0']
    #allocation3 [shape = 's32[2]{0}', space=sflag, size = 0x8, scoped, tag = 'scoped memory for tpu_custom_call.1']
    #allocation4 [shape = 'u8[65536]{0}', space=vmem, size = 0x10000, scoped, tag = 'output window, operand 1']
    #allocation5 [shape = 's32[2]{0}', space=sflag, size = 0x8, scoped, tag = 'scoped memory for tpu_custom_call.1']
    #allocation6 [shape = 'u8[65536]{0}', space=vmem, size = 0x10000, scoped, tag = 'output window, operand 2']
    %18 = vsyncpa [#allocation3], 0
    %s19 = scalar_lea.sflag [#allocation3], 1
    %20 = vsyncpa %s19, 0
    %21 = vsyncpa [#allocation5], 0
    %s22 = scalar_lea.sflag [#allocation5], 1
    %23 = vsyncpa %s22, 0
    loop: start=0, step=1, limit=4
    $region2: #{tpu_custom_call.1} parent=1 // loop_pre_header
      _
    $region3: #{tpu_custom_call.1} parent=1 // loop_header
      %s25 = sphi 0, %s29
      %p26 = scmp.ge.s32.totalorder %s25, 4
      %s35 = sphi 0, %s37
      %s38 = sphi 0, %s35
      %s39 = sphi 0, %s38
      %s55 = sphi 0, %s39
      %s59 = sphi 0, %s59
      %s61 = sphi 0, %s59
      %s62 = sphi 0, %s61
      %s76 = sphi 0, %s62
      %s80 = sphi 0, %s80
      %s82 = sphi 0, %s80
      %s83 = sphi 0, %s82
      %s97 = sphi 0, %s83
      %s101 = sphi 0, %s101
      %s103 = sphi 0, %s101
      %s104 = sphi 0, %s103
      %s118 = sphi 0, %s104
      %s122 = sphi 0, %s122
      %s124 = sphi 0, %s122
      %s125 = sphi 0, %s124
      %s139 = sphi 0, %s125
      %s143 = sphi 0, %s143
      %s145 = sphi 0, %s143
      %s146 = sphi 0, %s145
      %s160 = sphi 0, %s146
      %s164 = sphi 0, %s164
      %s166 = sphi 0, %s164
      %s167 = sphi 0, %s166
      %s181 = sphi 0, %s167
      %s185 = sphi 0, %s185
      %s187 = sphi 0, %s185
      %s188 = sphi 0, %s187
      %s202 = sphi 0, %s188
      %s206 = sphi 0, %s206
      %s208 = sphi 0, %s206
      %s209 = sphi 0, %s208
      %s223 = sphi 0, %s209
      %s227 = sphi 0, %s227
      %s229 = sphi 0, %s227
      %s230 = sphi 0, %s229
      %s244 = sphi 0, %s230
      %s250 = sphi 0, %s252
      %s253 = sphi 0, %s250
      %s254 = sphi 0, %s253
      %s270 = sphi 0, %s254
      %s276 = sphi 0, %s278
      %s279 = sphi 0, %s276
      %s280 = sphi 0, %s279
      %s296 = sphi 0, %s280
      %s302 = sphi 0, %s304
      %s305 = sphi 0, %s302
      %s306 = sphi 0, %s305
      %s322 = sphi 0, %s306
    $region4: #{tpu_custom_call.1} parent=1 // loop_header_branch
      %28 = sbr.rel (%p26) target = $region8
    $region5: #{tpu_custom_call.1} parent=1 // loop_body
      %s30 = ssub.s32 %s25, 1
      %s31 = ssub.s32 %s25, 2
      %s32 = sadd.s32 %s25, 1
      %s33 = ssub.s32 %s25, %s32
      %p34 = scmp.eq.s32.totalorder %s33, 0
      %s36 = sadd.s32 %s35, 1
      %s37 = scalar_select %p34, %s35, %s36
      %p40 = pneg %p34
      %p41 = scmp.eq.s32.totalorder %s25, 1
      %p42 = por %p40, %p41
      %p43 = scmp.ne.s32.totalorder %s35, %s38
      %p44 = scmp.eq.s32.totalorder %s25, 0
      %p45 = por %p43, %p44
      %p46 = scmp.ne.s32.totalorder %s35, %s38
      %p47 = scmp.eq.s32.totalorder %s30, 1
      %p48 = por %p46, %p47
      %p49 = scmp.ne.s32.totalorder %s38, %s39
      %p50 = scmp.eq.s32.totalorder %s30, 0
      %p51 = por %p49, %p50
      %p52 = scmp.ne.s32.totalorder %s38, %s39
      %p53 = scmp.eq.s32.totalorder %s31, 1
      %p54 = por %p52, %p53
      %p56 = scmp.ne.s32.totalorder %s39, %s55
      %p57 = scmp.eq.s32.totalorder %s31, 0
      %p58 = por %p56, %p57
      %s60 = sadd.s32 %s59, 1
      %p63 = scmp.eq.s32.totalorder %s25, 1
      %p64 = scmp.ne.s32.totalorder %s59, %s61
      %p65 = scmp.eq.s32.totalorder %s25, 0
      %p66 = por %p64, %p65
      %p67 = scmp.ne.s32.totalorder %s59, %s61
      %p68 = scmp.eq.s32.totalorder %s30, 1
      %p69 = por %p67, %p68
      %p70 = scmp.ne.s32.totalorder %s61, %s62
      %p71 = scmp.eq.s32.totalorder %s30, 0
      %p72 = por %p70, %p71
      %p73 = scmp.ne.s32.totalorder %s61, %s62
      %p74 = scmp.eq.s32.totalorder %s31, 1
      %p75 = por %p73, %p74
      %p77 = scmp.ne.s32.totalorder %s62, %s76
      %p78 = scmp.eq.s32.totalorder %s31, 0
      %p79 = por %p77, %p78
      %s81 = sadd.s32 %s80, 1
      %p84 = scmp.eq.s32.totalorder %s25, 1
      %p85 = scmp.ne.s32.totalorder %s80, %s82
      %p86 = scmp.eq.s32.totalorder %s25, 0
      %p87 = por %p85, %p86
      %p88 = scmp.ne.s32.totalorder %s80, %s82
      %p89 = scmp.eq.s32.totalorder %s30, 1
      %p90 = por %p88, %p89
      %p91 = scmp.ne.s32.totalorder %s82, %s83
      %p92 = scmp.eq.s32.totalorder %s30, 0
      %p93 = por %p91, %p92
      %p94 = scmp.ne.s32.totalorder %s82, %s83
      %p95 = scmp.eq.s32.totalorder %s31, 1
      %p96 = por %p94, %p95
      %p98 = scmp.ne.s32.totalorder %s83, %s97
      %p99 = scmp.eq.s32.totalorder %s31, 0
      %p100 = por %p98, %p99
      %s102 = sadd.s32 %s101, 1
      %p105 = scmp.eq.s32.totalorder %s25, 1
      %p106 = scmp.ne.s32.totalorder %s101, %s103
      %p107 = scmp.eq.s32.totalorder %s25, 0
      %p108 = por %p106, %p107
      %p109 = scmp.ne.s32.totalorder %s101, %s103
      %p110 = scmp.eq.s32.totalorder %s30, 1
      %p111 = por %p109, %p110
      %p112 = scmp.ne.s32.totalorder %s103, %s104
      %p113 = scmp.eq.s32.totalorder %s30, 0
      %p114 = por %p112, %p113
      %p115 = scmp.ne.s32.totalorder %s103, %s104
      %p116 = scmp.eq.s32.totalorder %s31, 1
      %p117 = por %p115, %p116
      %p119 = scmp.ne.s32.totalorder %s104, %s118
      %p120 = scmp.eq.s32.totalorder %s31, 0
      %p121 = por %p119, %p120
      %s123 = sadd.s32 %s122, 1
      %p126 = scmp.eq.s32.totalorder %s25, 1
      %p127 = scmp.ne.s32.totalorder %s122, %s124
      %p128 = scmp.eq.s32.totalorder %s25, 0
      %p129 = por %p127, %p128
      %p130 = scmp.ne.s32.totalorder %s122, %s124
      %p131 = scmp.eq.s32.totalorder %s30, 1
      %p132 = por %p130, %p131
      %p133 = scmp.ne.s32.totalorder %s124, %s125
      %p134 = scmp.eq.s32.totalorder %s30, 0
      %p135 = por %p133, %p134
      %p136 = scmp.ne.s32.totalorder %s124, %s125
      %p137 = scmp.eq.s32.totalorder %s31, 1
      %p138 = por %p136, %p137
      %p140 = scmp.ne.s32.totalorder %s125, %s139
      %p141 = scmp.eq.s32.totalorder %s31, 0
      %p142 = por %p140, %p141
      %s144 = sadd.s32 %s143, 1
      %p147 = scmp.eq.s32.totalorder %s25, 1
      %p148 = scmp.ne.s32.totalorder %s143, %s145
      %p149 = scmp.eq.s32.totalorder %s25, 0
      %p150 = por %p148, %p149
      %p151 = scmp.ne.s32.totalorder %s143, %s145
      %p152 = scmp.eq.s32.totalorder %s30, 1
      %p153 = por %p151, %p152
      %p154 = scmp.ne.s32.totalorder %s145, %s146
      %p155 = scmp.eq.s32.totalorder %s30, 0
      %p156 = por %p154, %p155
      %p157 = scmp.ne.s32.totalorder %s145, %s146
      %p158 = scmp.eq.s32.totalorder %s31, 1
      %p159 = por %p157, %p158
      %p161 = scmp.ne.s32.totalorder %s146, %s160
      %p162 = scmp.eq.s32.totalorder %s31, 0
      %p163 = por %p161, %p162
      %s165 = sadd.s32 %s164, 1
      %p168 = scmp.eq.s32.totalorder %s25, 1
      %p169 = scmp.ne.s32.totalorder %s164, %s166
      %p170 = scmp.eq.s32.totalorder %s25, 0
      %p171 = por %p169, %p170
      %p172 = scmp.ne.s32.totalorder %s164, %s166
      %p173 = scmp.eq.s32.totalorder %s30, 1
      %p174 = por %p172, %p173
      %p175 = scmp.ne.s32.totalorder %s166, %s167
      %p176 = scmp.eq.s32.totalorder %s30, 0
      %p177 = por %p175, %p176
      %p178 = scmp.ne.s32.totalorder %s166, %s167
      %p179 = scmp.eq.s32.totalorder %s31, 1
      %p180 = por %p178, %p179
      %p182 = scmp.ne.s32.totalorder %s167, %s181
      %p183 = scmp.eq.s32.totalorder %s31, 0
      %p184 = por %p182, %p183
      %s186 = sadd.s32 %s185, 1
      %p189 = scmp.eq.s32.totalorder %s25, 1
      %p190 = scmp.ne.s32.totalorder %s185, %s187
      %p191 = scmp.eq.s32.totalorder %s25, 0
      %p192 = por %p190, %p191
      %p193 = scmp.ne.s32.totalorder %s185, %s187
      %p194 = scmp.eq.s32.totalorder %s30, 1
      %p195 = por %p193, %p194
      %p196 = scmp.ne.s32.totalorder %s187, %s188
      %p197 = scmp.eq.s32.totalorder %s30, 0
      %p198 = por %p196, %p197
      %p199 = scmp.ne.s32.totalorder %s187, %s188
      %p200 = scmp.eq.s32.totalorder %s31, 1
      %p201 = por %p199, %p200
      %p203 = scmp.ne.s32.totalorder %s188, %s202
      %p204 = scmp.eq.s32.totalorder %s31, 0
      %p205 = por %p203, %p204
      %s207 = sadd.s32 %s206, 1
      %p210 = scmp.eq.s32.totalorder %s25, 1
      %p211 = scmp.ne.s32.totalorder %s206, %s208
      %p212 = scmp.eq.s32.totalorder %s25, 0
      %p213 = por %p211, %p212
      %p214 = scmp.ne.s32.totalorder %s206, %s208
      %p215 = scmp.eq.s32.totalorder %s30, 1
      %p216 = por %p214, %p215
      %p217 = scmp.ne.s32.totalorder %s208, %s209
      %p218 = scmp.eq.s32.totalorder %s30, 0
      %p219 = por %p217, %p218
      %p220 = scmp.ne.s32.totalorder %s208, %s209
      %p221 = scmp.eq.s32.totalorder %s31, 1
      %p222 = por %p220, %p221
      %p224 = scmp.ne.s32.totalorder %s209, %s223
      %p225 = scmp.eq.s32.totalorder %s31, 0
      %p226 = por %p224, %p225
      %s228 = sadd.s32 %s227, 1
      %p231 = scmp.eq.s32.totalorder %s25, 1
      %p232 = scmp.ne.s32.totalorder %s227, %s229
      %p233 = scmp.eq.s32.totalorder %s25, 0
      %p234 = por %p232, %p233
      %p235 = scmp.ne.s32.totalorder %s227, %s229
      %p236 = scmp.eq.s32.totalorder %s30, 1
      %p237 = por %p235, %p236
      %p238 = scmp.ne.s32.totalorder %s229, %s230
      %p239 = scmp.eq.s32.totalorder %s30, 0
      %p240 = por %p238, %p239
      %p241 = scmp.ne.s32.totalorder %s229, %s230
      %p242 = scmp.eq.s32.totalorder %s31, 1
      %p243 = por %p241, %p242
      %p245 = scmp.ne.s32.totalorder %s230, %s244
      %p246 = scmp.eq.s32.totalorder %s31, 0
      %p247 = por %p245, %p246
      %s248 = ssub.s32 %s25, %s32
      %p249 = scmp.eq.s32.totalorder %s248, 0
      %s251 = sadd.s32 %s250, 1
      %s252 = scalar_select %p249, %s250, %s251
      %p255 = pneg %p249
      %p256 = scmp.eq.s32.totalorder %s25, 1
      %p257 = por %p255, %p256
      %p258 = scmp.ne.s32.totalorder %s250, %s253
      %p259 = scmp.eq.s32.totalorder %s25, 0
      %p260 = por %p258, %p259
      %p261 = scmp.ne.s32.totalorder %s250, %s253
      %p262 = scmp.eq.s32.totalorder %s30, 1
      %p263 = por %p261, %p262
      %p264 = scmp.ne.s32.totalorder %s253, %s254
      %p265 = scmp.eq.s32.totalorder %s30, 0
      %p266 = por %p264, %p265
      %p267 = scmp.ne.s32.totalorder %s253, %s254
      %p268 = scmp.eq.s32.totalorder %s31, 1
      %p269 = por %p267, %p268
      %p271 = scmp.ne.s32.totalorder %s254, %s270
      %p272 = scmp.eq.s32.totalorder %s31, 0
      %p273 = por %p271, %p272
      %s274 = ssub.s32 %s25, %s32
      %p275 = scmp.eq.s32.totalorder %s274, 0
      %s277 = sadd.s32 %s276, 1
      %s278 = scalar_select %p275, %s276, %s277
      %p281 = pneg %p275
      %p282 = scmp.eq.s32.totalorder %s25, 1
      %p283 = por %p281, %p282
      %p284 = scmp.ne.s32.totalorder %s276, %s279
      %p285 = scmp.eq.s32.totalorder %s25, 0
      %p286 = por %p284, %p285
      %p287 = scmp.ne.s32.totalorder %s276, %s279
      %p288 = scmp.eq.s32.totalorder %s30, 1
      %p289 = por %p287, %p288
      %p290 = scmp.ne.s32.totalorder %s279, %s280
      %p291 = scmp.eq.s32.totalorder %s30, 0
      %p292 = por %p290, %p291
      %p293 = scmp.ne.s32.totalorder %s279, %s280
      %p294 = scmp.eq.s32.totalorder %s31, 1
      %p295 = por %p293, %p294
      %p297 = scmp.ne.s32.totalorder %s280, %s296
      %p298 = scmp.eq.s32.totalorder %s31, 0
      %p299 = por %p297, %p298
      %s300 = ssub.s32 %s25, %s32
      %p301 = scmp.eq.s32.totalorder %s300, 0
      %s303 = sadd.s32 %s302, 1
      %s304 = scalar_select %p301, %s302, %s303
      %p307 = pneg %p301
      %p308 = scmp.eq.s32.totalorder %s25, 1
      %p309 = por %p307, %p308
      %p310 = scmp.ne.s32.totalorder %s302, %s305
      %p311 = scmp.eq.s32.totalorder %s25, 0
      %p312 = por %p310, %p311
      %p313 = scmp.ne.s32.totalorder %s302, %s305
      %p314 = scmp.eq.s32.totalorder %s30, 1
      %p315 = por %p313, %p314
      %p316 = scmp.ne.s32.totalorder %s305, %s306
      %p317 = scmp.eq.s32.totalorder %s30, 0
      %p318 = por %p316, %p317
      %p319 = scmp.ne.s32.totalorder %s305, %s306
      %p320 = scmp.eq.s32.totalorder %s31, 1
      %p321 = por %p319, %p320
      %p323 = scmp.ne.s32.totalorder %s306, %s322
      %p324 = scmp.eq.s32.totalorder %s31, 0
      %p325 = por %p323, %p324
      %p326 = scmp.le.s32.totalorder 1, %s25
      %p327 = scmp.lt.s32.totalorder %s25, 3
      %p328 = pnand %p326, %p327
      %p329 = pneg %p328
      // Predicated region
      $region9: #{tpu_custom_call.1} parent=5 // pred_check
        _
      $region10: #{tpu_custom_call.1} parent=5 // pred_check_branch
        %331 = sbr.rel (%p328) target = $region12
      $region11: #{tpu_custom_call.1} parent=5 // pred_region
        %s332 = ssub.s32 %s25, 1
        // Predicated region
        $region13: #{tpu_custom_call.1} parent=11 // pred_check
          %p333 = pneg %p72
        $region14: #{tpu_custom_call.1} parent=11 // pred_check_branch
          %335 = sbr.rel (%p333) target = $region16
        $region15: #{tpu_custom_call.1} parent=11 // pred_region
          _
        $region16: #{tpu_custom_call.1} parent=11 // pred_fallthru
          _
        // Predicated region
        $region17: #{tpu_custom_call.1} parent=11 // pred_check
          %p336 = pneg %p93
        $region18: #{tpu_custom_call.1} parent=11 // pred_check_branch
          %338 = sbr.rel (%p336) target = $region20
        $region19: #{tpu_custom_call.1} parent=11 // pred_region
          _
        $region20: #{tpu_custom_call.1} parent=11 // pred_fallthru
          _
        // Predicated region
        $region21: #{tpu_custom_call.1} parent=11 // pred_check
          %p339 = pneg %p114
        $region22: #{tpu_custom_call.1} parent=11 // pred_check_branch
          %341 = sbr.rel (%p339) target = $region24
        $region23: #{tpu_custom_call.1} parent=11 // pred_region
          _
        $region24: #{tpu_custom_call.1} parent=11 // pred_fallthru
          _
        // Predicated region
        $region25: #{tpu_custom_call.1} parent=11 // pred_check
          %p342 = pneg %p135
        $region26: #{tpu_custom_call.1} parent=11 // pred_check_branch
          %344 = sbr.rel (%p342) target = $region28
        $region27: #{tpu_custom_call.1} parent=11 // pred_region
          _
        $region28: #{tpu_custom_call.1} parent=11 // pred_fallthru
          _
        // Predicated region
        $region29: #{tpu_custom_call.1} parent=11 // pred_check
          %p345 = pneg %p156
        $region30: #{tpu_custom_call.1} parent=11 // pred_check_branch
          %347 = sbr.rel (%p345) target = $region32
        $region31: #{tpu_custom_call.1} parent=11 // pred_region
          _
        $region32: #{tpu_custom_call.1} parent=11 // pred_fallthru
          _
        // Predicated region
        $region33: #{tpu_custom_call.1} parent=11 // pred_check
          %p348 = pneg %p177
        $region34: #{tpu_custom_call.1} parent=11 // pred_check_branch
          %350 = sbr.rel (%p348) target = $region36
        $region35: #{tpu_custom_call.1} parent=11 // pred_region
          _
        $region36: #{tpu_custom_call.1} parent=11 // pred_fallthru
          _
        // Predicated region
        $region37: #{tpu_custom_call.1} parent=11 // pred_check
          %p351 = pneg %p198
        $region38: #{tpu_custom_call.1} parent=11 // pred_check_branch
          %353 = sbr.rel (%p351) target = $region40
        $region39: #{tpu_custom_call.1} parent=11 // pred_region
          _
        $region40: #{tpu_custom_call.1} parent=11 // pred_fallthru
          _
        // Predicated region
        $region41: #{tpu_custom_call.1} parent=11 // pred_check
          %p354 = pneg %p219
        $region42: #{tpu_custom_call.1} parent=11 // pred_check_branch
          %356 = sbr.rel (%p354) target = $region44
        $region43: #{tpu_custom_call.1} parent=11 // pred_region
          _
        $region44: #{tpu_custom_call.1} parent=11 // pred_fallthru
          _
        // Predicated region
        $region45: #{tpu_custom_call.1} parent=11 // pred_check
          %p357 = pneg %p240
        $region46: #{tpu_custom_call.1} parent=11 // pred_check_branch
          %359 = sbr.rel (%p357) target = $region48
        $region47: #{tpu_custom_call.1} parent=11 // pred_region
          _
        $region48: #{tpu_custom_call.1} parent=11 // pred_fallthru
          _
      $region12: #{tpu_custom_call.1} parent=5 // pred_fallthru
        _
      %p360 = scmp.lt.s32.totalorder %s25, 2
      // Predicated region
      $region49: #{tpu_custom_call.1} parent=5 // pred_check
        %p361 = pneg %p360
      $region50: #{tpu_custom_call.1} parent=5 // pred_check_branch
        %363 = sbr.rel (%p361) target = $region52
      $region51: #{tpu_custom_call.1} parent=5 // pred_region
        // Predicated region
        $region53: #{tpu_custom_call.1} parent=51 // pred_check
          %p364 = pneg %p45
        $region54: #{tpu_custom_call.1} parent=51 // pred_check_branch
          %366 = sbr.rel (%p364) target = $region56
        $region55: #{tpu_custom_call.1} parent=51 // pred_region
          %p367 = scmp.lt.s32.totalorder %s25, 1
          %s368 = scalar_select %p367, %s25, 1
          %s369 = smul.addr %s368, 8
          %s370 = smul.addr %s369, 8
          %s371 = scalar_lea.vmem %s0, %s370
        $region56: #{tpu_custom_call.1} parent=51 // pred_fallthru
          _
      $region52: #{tpu_custom_call.1} parent=5 // pred_fallthru
        _
      %p372 = scmp.le.s32.totalorder 1, %s25
      %p373 = scmp.lt.s32.totalorder %s25, 3
      %p374 = pnand %p372, %p373
      %p375 = pneg %p374
      // Predicated region
      $region57: #{tpu_custom_call.1} parent=5 // pred_check
        _
      $region58: #{tpu_custom_call.1} parent=5 // pred_check_branch
        %377 = sbr.rel (%p374) target = $region60
      $region59: #{tpu_custom_call.1} parent=5 // pred_region
        %s378 = ssub.s32 %s25, 1
        %p379 = scmp.lt.s32.totalorder %s30, 1
        %s380 = scalar_select %p379, %s30, 1
        %s381 = smul.addr %s380, 8
        %s382 = smul.addr %s381, 8
        %s383 = scalar_lea.vmem %s0, %s382
        %p384 = pneg %p51
        %p385 = pneg %p48
        %p386 = pneg %p72
        %p387 = pneg %p69
        %p388 = pneg %p93
        %p389 = pneg %p90
        %p390 = pneg %p114
        %p391 = pneg %p111
        %p392 = pneg %p135
        %p393 = pneg %p132
        %p394 = pneg %p156
        %p395 = pneg %p153
        %p396 = pneg %p177
        %p397 = pneg %p174
        %p398 = pneg %p198
        %p399 = pneg %p195
        %p400 = pneg %p219
        %p401 = pneg %p216
        %p402 = pneg %p240
        %p403 = pneg %p237
        %p404 = pneg %p266
        %p405 = pneg %p263
        %s406 = sand.u32 %s253, 1
        %s407 = scalar_lea.sflag [#allocation3], %s406
        %s408 = sand.u32 %s253, 1
        %s409 = smul.addr %s408, 64
        %s410 = scalar_lea.vmem [#allocation2], %s409
        %p411 = pneg %p292
        %p412 = pneg %p289
        %s413 = sand.u32 %s30, 1
        %s414 = scalar_lea.sflag [#allocation5], %s413
        %s415 = sand.u32 %s279, 1
        %s416 = smul.addr %s415, 64
        %s417 = scalar_lea.vmem [#allocation4], %s416
        %p418 = pneg %p318
        %p419 = pneg %p315
        %s420 = sand.u32 %s30, 1
        %s421 = scalar_lea.sflag [#allocation5], %s420
        %s422 = sand.u32 %s305, 1
        %s423 = smul.addr %s422, 64
        %s424 = scalar_lea.vmem [#allocation6], %s423
        %p425 = scmp.lt.s32.totalorder %s30, 1
        %s426 = scalar_select %p425, %s30, 1
        %s427 = smul.addr %s426, 8
        %s428 = smul.addr %s427, 8
        %s429 = scalar_lea.vmem %s0, %s428
        %v431 = vld [vmem:[%s429] sm:$0xff]
        %v432 = vld [vmem:[%s429 + $0x8] sm:$0xff]
        %v433 = vld [vmem:[%s429 + $0x10] sm:$0xff]
        %v434 = vld [vmem:[%s429 + $0x18] sm:$0xff]
        %v435 = vld [vmem:[%s429 + $0x20] sm:$0xff]
        %v436 = vld [vmem:[%s429 + $0x28] sm:$0xff]
        %v437 = vld [vmem:[%s429 + $0x30] sm:$0xff]
        %v438 = vld [vmem:[%s429 + $0x38] sm:$0xff]
        %v439 = vld [vmem:[%s1] sm:$0x1]
        %v440 = vld [vmem:[%s2] sm:$0x1]
        %441 = vadd.xlane.f32.xlu0 %v431
        %v442 = vpop.xlane.xlu0 %441
        %443 = vadd.xlane.f32.xlu0 %v432
        %v444 = vpop.xlane.xlu0 %443
        %445 = vadd.xlane.f32.xlu0 %v433
        %v446 = vpop.xlane.xlu0 %445
        %447 = vadd.xlane.f32.xlu0 %v434
        %v448 = vpop.xlane.xlu0 %447
        %449 = vadd.xlane.f32.xlu0 %v435
        %v450 = vpop.xlane.xlu0 %449
        %451 = vadd.xlane.f32.xlu0 %v436
        %v452 = vpop.xlane.xlu0 %451
        %453 = vadd.xlane.f32.xlu0 %v437
        %v454 = vpop.xlane.xlu0 %453
        %455 = vadd.xlane.f32.xlu0 %v438
        %v456 = vpop.xlane.xlu0 %455
        %v457 = vrcp.pop 128.0
        %v458 = vmul.f32 %v442, %v457
        %v459 = vmul.f32 %v444, %v457
        %v460 = vmul.f32 %v446, %v457
        %v461 = vmul.f32 %v448, %v457
        %v462 = vmul.f32 %v450, %v457
        %v463 = vmul.f32 %v452, %v457
        %v464 = vmul.f32 %v454, %v457
        %v465 = vmul.f32 %v456, %v457
        %v466 = vsub.f32 %v431, %v458
        %v467 = vsub.f32 %v432, %v459
        %v468 = vsub.f32 %v433, %v460
        %v469 = vsub.f32 %v434, %v461
        %v470 = vsub.f32 %v435, %v462
        %v471 = vsub.f32 %v436, %v463
        %v472 = vsub.f32 %v437, %v464
        %v473 = vsub.f32 %v438, %v465
        %v474 = vmul.f32 %v466, %v466
        %v475 = vmul.f32 %v467, %v467
        %v476 = vmul.f32 %v468, %v468
        %v477 = vmul.f32 %v469, %v469
        %v478 = vmul.f32 %v470, %v470
        %v479 = vmul.f32 %v471, %v471
        %v480 = vmul.f32 %v472, %v472
        %v481 = vmul.f32 %v473, %v473
        %482 = vadd.xlane.f32.xlu0 %v474
        %v483 = vpop.xlane.xlu0 %482
        %484 = vadd.xlane.f32.xlu0 %v475
        %v485 = vpop.xlane.xlu0 %484
        %486 = vadd.xlane.f32.xlu0 %v476
        %v487 = vpop.xlane.xlu0 %486
        %488 = vadd.xlane.f32.xlu0 %v477
        %v489 = vpop.xlane.xlu0 %488
        %490 = vadd.xlane.f32.xlu0 %v478
        %v491 = vpop.xlane.xlu0 %490
        %492 = vadd.xlane.f32.xlu0 %v479
        %v493 = vpop.xlane.xlu0 %492
        %494 = vadd.xlane.f32.xlu0 %v480
        %v495 = vpop.xlane.xlu0 %494
        %496 = vadd.xlane.f32.xlu0 %v481
        %v497 = vpop.xlane.xlu0 %496
        %v498 = vmul.f32 %v483, %v457
        %v499 = vmul.f32 %v485, %v457
        %v500 = vmul.f32 %v487, %v457
        %v501 = vmul.f32 %v489, %v457
        %v502 = vmul.f32 %v491, %v457
        %v503 = vmul.f32 %v493, %v457
        %v504 = vmul.f32 %v495, %v457
        %v505 = vmul.f32 %v497, %v457
        %v506 = vadd.f32 %v498, 1e-05
        %v507 = vadd.f32 %v499, 1e-05
        %v508 = vadd.f32 %v500, 1e-05
        %v509 = vadd.f32 %v501, 1e-05
        %v510 = vadd.f32 %v502, 1e-05
        %v511 = vadd.f32 %v503, 1e-05
        %v512 = vadd.f32 %v504, 1e-05
        %v513 = vadd.f32 %v505, 1e-05
        %v514 = vrsqrt.pop %v506
        %v515 = vrsqrt.pop %v507
        %v516 = vrsqrt.pop %v508
        %v517 = vrsqrt.pop %v509
        %v518 = vrsqrt.pop %v510
        %v519 = vrsqrt.pop %v511
        %v520 = vrsqrt.pop %v512
        %v521 = vrsqrt.pop %v513
        %v522 = vmul.f32 %v466, %v514
        %v523 = vmul.f32 %v467, %v515
        %v524 = vmul.f32 %v468, %v516
        %v525 = vmul.f32 %v469, %v517
        %v526 = vmul.f32 %v470, %v518
        %v527 = vmul.f32 %v471, %v519
        %v528 = vmul.f32 %v472, %v520
        %v529 = vmul.f32 %v473, %v521
        %v531 = vlaneseq
        %v532 = vshrl.u32 %v531, 7
        %v533 = vsub.s32 0, %v532
        %v534 = vrot.slane %v439, %v533
        %v536 = vmul.f32 %v522, %v534
        %v537 = vmul.f32 %v523, %v534
        %v538 = vmul.f32 %v524, %v534
        %v539 = vmul.f32 %v525, %v534
        %v540 = vmul.f32 %v526, %v534
        %v541 = vmul.f32 %v527, %v534
        %v542 = vmul.f32 %v528, %v534
        %v543 = vmul.f32 %v529, %v534
        %v545 = vlaneseq
        %v546 = vshrl.u32 %v545, 7
        %v547 = vsub.s32 0, %v546
        %v548 = vrot.slane %v440, %v547
        %v550 = vadd.f32 %v536, %v548
        %v551 = vadd.f32 %v537, %v548
        %v552 = vadd.f32 %v538, %v548
        %v553 = vadd.f32 %v539, %v548
        %v554 = vadd.f32 %v540, %v548
        %v555 = vadd.f32 %v541, %v548
        %v556 = vadd.f32 %v542, %v548
        %v557 = vadd.f32 %v543, %v548
        %v558 = vld [vmem:[%s8] sm:$0xf]
        %v559 = vld [vmem:[%s8 + $0x4] sm:$0xf]
        %v560 = vld [vmem:[%s8 + $0x8] sm:$0xf]
        %v561 = vld [vmem:[%s8 + $0xc] sm:$0xf]
        %v562 = vld [vmem:[%s8 + $0x10] sm:$0xf]
        %v563 = vld [vmem:[%s8 + $0x14] sm:$0xf]
        %v564 = vld [vmem:[%s8 + $0x18] sm:$0xf]
        %v565 = vld [vmem:[%s8 + $0x1c] sm:$0xf]
        %v566 = vld [vmem:[%s8 + $0x20] sm:$0xf]
        %v567 = vld [vmem:[%s8 + $0x24] sm:$0xf]
        %v568 = vld [vmem:[%s8 + $0x28] sm:$0xf]
        %v569 = vld [vmem:[%s8 + $0x2c] sm:$0xf]
        %v570 = vld [vmem:[%s8 + $0x30] sm:$0xf]
        %v571 = vld [vmem:[%s8 + $0x34] sm:$0xf]
        %v572 = vld [vmem:[%s8 + $0x38] sm:$0xf]
        %v573 = vld [vmem:[%s8 + $0x3c] sm:$0xf]
        %v574 = vpack.c.bf16 %v551, %v550
        %v575 = vpack.c.bf16 %v553, %v552
        %v576 = vpack.c.bf16 %v555, %v554
        %v577 = vpack.c.bf16 %v557, %v556
        %v594 = vunpack.c.l.b16 %v558
        %v595 = vunpack.c.l.b16 %v559
        %v596 = vunpack.c.l.b16 %v560
        %v597 = vunpack.c.l.b16 %v561
        %v598 = vunpack.c.l.b16 %v562
        %v599 = vunpack.c.l.b16 %v563
        %v600 = vunpack.c.l.b16 %v564
        %v601 = vunpack.c.l.b16 %v565
        %v602 = vunpack.c.l.b16 %v566
        %v603 = vunpack.c.l.b16 %v567
        %v604 = vunpack.c.l.b16 %v568
        %v605 = vunpack.c.l.b16 %v569
        %v606 = vunpack.c.l.b16 %v570
        %v607 = vunpack.c.l.b16 %v571
        %v608 = vunpack.c.l.b16 %v572
        %v609 = vunpack.c.l.b16 %v573
        %v610 = vpack.c.b16 %v595, %v594
        %v611 = vpack.c.b16 %v597, %v596
        %v612 = vpack.c.b16 %v599, %v598
        %v613 = vpack.c.b16 %v601, %v600
        %v614 = vpack.c.b16 %v603, %v602
        %v615 = vpack.c.b16 %v605, %v604
        %v616 = vpack.c.b16 %v607, %v606
        %v617 = vpack.c.b16 %v609, %v608
        %626 = vmatprep.subr.bf16.mxu0 0
        %627 = vmatpush1.bf16.msra.mxu0 %v610
        %628 = vmatprep.subr.bf16.mxu0 0
        %629 = vmatpush1.bf16.msra.mxu0 %v611
        %630 = vmatprep.subr.bf16.mxu0 0
        %631 = vmatpush1.bf16.msra.mxu0 %v612
        %632 = vmatprep.subr.bf16.mxu0 0
        %633 = vmatpush1.bf16.msra.mxu0 %v613
        %634 = vmatprep.subr.bf16.mxu0 0
        %635 = vmatpush1.bf16.msra.mxu0 %v614
        %636 = vmatprep.subr.bf16.mxu0 0
        %637 = vmatpush1.bf16.msra.mxu0 %v615
        %638 = vmatprep.subr.bf16.mxu0 0
        %639 = vmatpush1.bf16.msra.mxu0 %v616
        %640 = vmatprep.subr.bf16.mxu0 0
        %641 = vmatpush1.bf16.msra.mxu0 %v617
        %642 = vmatprep.subr.bf16.mxu0 0
        %643 = vmatpush1.bf16.msra.mxu0 0
        %644 = vmatprep.subr.bf16.mxu0 0
        %645 = vmatpush1.bf16.msra.mxu0 0
        %646 = vmatprep.subr.bf16.mxu0 0
        %647 = vmatpush1.bf16.msra.mxu0 0
        %648 = vmatprep.subr.bf16.mxu0 0
        %649 = vmatpush1.bf16.msra.mxu0 0
        %650 = vmatprep.subr.bf16.mxu0 0
        %651 = vmatpush1.bf16.msra.mxu0 0
        %652 = vmatprep.subr.bf16.mxu0 0
        %653 = vmatpush1.bf16.msra.mxu0 0
        %654 = vmatprep.subr.bf16.mxu0 0
        %655 = vmatpush1.bf16.msra.mxu0 0
        %656 = vmatprep.subr.bf16.mxu0 0
        %657 = vmatpush1.bf16.msra.mxu0 0
        %658 = vmatprep.mubr.bf16.mxu0 0
        %659 = vmatmul.mubr.bf16.gmra.mrb[0].mxu0 %v574
        %v660 = vpop.f32.mrb[0].mxu0
        %v661 = vadd.f32 0.0, %v660
        %v662 = vpop.f32.mrb[0].mxu0
        %v663 = vpop.f32.mrb[0].mxu0
        %v664 = vadd.f32 0.0, %v663
        %v665 = vpop.f32.mrb[0].mxu0
        %666 = vmatprep.mubr.bf16.mxu0 0
        %667 = vmatmul.mubr.bf16.gmra.mrb[0].mxu0 %v575
        %v668 = vpop.f32.mrb[0].mxu0
        %v669 = vadd.f32 0.0, %v668
        %v670 = vpop.f32.mrb[0].mxu0
        %v671 = vpop.f32.mrb[0].mxu0
        %v672 = vadd.f32 0.0, %v671
        %v673 = vpop.f32.mrb[0].mxu0
        %674 = vmatprep.mubr.bf16.mxu0 0
        %675 = vmatmul.mubr.bf16.gmra.mrb[0].mxu0 %v576
        %v676 = vpop.f32.mrb[0].mxu0
        %v677 = vadd.f32 0.0, %v676
        %v678 = vpop.f32.mrb[0].mxu0
        %v679 = vpop.f32.mrb[0].mxu0
        %v680 = vadd.f32 0.0, %v679
        %v681 = vpop.f32.mrb[0].mxu0
        %682 = vmatprep.mubr.bf16.mxu0 0
        %683 = vmatmul.mubr.bf16.gmra.mrb[0].mxu0 %v577
        %v684 = vpop.f32.mrb[0].mxu0
        %v685 = vadd.f32 0.0, %v684
        %v686 = vpop.f32.mrb[0].mxu0
        %v687 = vpop.f32.mrb[0].mxu0
        %v688 = vadd.f32 0.0, %v687
        %v689 = vpop.f32.mrb[0].mxu0
        %690 = vdwg.mxu0
        %691 = vst [vmem:[%s417] sm:$0xff] %v661
        %692 = vst [vmem:[%s417 + $0x8] sm:$0xff] %v664
        %693 = vst [vmem:[%s417 + $0x10] sm:$0xff] %v669
        %694 = vst [vmem:[%s417 + $0x18] sm:$0xff] %v672
        %695 = vst [vmem:[%s417 + $0x20] sm:$0xff] %v677
        %696 = vst [vmem:[%s417 + $0x28] sm:$0xff] %v680
        %697 = vst [vmem:[%s417 + $0x30] sm:$0xff] %v685
        %698 = vst [vmem:[%s417 + $0x38] sm:$0xff] %v688
        %v699 = vld [vmem:[%s9] sm:$0xf]
        %v700 = vld [vmem:[%s9 + $0x4] sm:$0xf]
        %v701 = vld [vmem:[%s9 + $0x8] sm:$0xf]
        %v702 = vld [vmem:[%s9 + $0xc] sm:$0xf]
        %v703 = vld [vmem:[%s9 + $0x10] sm:$0xf]
        %v704 = vld [vmem:[%s9 + $0x14] sm:$0xf]
        %v705 = vld [vmem:[%s9 + $0x18] sm:$0xf]
        %v706 = vld [vmem:[%s9 + $0x1c] sm:$0xf]
        %v707 = vld [vmem:[%s9 + $0x20] sm:$0xf]
        %v708 = vld [vmem:[%s9 + $0x24] sm:$0xf]
        %v709 = vld [vmem:[%s9 + $0x28] sm:$0xf]
        %v710 = vld [vmem:[%s9 + $0x2c] sm:$0xf]
        %v711 = vld [vmem:[%s9 + $0x30] sm:$0xf]
        %v712 = vld [vmem:[%s9 + $0x34] sm:$0xf]
        %v713 = vld [vmem:[%s9 + $0x38] sm:$0xf]
        %v714 = vld [vmem:[%s9 + $0x3c] sm:$0xf]
        %v731 = vunpack.c.l.b16 %v699
        %v732 = vunpack.c.l.b16 %v700
        %v733 = vunpack.c.l.b16 %v701
        %v734 = vunpack.c.l.b16 %v702
        %v735 = vunpack.c.l.b16 %v703
        %v736 = vunpack.c.l.b16 %v704
        %v737 = vunpack.c.l.b16 %v705
        %v738 = vunpack.c.l.b16 %v706
        %v739 = vunpack.c.l.b16 %v707
        %v740 = vunpack.c.l.b16 %v708
        %v741 = vunpack.c.l.b16 %v709
        %v742 = vunpack.c.l.b16 %v710
        %v743 = vunpack.c.l.b16 %v711
        %v744 = vunpack.c.l.b16 %v712
        %v745 = vunpack.c.l.b16 %v713
        %v746 = vunpack.c.l.b16 %v714
        %v747 = vpack.c.b16 %v732, %v731
        %v748 = vpack.c.b16 %v734, %v733
        %v749 = vpack.c.b16 %v736, %v735
        %v750 = vpack.c.b16 %v738, %v737
        %v751 = vpack.c.b16 %v740, %v739
        %v752 = vpack.c.b16 %v742, %v741
        %v753 = vpack.c.b16 %v744, %v743
        %v754 = vpack.c.b16 %v746, %v745
        %763 = vmatprep.subr.bf16.mxu0 0
        %764 = vmatpush1.bf16.msra.mxu0 %v747
        %765 = vmatprep.subr.bf16.mxu0 0
        %766 = vmatpush1.bf16.msra.mxu0 %v748
        %767 = vmatprep.subr.bf16.mxu0 0
        %768 = vmatpush1.bf16.msra.mxu0 %v749
        %769 = vmatprep.subr.bf16.mxu0 0
        %770 = vmatpush1.bf16.msra.mxu0 %v750
        %771 = vmatprep.subr.bf16.mxu0 0
        %772 = vmatpush1.bf16.msra.mxu0 %v751
        %773 = vmatprep.subr.bf16.mxu0 0
        %774 = vmatpush1.bf16.msra.mxu0 %v752
        %775 = vmatprep.subr.bf16.mxu0 0
        %776 = vmatpush1.bf16.msra.mxu0 %v753
        %777 = vmatprep.subr.bf16.mxu0 0
        %778 = vmatpush1.bf16.msra.mxu0 %v754
        %779 = vmatprep.subr.bf16.mxu0 0
        %780 = vmatpush1.bf16.msra.mxu0 0
        %781 = vmatprep.subr.bf16.mxu0 0
        %782 = vmatpush1.bf16.msra.mxu0 0
        %783 = vmatprep.subr.bf16.mxu0 0
        %784 = vmatpush1.bf16.msra.mxu0 0
        %785 = vmatprep.subr.bf16.mxu0 0
        %786 = vmatpush1.bf16.msra.mxu0 0
        %787 = vmatprep.subr.bf16.mxu0 0
        %788 = vmatpush1.bf16.msra.mxu0 0
        %789 = vmatprep.subr.bf16.mxu0 0
        %790 = vmatpush1.bf16.msra.mxu0 0
        %791 = vmatprep.subr.bf16.mxu0 0
        %792 = vmatpush1.bf16.msra.mxu0 0
        %793 = vmatprep.subr.bf16.mxu0 0
        %794 = vmatpush1.bf16.msra.mxu0 0
        %795 = vmatprep.mubr.bf16.mxu0 0
        %796 = vmatmul.mubr.bf16.gmra.mrb[0].mxu0 %v574
        %v797 = vpop.f32.mrb[0].mxu0
        %v798 = vadd.f32 0.0, %v797
        %v799 = vpop.f32.mrb[0].mxu0
        %v800 = vpop.f32.mrb[0].mxu0
        %v801 = vadd.f32 0.0, %v800
        %v802 = vpop.f32.mrb[0].mxu0
        %803 = vmatprep.mubr.bf16.mxu0 0
        %804 = vmatmul.mubr.bf16.gmra.mrb[0].mxu0 %v575
        %v805 = vpop.f32.mrb[0].mxu0
        %v806 = vadd.f32 0.0, %v805
        %v807 = vpop.f32.mrb[0].mxu0
        %v808 = vpop.f32.mrb[0].mxu0
        %v809 = vadd.f32 0.0, %v808
        %v810 = vpop.f32.mrb[0].mxu0
        %811 = vmatprep.mubr.bf16.mxu0 0
        %812 = vmatmul.mubr.bf16.gmra.mrb[0].mxu0 %v576
        %v813 = vpop.f32.mrb[0].mxu0
        %v814 = vadd.f32 0.0, %v813
        %v815 = vpop.f32.mrb[0].mxu0
        %v816 = vpop.f32.mrb[0].mxu0
        %v817 = vadd.f32 0.0, %v816
        %v818 = vpop.f32.mrb[0].mxu0
        %819 = vmatprep.mubr.bf16.mxu0 0
        %820 = vmatmul.mubr.bf16.gmra.mrb[0].mxu0 %v577
        %v821 = vpop.f32.mrb[0].mxu0
        %v822 = vadd.f32 0.0, %v821
        %v823 = vpop.f32.mrb[0].mxu0
        %v824 = vpop.f32.mrb[0].mxu0
        %v825 = vadd.f32 0.0, %v824
        %v826 = vpop.f32.mrb[0].mxu0
        %827 = vdwg.mxu0
        %828 = vst [vmem:[%s424] sm:$0xff] %v798
        %829 = vst [vmem:[%s424 + $0x8] sm:$0xff] %v801
        %830 = vst [vmem:[%s424 + $0x10] sm:$0xff] %v806
        %831 = vst [vmem:[%s424 + $0x18] sm:$0xff] %v809
        %832 = vst [vmem:[%s424 + $0x20] sm:$0xff] %v814
        %833 = vst [vmem:[%s424 + $0x28] sm:$0xff] %v817
        %834 = vst [vmem:[%s424 + $0x30] sm:$0xff] %v822
        %835 = vst [vmem:[%s424 + $0x38] sm:$0xff] %v825
        %v836 = vld [vmem:[%s3] sm:$0xf]
        %v837 = vld [vmem:[%s3 + $0x4] sm:$0xf]
        %v838 = vld [vmem:[%s3 + $0x8] sm:$0xf]
        %v839 = vld [vmem:[%s3 + $0xc] sm:$0xf]
        %v840 = vld [vmem:[%s3 + $0x10] sm:$0xf]
        %v841 = vld [vmem:[%s3 + $0x14] sm:$0xf]
        %v842 = vld [vmem:[%s3 + $0x18] sm:$0xf]
        %v843 = vld [vmem:[%s3 + $0x1c] sm:$0xf]
        %v844 = vld [vmem:[%s3 + $0x20] sm:$0xf]
        %v845 = vld [vmem:[%s3 + $0x24] sm:$0xf]
        %v846 = vld [vmem:[%s3 + $0x28] sm:$0xf]
        %v847 = vld [vmem:[%s3 + $0x2c] sm:$0xf]
        %v848 = vld [vmem:[%s3 + $0x30] sm:$0xf]
        %v849 = vld [vmem:[%s3 + $0x34] sm:$0xf]
        %v850 = vld [vmem:[%s3 + $0x38] sm:$0xf]
        %v851 = vld [vmem:[%s3 + $0x3c] sm:$0xf]
        %v852 = vld [vmem:[%s3 + $0x40] sm:$0xf]
        %v853 = vld [vmem:[%s3 + $0x44] sm:$0xf]
        %v854 = vld [vmem:[%s3 + $0x48] sm:$0xf]
        %v855 = vld [vmem:[%s3 + $0x4c] sm:$0xf]
        %v856 = vld [vmem:[%s3 + $0x50] sm:$0xf]
        %v857 = vld [vmem:[%s3 + $0x54] sm:$0xf]
        %v858 = vld [vmem:[%s3 + $0x58] sm:$0xf]
        %v859 = vld [vmem:[%s3 + $0x5c] sm:$0xf]
        %v860 = vld [vmem:[%s3 + $0x60] sm:$0xf]
        %v861 = vld [vmem:[%s3 + $0x64] sm:$0xf]
        %v862 = vld [vmem:[%s3 + $0x68] sm:$0xf]
        %v863 = vld [vmem:[%s3 + $0x6c] sm:$0xf]
        %v864 = vld [vmem:[%s3 + $0x70] sm:$0xf]
        %v865 = vld [vmem:[%s3 + $0x74] sm:$0xf]
        %v866 = vld [vmem:[%s3 + $0x78] sm:$0xf]
        %v867 = vld [vmem:[%s3 + $0x7c] sm:$0xf]
        %v868 = vld [vmem:[%s3 + $0x80] sm:$0xf]
        %v869 = vld [vmem:[%s3 + $0x84] sm:$0xf]
        %v870 = vld [vmem:[%s3 + $0x88] sm:$0xf]
        %v871 = vld [vmem:[%s3 + $0x8c] sm:$0xf]
        %v872 = vld [vmem:[%s3 + $0x90] sm:$0xf]
        %v873 = vld [vmem:[%s3 + $0x94] sm:$0xf]
        %v874 = vld [vmem:[%s3 + $0x98] sm:$0xf]
        %v875 = vld [vmem:[%s3 + $0x9c] sm:$0xf]
        %v876 = vld [vmem:[%s3 + $0xa0] sm:$0xf]
        %v877 = vld [vmem:[%s3 + $0xa4] sm:$0xf]
        %v878 = vld [vmem:[%s3 + $0xa8] sm:$0xf]
        %v879 = vld [vmem:[%s3 + $0xac] sm:$0xf]
        %v880 = vld [vmem:[%s3 + $0xb0] sm:$0xf]
        %v881 = vld [vmem:[%s3 + $0xb4] sm:$0xf]
        %v882 = vld [vmem:[%s3 + $0xb8] sm:$0xf]
        %v883 = vld [vmem:[%s3 + $0xbc] sm:$0xf]
        %v884 = vld [vmem:[%s3 + $0xc0] sm:$0xf]
        %v885 = vld [vmem:[%s3 + $0xc4] sm:$0xf]
        %v886 = vld [vmem:[%s3 + $0xc8] sm:$0xf]
        %v887 = vld [vmem:[%s3 + $0xcc] sm:$0xf]
        %v888 = vld [vmem:[%s3 + $0xd0] sm:$0xf]
        %v889 = vld [vmem:[%s3 + $0xd4] sm:$0xf]
        %v890 = vld [vmem:[%s3 + $0xd8] sm:$0xf]
        %v891 = vld [vmem:[%s3 + $0xdc] sm:$0xf]
        %v892 = vld [vmem:[%s3 + $0xe0] sm:$0xf]
        %v893 = vld [vmem:[%s3 + $0xe4] sm:$0xf]
        %v894 = vld [vmem:[%s3 + $0xe8] sm:$0xf]
        %v895 = vld [vmem:[%s3 + $0xec] sm:$0xf]
        %v896 = vld [vmem:[%s3 + $0xf0] sm:$0xf]
        %v897 = vld [vmem:[%s3 + $0xf4] sm:$0xf]
        %v898 = vld [vmem:[%s3 + $0xf8] sm:$0xf]
        %v899 = vld [vmem:[%s3 + $0xfc] sm:$0xf]
        %v900 = vld [vmem:[%s4] sm:$0xf]
        %v901 = vld [vmem:[%s4 + $0x4] sm:$0xf]
        %v902 = vld [vmem:[%s4 + $0x8] sm:$0xf]
        %v903 = vld [vmem:[%s4 + $0xc] sm:$0xf]
        %v904 = vld [vmem:[%s4 + $0x10] sm:$0xf]
        %v905 = vld [vmem:[%s4 + $0x14] sm:$0xf]
        %v906 = vld [vmem:[%s4 + $0x18] sm:$0xf]
        %v907 = vld [vmem:[%s4 + $0x1c] sm:$0xf]
        %v908 = vld [vmem:[%s4 + $0x20] sm:$0xf]
        %v909 = vld [vmem:[%s4 + $0x24] sm:$0xf]
        %v910 = vld [vmem:[%s4 + $0x28] sm:$0xf]
        %v911 = vld [vmem:[%s4 + $0x2c] sm:$0xf]
        %v912 = vld [vmem:[%s4 + $0x30] sm:$0xf]
        %v913 = vld [vmem:[%s4 + $0x34] sm:$0xf]
        %v914 = vld [vmem:[%s4 + $0x38] sm:$0xf]
        %v915 = vld [vmem:[%s4 + $0x3c] sm:$0xf]
        %v916 = vld [vmem:[%s4 + $0x40] sm:$0xf]
        %v917 = vld [vmem:[%s4 + $0x44] sm:$0xf]
        %v918 = vld [vmem:[%s4 + $0x48] sm:$0xf]
        %v919 = vld [vmem:[%s4 + $0x4c] sm:$0xf]
        %v920 = vld [vmem:[%s4 + $0x50] sm:$0xf]
        %v921 = vld [vmem:[%s4 + $0x54] sm:$0xf]
        %v922 = vld [vmem:[%s4 + $0x58] sm:$0xf]
        %v923 = vld [vmem:[%s4 + $0x5c] sm:$0xf]
        %v924 = vld [vmem:[%s4 + $0x60] sm:$0xf]
        %v925 = vld [vmem:[%s4 + $0x64] sm:$0xf]
        %v926 = vld [vmem:[%s4 + $0x68] sm:$0xf]
        %v927 = vld [vmem:[%s4 + $0x6c] sm:$0xf]
        %v928 = vld [vmem:[%s4 + $0x70] sm:$0xf]
        %v929 = vld [vmem:[%s4 + $0x74] sm:$0xf]
        %v930 = vld [vmem:[%s4 + $0x78] sm:$0xf]
        %v931 = vld [vmem:[%s4 + $0x7c] sm:$0xf]
        %v932 = vld [vmem:[%s4 + $0x80] sm:$0xf]
        %v933 = vld [vmem:[%s4 + $0x84] sm:$0xf]
        %v934 = vld [vmem:[%s4 + $0x88] sm:$0xf]
        %v935 = vld [vmem:[%s4 + $0x8c] sm:$0xf]
        %v936 = vld [vmem:[%s4 + $0x90] sm:$0xf]
        %v937 = vld [vmem:[%s4 + $0x94] sm:$0xf]
        %v938 = vld [vmem:[%s4 + $0x98] sm:$0xf]
        %v939 = vld [vmem:[%s4 + $0x9c] sm:$0xf]
        %v940 = vld [vmem:[%s4 + $0xa0] sm:$0xf]
        %v941 = vld [vmem:[%s4 + $0xa4] sm:$0xf]
        %v942 = vld [vmem:[%s4 + $0xa8] sm:$0xf]
        %v943 = vld [vmem:[%s4 + $0xac] sm:$0xf]
        %v944 = vld [vmem:[%s4 + $0xb0] sm:$0xf]
        %v945 = vld [vmem:[%s4 + $0xb4] sm:$0xf]
        %v946 = vld [vmem:[%s4 + $0xb8] sm:$0xf]
        %v947 = vld [vmem:[%s4 + $0xbc] sm:$0xf]
        %v948 = vld [vmem:[%s4 + $0xc0] sm:$0xf]
        %v949 = vld [vmem:[%s4 + $0xc4] sm:$0xf]
        %v950 = vld [vmem:[%s4 + $0xc8] sm:$0xf]
        %v951 = vld [vmem:[%s4 + $0xcc] sm:$0xf]
        %v952 = vld [vmem:[%s4 + $0xd0] sm:$0xf]
        %v953 = vld [vmem:[%s4 + $0xd4] sm:$0xf]
        %v954 = vld [vmem:[%s4 + $0xd8] sm:$0xf]
        %v955 = vld [vmem:[%s4 + $0xdc] sm:$0xf]
        %v956 = vld [vmem:[%s4 + $0xe0] sm:$0xf]
        %v957 = vld [vmem:[%s4 + $0xe4] sm:$0xf]
        %v958 = vld [vmem:[%s4 + $0xe8] sm:$0xf]
        %v959 = vld [vmem:[%s4 + $0xec] sm:$0xf]
        %v960 = vld [vmem:[%s4 + $0xf0] sm:$0xf]
        %v961 = vld [vmem:[%s4 + $0xf4] sm:$0xf]
        %v962 = vld [vmem:[%s4 + $0xf8] sm:$0xf]
        %v963 = vld [vmem:[%s4 + $0xfc] sm:$0xf]
        %v964 = vld [vmem:[%s5] sm:$0xf]
        %v965 = vld [vmem:[%s5 + $0x4] sm:$0xf]
        %v966 = vld [vmem:[%s5 + $0x8] sm:$0xf]
        %v967 = vld [vmem:[%s5 + $0xc] sm:$0xf]
        %v968 = vld [vmem:[%s5 + $0x10] sm:$0xf]
        %v969 = vld [vmem:[%s5 + $0x14] sm:$0xf]
        %v970 = vld [vmem:[%s5 + $0x18] sm:$0xf]
        %v971 = vld [vmem:[%s5 + $0x1c] sm:$0xf]
        %v972 = vld [vmem:[%s5 + $0x20] sm:$0xf]
        %v973 = vld [vmem:[%s5 + $0x24] sm:$0xf]
        %v974 = vld [vmem:[%s5 + $0x28] sm:$0xf]
        %v975 = vld [vmem:[%s5 + $0x2c] sm:$0xf]
        %v976 = vld [vmem:[%s5 + $0x30] sm:$0xf]
        %v977 = vld [vmem:[%s5 + $0x34] sm:$0xf]
        %v978 = vld [vmem:[%s5 + $0x38] sm:$0xf]
        %v979 = vld [vmem:[%s5 + $0x3c] sm:$0xf]
        %v980 = vld [vmem:[%s5 + $0x40] sm:$0xf]
        %v981 = vld [vmem:[%s5 + $0x44] sm:$0xf]
        %v982 = vld [vmem:[%s5 + $0x48] sm:$0xf]
        %v983 = vld [vmem:[%s5 + $0x4c] sm:$0xf]
        %v984 = vld [vmem:[%s5 + $0x50] sm:$0xf]
        %v985 = vld [vmem:[%s5 + $0x54] sm:$0xf]
        %v986 = vld [vmem:[%s5 + $0x58] sm:$0xf]
        %v987 = vld [vmem:[%s5 + $0x5c] sm:$0xf]
        %v988 = vld [vmem:[%s5 + $0x60] sm:$0xf]
        %v989 = vld [vmem:[%s5 + $0x64] sm:$0xf]
        %v990 = vld [vmem:[%s5 + $0x68] sm:$0xf]
        %v991 = vld [vmem:[%s5 + $0x6c] sm:$0xf]
        %v992 = vld [vmem:[%s5 + $0x70] sm:$0xf]
        %v993 = vld [vmem:[%s5 + $0x74] sm:$0xf]
        %v994 = vld [vmem:[%s5 + $0x78] sm:$0xf]
        %v995 = vld [vmem:[%s5 + $0x7c] sm:$0xf]
        %v996 = vld [vmem:[%s5 + $0x80] sm:$0xf]
        %v997 = vld [vmem:[%s5 + $0x84] sm:$0xf]
        %v998 = vld [vmem:[%s5 + $0x88] sm:$0xf]
        %v999 = vld [vmem:[%s5 + $0x8c] sm:$0xf]
        %v1000 = vld [vmem:[%s5 + $0x90] sm:$0xf]
        %v1001 = vld [vmem:[%s5 + $0x94] sm:$0xf]
        %v1002 = vld [vmem:[%s5 + $0x98] sm:$0xf]
        %v1003 = vld [vmem:[%s5 + $0x9c] sm:$0xf]
        %v1004 = vld [vmem:[%s5 + $0xa0] sm:$0xf]
        %v1005 = vld [vmem:[%s5 + $0xa4] sm:$0xf]
        %v1006 = vld [vmem:[%s5 + $0xa8] sm:$0xf]
        %v1007 = vld [vmem:[%s5 + $0xac] sm:$0xf]
        %v1008 = vld [vmem:[%s5 + $0xb0] sm:$0xf]
        %v1009 = vld [vmem:[%s5 + $0xb4] sm:$0xf]
        %v1010 = vld [vmem:[%s5 + $0xb8] sm:$0xf]
        %v1011 = vld [vmem:[%s5 + $0xbc] sm:$0xf]
        %v1012 = vld [vmem:[%s5 + $0xc0] sm:$0xf]
        %v1013 = vld [vmem:[%s5 + $0xc4] sm:$0xf]
        %v1014 = vld [vmem:[%s5 + $0xc8] sm:$0xf]
        %v1015 = vld [vmem:[%s5 + $0xcc] sm:$0xf]
        %v1016 = vld [vmem:[%s5 + $0xd0] sm:$0xf]
        %v1017 = vld [vmem:[%s5 + $0xd4] sm:$0xf]
        %v1018 = vld [vmem:[%s5 + $0xd8] sm:$0xf]
        %v1019 = vld [vmem:[%s5 + $0xdc] sm:$0xf]
        %v1020 = vld [vmem:[%s5 + $0xe0] sm:$0xf]
        %v1021 = vld [vmem:[%s5 + $0xe4] sm:$0xf]
        %v1022 = vld [vmem:[%s5 + $0xe8] sm:$0xf]
        %v1023 = vld [vmem:[%s5 + $0xec] sm:$0xf]
        %v1024 = vld [vmem:[%s5 + $0xf0] sm:$0xf]
        %v1025 = vld [vmem:[%s5 + $0xf4] sm:$0xf]
        %v1026 = vld [vmem:[%s5 + $0xf8] sm:$0xf]
        %v1027 = vld [vmem:[%s5 + $0xfc] sm:$0xf]
        %v1028 = vld [vmem:[%s6] sm:$0xf]
        %v1029 = vld [vmem:[%s6 + $0x4] sm:$0xf]
        %v1030 = vld [vmem:[%s6 + $0x8] sm:$0xf]
        %v1031 = vld [vmem:[%s6 + $0xc] sm:$0xf]
        %v1032 = vld [vmem:[%s6 + $0x10] sm:$0xf]
        %v1033 = vld [vmem:[%s6 + $0x14] sm:$0xf]
        %v1034 = vld [vmem:[%s6 + $0x18] sm:$0xf]
        %v1035 = vld [vmem:[%s6 + $0x1c] sm:$0xf]
        %v1036 = vld [vmem:[%s6 + $0x20] sm:$0xf]
        %v1037 = vld [vmem:[%s6 + $0x24] sm:$0xf]
        %v1038 = vld [vmem:[%s6 + $0x28] sm:$0xf]
        %v1039 = vld [vmem:[%s6 + $0x2c] sm:$0xf]
        %v1040 = vld [vmem:[%s6 + $0x30] sm:$0xf]
        %v1041 = vld [vmem:[%s6 + $0x34] sm:$0xf]
        %v1042 = vld [vmem:[%s6 + $0x38] sm:$0xf]
        %v1043 = vld [vmem:[%s6 + $0x3c] sm:$0xf]
        %v1044 = vld [vmem:[%s7] sm:$0x1]
        %v1061 = vunpack.c.l.b16 %v836
        %v1062 = vunpack.c.l.b16 %v837
        %v1063 = vunpack.c.l.b16 %v838
        %v1064 = vunpack.c.l.b16 %v839
        %v1065 = vunpack.c.l.b16 %v840
        %v1066 = vunpack.c.l.b16 %v841
        %v1067 = vunpack.c.l.b16 %v842
        %v1068 = vunpack.c.l.b16 %v843
        %v1069 = vunpack.c.l.b16 %v844
        %v1070 = vunpack.c.l.b16 %v845
        %v1071 = vunpack.c.l.b16 %v846
        %v1072 = vunpack.c.l.b16 %v847
        %v1073 = vunpack.c.l.b16 %v848
        %v1074 = vunpack.c.l.b16 %v849
        %v1075 = vunpack.c.l.b16 %v850
        %v1076 = vunpack.c.l.b16 %v851
        %v1077 = vpack.c.b16 %v1062, %v1061
        %v1078 = vpack.c.b16 %v1064, %v1063
        %v1079 = vpack.c.b16 %v1066, %v1065
        %v1080 = vpack.c.b16 %v1068, %v1067
        %v1081 = vpack.c.b16 %v1070, %v1069
        %v1082 = vpack.c.b16 %v1072, %v1071
        %v1083 = vpack.c.b16 %v1074, %v1073
        %v1084 = vpack.c.b16 %v1076, %v1075
        %1093 = vmatprep.subr.bf16.mxu0 0
        %1094 = vmatpush1.bf16.msra.mxu0 %v1077
        %1095 = vmatprep.subr.bf16.mxu0 0
        %1096 = vmatpush1.bf16.msra.mxu0 %v1078
        %1097 = vmatprep.subr.bf16.mxu0 0
        %1098 = vmatpush1.bf16.msra.mxu0 %v1079
        %1099 = vmatprep.subr.bf16.mxu0 0
        %1100 = vmatpush1.bf16.msra.mxu0 %v1080
        %1101 = vmatprep.subr.bf16.mxu0 0
        %1102 = vmatpush1.bf16.msra.mxu0 %v1081
        %1103 = vmatprep.subr.bf16.mxu0 0
        %1104 = vmatpush1.bf16.msra.mxu0 %v1082
        %1105 = vmatprep.subr.bf16.mxu0 0
        %1106 = vmatpush1.bf16.msra.mxu0 %v1083
        %1107 = vmatprep.subr.bf16.mxu0 0
        %1108 = vmatpush1.bf16.msra.mxu0 %v1084
        %1109 = vmatprep.subr.bf16.mxu0 0
        %1110 = vmatpush1.bf16.msra.mxu0 0
        %1111 = vmatprep.subr.bf16.mxu0 0
        %1112 = vmatpush1.bf16.msra.mxu0 0
        %1113 = vmatprep.subr.bf16.mxu0 0
        %1114 = vmatpush1.bf16.msra.mxu0 0
        %1115 = vmatprep.subr.bf16.mxu0 0
        %1116 = vmatpush1.bf16.msra.mxu0 0
        %1117 = vmatprep.subr.bf16.mxu0 0
        %1118 = vmatpush1.bf16.msra.mxu0 0
        %1119 = vmatprep.subr.bf16.mxu0 0
        %1120 = vmatpush1.bf16.msra.mxu0 0
        %1121 = vmatprep.subr.bf16.mxu0 0
        %1122 = vmatpush1.bf16.msra.mxu0 0
        %1123 = vmatprep.subr.bf16.mxu0 0
        %1124 = vmatpush1.bf16.msra.mxu0 0
        %1125 = vmatprep.mubr.bf16.mxu0 0
        %1126 = vmatmul.mubr.bf16.gmra.mrb[0].mxu0 %v574
        %v1127 = vpop.f32.mrb[0].mxu0
        %v1128 = vadd.f32 0.0, %v1127
        %v1129 = vpop.f32.mrb[0].mxu0
        %v1130 = vpop.f32.mrb[0].mxu0
        %v1131 = vadd.f32 0.0, %v1130
        %v1132 = vpop.f32.mrb[0].mxu0
        %1133 = vmatprep.mubr.bf16.mxu0 0
        %1134 = vmatmul.mubr.bf16.gmra.mrb[0].mxu0 %v575
        %v1135 = vpop.f32.mrb[0].mxu0
        %v1136 = vadd.f32 0.0, %v1135
        %v1137 = vpop.f32.mrb[0].mxu0
        %v1138 = vpop.f32.mrb[0].mxu0
        %v1139 = vadd.f32 0.0, %v1138
        %v1140 = vpop.f32.mrb[0].mxu0
        %1141 = vmatprep.mubr.bf16.mxu0 0
        %1142 = vmatmul.mubr.bf16.gmra.mrb[0].mxu0 %v576
        %v1143 = vpop.f32.mrb[0].mxu0
        %v1144 = vadd.f32 0.0, %v1143
        %v1145 = vpop.f32.mrb[0].mxu0
        %v1146 = vpop.f32.mrb[0].mxu0
        %v1147 = vadd.f32 0.0, %v1146
        %v1148 = vpop.f32.mrb[0].mxu0
        %1149 = vmatprep.mubr.bf16.mxu0 0
        %1150 = vmatmul.mubr.bf16.gmra.mrb[0].mxu0 %v577
        %v1151 = vpop.f32.mrb[0].mxu0
        %v1152 = vadd.f32 0.0, %v1151
        %v1153 = vpop.f32.mrb[0].mxu0
        %v1154 = vpop.f32.mrb[0].mxu0
        %v1155 = vadd.f32 0.0, %v1154
        %v1156 = vpop.f32.mrb[0].mxu0
        %1157 = vdwg.mxu0
        %v1174 = vunpack.c.l.b16 %v852
        %v1175 = vunpack.c.l.b16 %v853
        %v1176 = vunpack.c.l.b16 %v854
        %v1177 = vunpack.c.l.b16 %v855
        %v1178 = vunpack.c.l.b16 %v856
        %v1179 = vunpack.c.l.b16 %v857
        %v1180 = vunpack.c.l.b16 %v858
        %v1181 = vunpack.c.l.b16 %v859
        %v1182 = vunpack.c.l.b16 %v860
        %v1183 = vunpack.c.l.b16 %v861
        %v1184 = vunpack.c.l.b16 %v862
        %v1185 = vunpack.c.l.b16 %v863
        %v1186 = vunpack.c.l.b16 %v864
        %v1187 = vunpack.c.l.b16 %v865
        %v1188 = vunpack.c.l.b16 %v866
        %v1189 = vunpack.c.l.b16 %v867
        %v1190 = vpack.c.b16 %v1175, %v1174
        %v1191 = vpack.c.b16 %v1177, %v1176
        %v1192 = vpack.c.b16 %v1179, %v1178
        %v1193 = vpack.c.b16 %v1181, %v1180
        %v1194 = vpack.c.b16 %v1183, %v1182
        %v1195 = vpack.c.b16 %v1185, %v1184
        %v1196 = vpack.c.b16 %v1187, %v1186
        %v1197 = vpack.c.b16 %v1189, %v1188
        %1206 = vmatprep.subr.bf16.mxu0 0
        %1207 = vmatpush1.bf16.msra.mxu0 %v1190
        %1208 = vmatprep.subr.bf16.mxu0 0
        %1209 = vmatpush1.bf16.msra.mxu0 %v1191
        %1210 = vmatprep.subr.bf16.mxu0 0
        %1211 = vmatpush1.bf16.msra.mxu0 %v1192
        %1212 = vmatprep.subr.bf16.mxu0 0
        %1213 = vmatpush1.bf16.msra.mxu0 %v1193
        %1214 = vmatprep.subr.bf16.mxu0 0
        %1215 = vmatpush1.bf16.msra.mxu0 %v1194
        %1216 = vmatprep.subr.bf16.mxu0 0
        %1217 = vmatpush1.bf16.msra.mxu0 %v1195
        %1218 = vmatprep.subr.bf16.mxu0 0
        %1219 = vmatpush1.bf16.msra.mxu0 %v1196
        %1220 = vmatprep.subr.bf16.mxu0 0
        %1221 = vmatpush1.bf16.msra.mxu0 %v1197
        %1222 = vmatprep.subr.bf16.mxu0 0
        %1223 = vmatpush1.bf16.msra.mxu0 0
        %1224 = vmatprep.subr.bf16.mxu0 0
        %1225 = vmatpush1.bf16.msra.mxu0 0
        %1226 = vmatprep.subr.bf16.mxu0 0
        %1227 = vmatpush1.bf16.msra.mxu0 0
        %1228 = vmatprep.subr.bf16.mxu0 0
        %1229 = vmatpush1.bf16.msra.mxu0 0
        %1230 = vmatprep.subr.bf16.mxu0 0
        %1231 = vmatpush1.bf16.msra.mxu0 0
        %1232 = vmatprep.subr.bf16.mxu0 0
        %1233 = vmatpush1.bf16.msra.mxu0 0
        %1234 = vmatprep.subr.bf16.mxu0 0
        %1235 = vmatpush1.bf16.msra.mxu0 0
        %1236 = vmatprep.subr.bf16.mxu0 0
        %1237 = vmatpush1.bf16.msra.mxu0 0
        %1238 = vmatprep.mubr.bf16.mxu0 0
        %1239 = vmatmul.mubr.bf16.gmra.mrb[0].mxu0 %v574
        %v1240 = vpop.f32.mrb[0].mxu0
        %v1241 = vadd.f32 0.0, %v1240
        %v1242 = vpop.f32.mrb[0].mxu0
        %v1243 = vpop.f32.mrb[0].mxu0
        %v1244 = vadd.f32 0.0, %v1243
        %v1245 = vpop.f32.mrb[0].mxu0
        %1246 = vmatprep.mubr.bf16.mxu0 0
        %1247 = vmatmul.mubr.bf16.gmra.mrb[0].mxu0 %v575
        %v1248 = vpop.f32.mrb[0].mxu0
        %v1249 = vadd.f32 0.0, %v1248
        %v1250 = vpop.f32.mrb[0].mxu0
        %v1251 = vpop.f32.mrb[0].mxu0
        %v1252 = vadd.f32 0.0, %v1251
        %v1253 = vpop.f32.mrb[0].mxu0
        %1254 = vmatprep.mubr.bf16.mxu0 0
        %1255 = vmatmul.mubr.bf16.gmra.mrb[0].mxu0 %v576
        %v1256 = vpop.f32.mrb[0].mxu0
        %v1257 = vadd.f32 0.0, %v1256
        %v1258 = vpop.f32.mrb[0].mxu0
        %v1259 = vpop.f32.mrb[0].mxu0
        %v1260 = vadd.f32 0.0, %v1259
        %v1261 = vpop.f32.mrb[0].mxu0
        %1262 = vmatprep.mubr.bf16.mxu0 0
        %1263 = vmatmul.mubr.bf16.gmra.mrb[0].mxu0 %v577
        %v1264 = vpop.f32.mrb[0].mxu0
        %v1265 = vadd.f32 0.0, %v1264
        %v1266 = vpop.f32.mrb[0].mxu0
        %v1267 = vpop.f32.mrb[0].mxu0
        %v1268 = vadd.f32 0.0, %v1267
        %v1269 = vpop.f32.mrb[0].mxu0
        %1270 = vdwg.mxu0
        %v1287 = vunpack.c.l.b16 %v868
        %v1288 = vunpack.c.l.b16 %v869
        %v1289 = vunpack.c.l.b16 %v870
        %v1290 = vunpack.c.l.b16 %v871
        %v1291 = vunpack.c.l.b16 %v872
        %v1292 = vunpack.c.l.b16 %v873
        %v1293 = vunpack.c.l.b16 %v874
        %v1294 = vunpack.c.l.b16 %v875
        %v1295 = vunpack.c.l.b16 %v876
        %v1296 = vunpack.c.l.b16 %v877
        %v1297 = vunpack.c.l.b16 %v878
        %v1298 = vunpack.c.l.b16 %v879
        %v1299 = vunpack.c.l.b16 %v880
        %v1300 = vunpack.c.l.b16 %v881
        %v1301 = vunpack.c.l.b16 %v882
        %v1302 = vunpack.c.l.b16 %v883
        %v1303 = vpack.c.b16 %v1288, %v1287
        %v1304 = vpack.c.b16 %v1290, %v1289
        %v1305 = vpack.c.b16 %v1292, %v1291
        %v1306 = vpack.c.b16 %v1294, %v1293
        %v1307 = vpack.c.b16 %v1296, %v1295
        %v1308 = vpack.c.b16 %v1298, %v1297
        %v1309 = vpack.c.b16 %v1300, %v1299
        %v1310 = vpack.c.b16 %v1302, %v1301
        %1319 = vmatprep.subr.bf16.mxu0 0
        %1320 = vmatpush1.bf16.msra.mxu0 %v1303
        %1321 = vmatprep.subr.bf16.mxu0 0
        %1322 = vmatpush1.bf16.msra.mxu0 %v1304
        %1323 = vmatprep.subr.bf16.mxu0 0
        %1324 = vmatpush1.bf16.msra.mxu0 %v1305
        %1325 = vmatprep.subr.bf16.mxu0 0
        %1326 = vmatpush1.bf16.msra.mxu0 %v1306
        %1327 = vmatprep.subr.bf16.mxu0 0
        %1328 = vmatpush1.bf16.msra.mxu0 %v1307
        %1329 = vmatprep.subr.bf16.mxu0 0
        %1330 = vmatpush1.bf16.msra.mxu0 %v1308
        %1331 = vmatprep.subr.bf16.mxu0 0
        %1332 = vmatpush1.bf16.msra.mxu0 %v1309
        %1333 = vmatprep.subr.bf16.mxu0 0
        %1334 = vmatpush1.bf16.msra.mxu0 %v1310
        %1335 = vmatprep.subr.bf16.mxu0 0
        %1336 = vmatpush1.bf16.msra.mxu0 0
        %1337 = vmatprep.subr.bf16.mxu0 0
        %1338 = vmatpush1.bf16.msra.mxu0 0
        %1339 = vmatprep.subr.bf16.mxu0 0
        %1340 = vmatpush1.bf16.msra.mxu0 0
        %1341 = vmatprep.subr.bf16.mxu0 0
        %1342 = vmatpush1.bf16.msra.mxu0 0
        %1343 = vmatprep.subr.bf16.mxu0 0
        %1344 = vmatpush1.bf16.msra.mxu0 0
        %1345 = vmatprep.subr.bf16.mxu0 0
        %1346 = vmatpush1.bf16.msra.mxu0 0
        %1347 = vmatprep.subr.bf16.mxu0 0
        %1348 = vmatpush1.bf16.msra.mxu0 0
        %1349 = vmatprep.subr.bf16.mxu0 0
        %1350 = vmatpush1.bf16.msra.mxu0 0
        %1351 = vmatprep.mubr.bf16.mxu0 0
        %1352 = vmatmul.mubr.bf16.gmra.mrb[0].mxu0 %v574
        %v1353 = vpop.f32.mrb[0].mxu0
        %v1354 = vadd.f32 0.0, %v1353
        %v1355 = vpop.f32.mrb[0].mxu0
        %v1356 = vpop.f32.mrb[0].mxu0
        %v1357 = vadd.f32 0.0, %v1356
        %v1358 = vpop.f32.mrb[0].mxu0
        %1359 = vmatprep.mubr.bf16.mxu0 0
        %1360 = vmatmul.mubr.bf16.gmra.mrb[0].mxu0 %v575
        %v1361 = vpop.f32.mrb[0].mxu0
        %v1362 = vadd.f32 0.0, %v1361
        %v1363 = vpop.f32.mrb[0].mxu0
        %v1364 = vpop.f32.mrb[0].mxu0
        %v1365 = vadd.f32 0.0, %v1364
        %v1366 = vpop.f32.mrb[0].mxu0
        %1367 = vmatprep.mubr.bf16.mxu0 0
        %1368 = vmatmul.mubr.bf16.gmra.mrb[0].mxu0 %v576
        %v1369 = vpop.f32.mrb[0].mxu0
        %v1370 = vadd.f32 0.0, %v1369
        %v1371 = vpop.f32.mrb[0].mxu0
        %v1372 = vpop.f32.mrb[0].mxu0
        %v1373 = vadd.f32 0.0, %v1372
        %v1374 = vpop.f32.mrb[0].mxu0
        %1375 = vmatprep.mubr.bf16.mxu0 0
        %1376 = vmatmul.mubr.bf16.gmra.mrb[0].mxu0 %v577
        %v1377 = vpop.f32.mrb[0].mxu0
        %v1378 = vadd.f32 0.0, %v1377
        %v1379 = vpop.f32.mrb[0].mxu0
        %v1380 = vpop.f32.mrb[0].mxu0
        %v1381 = vadd.f32 0.0, %v1380
        %v1382 = vpop.f32.mrb[0].mxu0
        %1383 = vdwg.mxu0
        %v1400 = vunpack.c.l.b16 %v884
        %v1401 = vunpack.c.l.b16 %v885
        %v1402 = vunpack.c.l.b16 %v886
        %v1403 = vunpack.c.l.b16 %v887
        %v1404 = vunpack.c.l.b16 %v888
        %v1405 = vunpack.c.l.b16 %v889
        %v1406 = vunpack.c.l.b16 %v890
        %v1407 = vunpack.c.l.b16 %v891
        %v1408 = vunpack.c.l.b16 %v892
        %v1409 = vunpack.c.l.b16 %v893
        %v1410 = vunpack.c.l.b16 %v894
        %v1411 = vunpack.c.l.b16 %v895
        %v1412 = vunpack.c.l.b16 %v896
        %v1413 = vunpack.c.l.b16 %v897
        %v1414 = vunpack.c.l.b16 %v898
        %v1415 = vunpack.c.l.b16 %v899
        %v1416 = vpack.c.b16 %v1401, %v1400
        %v1417 = vpack.c.b16 %v1403, %v1402
        %v1418 = vpack.c.b16 %v1405, %v1404
        %v1419 = vpack.c.b16 %v1407, %v1406
        %v1420 = vpack.c.b16 %v1409, %v1408
        %v1421 = vpack.c.b16 %v1411, %v1410
        %v1422 = vpack.c.b16 %v1413, %v1412
        %v1423 = vpack.c.b16 %v1415, %v1414
        %1432 = vmatprep.subr.bf16.mxu0 0
        %1433 = vmatpush1.bf16.msra.mxu0 %v1416
        %1434 = vmatprep.subr.bf16.mxu0 0
        %1435 = vmatpush1.bf16.msra.mxu0 %v1417
        %1436 = vmatprep.subr.bf16.mxu0 0
        %1437 = vmatpush1.bf16.msra.mxu0 %v1418
        %1438 = vmatprep.subr.bf16.mxu0 0
        %1439 = vmatpush1.bf16.msra.mxu0 %v1419
        %1440 = vmatprep.subr.bf16.mxu0 0
        %1441 = vmatpush1.bf16.msra.mxu0 %v1420
        %1442 = vmatprep.subr.bf16.mxu0 0
        %1443 = vmatpush1.bf16.msra.mxu0 %v1421
        %1444 = vmatprep.subr.bf16.mxu0 0
        %1445 = vmatpush1.bf16.msra.mxu0 %v1422
        %1446 = vmatprep.subr.bf16.mxu0 0
        %1447 = vmatpush1.bf16.msra.mxu0 %v1423
        %1448 = vmatprep.subr.bf16.mxu0 0
        %1449 = vmatpush1.bf16.msra.mxu0 0
        %1450 = vmatprep.subr.bf16.mxu0 0
        %1451 = vmatpush1.bf16.msra.mxu0 0
        %1452 = vmatprep.subr.bf16.mxu0 0
        %1453 = vmatpush1.bf16.msra.mxu0 0
        %1454 = vmatprep.subr.bf16.mxu0 0
        %1455 = vmatpush1.bf16.msra.mxu0 0
        %1456 = vmatprep.subr.bf16.mxu0 0
        %1457 = vmatpush1.bf16.msra.mxu0 0
        %1458 = vmatprep.subr.bf16.mxu0 0
        %1459 = vmatpush1.bf16.msra.mxu0 0
        %1460 = vmatprep.subr.bf16.mxu0 0
        %1461 = vmatpush1.bf16.msra.mxu0 0
        %1462 = vmatprep.subr.bf16.mxu0 0
        %1463 = vmatpush1.bf16.msra.mxu0 0
        %1464 = vmatprep.mubr.bf16.mxu0 0
        %1465 = vmatmul.mubr.bf16.gmra.mrb[0].mxu0 %v574
        %v1466 = vpop.f32.mrb[0].mxu0
        %v1467 = vadd.f32 0.0, %v1466
        %v1468 = vpop.f32.mrb[0].mxu0
        %v1469 = vpop.f32.mrb[0].mxu0
        %v1470 = vadd.f32 0.0, %v1469
        %v1471 = vpop.f32.mrb[0].mxu0
        %1472 = vmatprep.mubr.bf16.mxu0 0
        %1473 = vmatmul.mubr.bf16.gmra.mrb[0].mxu0 %v575
        %v1474 = vpop.f32.mrb[0].mxu0
        %v1475 = vadd.f32 0.0, %v1474
        %v1476 = vpop.f32.mrb[0].mxu0
        %v1477 = vpop.f32.mrb[0].mxu0
        %v1478 = vadd.f32 0.0, %v1477
        %v1479 = vpop.f32.mrb[0].mxu0
        %1480 = vmatprep.mubr.bf16.mxu0 0
        %1481 = vmatmul.mubr.bf16.gmra.mrb[0].mxu0 %v576
        %v1482 = vpop.f32.mrb[0].mxu0
        %v1483 = vadd.f32 0.0, %v1482
        %v1484 = vpop.f32.mrb[0].mxu0
        %v1485 = vpop.f32.mrb[0].mxu0
        %v1486 = vadd.f32 0.0, %v1485
        %v1487 = vpop.f32.mrb[0].mxu0
        %1488 = vmatprep.mubr.bf16.mxu0 0
        %1489 = vmatmul.mubr.bf16.gmra.mrb[0].mxu0 %v577
        %v1490 = vpop.f32.mrb[0].mxu0
        %v1491 = vadd.f32 0.0, %v1490
        %v1492 = vpop.f32.mrb[0].mxu0
        %v1493 = vpop.f32.mrb[0].mxu0
        %v1494 = vadd.f32 0.0, %v1493
        %v1495 = vpop.f32.mrb[0].mxu0
        %1496 = vdwg.mxu0
        %v1513 = vunpack.c.l.b16 %v900
        %v1514 = vunpack.c.l.b16 %v901
        %v1515 = vunpack.c.l.b16 %v902
        %v1516 = vunpack.c.l.b16 %v903
        %v1517 = vunpack.c.l.b16 %v904
        %v1518 = vunpack.c.l.b16 %v905
        %v1519 = vunpack.c.l.b16 %v906
        %v1520 = vunpack.c.l.b16 %v907
        %v1521 = vunpack.c.l.b16 %v908
        %v1522 = vunpack.c.l.b16 %v909
        %v1523 = vunpack.c.l.b16 %v910
        %v1524 = vunpack.c.l.b16 %v911
        %v1525 = vunpack.c.l.b16 %v912
        %v1526 = vunpack.c.l.b16 %v913
        %v1527 = vunpack.c.l.b16 %v914
        %v1528 = vunpack.c.l.b16 %v915
        %v1529 = vpack.c.b16 %v1514, %v1513
        %v1530 = vpack.c.b16 %v1516, %v1515
        %v1531 = vpack.c.b16 %v1518, %v1517
        %v1532 = vpack.c.b16 %v1520, %v1519
        %v1533 = vpack.c.b16 %v1522, %v1521
        %v1534 = vpack.c.b16 %v1524, %v1523
        %v1535 = vpack.c.b16 %v1526, %v1525
        %v1536 = vpack.c.b16 %v1528, %v1527
        %1545 = vmatprep.subr.bf16.mxu0 0
        %1546 = vmatpush1.bf16.msra.mxu0 %v1529
        %1547 = vmatprep.subr.bf16.mxu0 0
        %1548 = vmatpush1.bf16.msra.mxu0 %v1530
        %1549 = vmatprep.subr.bf16.mxu0 0
        %1550 = vmatpush1.bf16.msra.mxu0 %v1531
        %1551 = vmatprep.subr.bf16.mxu0 0
        %1552 = vmatpush1.bf16.msra.mxu0 %v1532
        %1553 = vmatprep.subr.bf16.mxu0 0
        %1554 = vmatpush1.bf16.msra.mxu0 %v1533
        %1555 = vmatprep.subr.bf16.mxu0 0
        %1556 = vmatpush1.bf16.msra.mxu0 %v1534
        %1557 = vmatprep.subr.bf16.mxu0 0
        %1558 = vmatpush1.bf16.msra.mxu0 %v1535
        %1559 = vmatprep.subr.bf16.mxu0 0
        %1560 = vmatpush1.bf16.msra.mxu0 %v1536
        %1561 = vmatprep.subr.bf16.mxu0 0
        %1562 = vmatpush1.bf16.msra.mxu0 0
        %1563 = vmatprep.subr.bf16.mxu0 0
        %1564 = vmatpush1.bf16.msra.mxu0 0
        %1565 = vmatprep.subr.bf16.mxu0 0
        %1566 = vmatpush1.bf16.msra.mxu0 0
        %1567 = vmatprep.subr.bf16.mxu0 0
        %1568 = vmatpush1.bf16.msra.mxu0 0
        %1569 = vmatprep.subr.bf16.mxu0 0
        %1570 = vmatpush1.bf16.msra.mxu0 0
        %1571 = vmatprep.subr.bf16.mxu0 0
        %1572 = vmatpush1.bf16.msra.mxu0 0
        %1573 = vmatprep.subr.bf16.mxu0 0
        %1574 = vmatpush1.bf16.msra.mxu0 0
        %1575 = vmatprep.subr.bf16.mxu0 0
        %1576 = vmatpush1.bf16.msra.mxu0 0
        %1577 = vmatprep.mubr.bf16.mxu0 0
        %1578 = vmatmul.mubr.bf16.gmra.mrb[0].mxu0 %v574
        %v1579 = vpop.f32.mrb[0].mxu0
        %v1580 = vadd.f32 0.0, %v1579
        %v1581 = vpop.f32.mrb[0].mxu0
        %v1582 = vpop.f32.mrb[0].mxu0
        %v1583 = vadd.f32 0.0, %v1582
        %v1584 = vpop.f32.mrb[0].mxu0
        %1585 = vmatprep.mubr.bf16.mxu0 0
        %1586 = vmatmul.mubr.bf16.gmra.mrb[0].mxu0 %v575
        %v1587 = vpop.f32.mrb[0].mxu0
        %v1588 = vadd.f32 0.0, %v1587
        %v1589 = vpop.f32.mrb[0].mxu0
        %v1590 = vpop.f32.mrb[0].mxu0
        %v1591 = vadd.f32 0.0, %v1590
        %v1592 = vpop.f32.mrb[0].mxu0
        %1593 = vmatprep.mubr.bf16.mxu0 0
        %1594 = vmatmul.mubr.bf16.gmra.mrb[0].mxu0 %v576
        %v1595 = vpop.f32.mrb[0].mxu0
        %v1596 = vadd.f32 0.0, %v1595
        %v1597 = vpop.f32.mrb[0].mxu0
        %v1598 = vpop.f32.mrb[0].mxu0
        %v1599 = vadd.f32 0.0, %v1598
        %v1600 = vpop.f32.mrb[0].mxu0
        %1601 = vmatprep.mubr.bf16.mxu0 0
        %1602 = vmatmul.mubr.bf16.gmra.mrb[0].mxu0 %v577
        %v1603 = vpop.f32.mrb[0].mxu0
        %v1604 = vadd.f32 0.0, %v1603
        %v1605 = vpop.f32.mrb[0].mxu0
        %v1606 = vpop.f32.mrb[0].mxu0
        %v1607 = vadd.f32 0.0, %v1606
        %v1608 = vpop.f32.mrb[0].mxu0
        %1609 = vdwg.mxu0
        %v1626 = vunpack.c.l.b16 %v916
        %v1627 = vunpack.c.l.b16 %v917
        %v1628 = vunpack.c.l.b16 %v918
        %v1629 = vunpack.c.l.b16 %v919
        %v1630 = vunpack.c.l.b16 %v920
        %v1631 = vunpack.c.l.b16 %v921
        %v1632 = vunpack.c.l.b16 %v922
        %v1633 = vunpack.c.l.b16 %v923
        %v1634 = vunpack.c.l.b16 %v924
        %v1635 = vunpack.c.l.b16 %v925
        %v1636 = vunpack.c.l.b16 %v926
        %v1637 = vunpack.c.l.b16 %v927
        %v1638 = vunpack.c.l.b16 %v928
        %v1639 = vunpack.c.l.b16 %v929
        %v1640 = vunpack.c.l.b16 %v930
        %v1641 = vunpack.c.l.b16 %v931
        %v1642 = vpack.c.b16 %v1627, %v1626
        %v1643 = vpack.c.b16 %v1629, %v1628
        %v1644 = vpack.c.b16 %v1631, %v1630
        %v1645 = vpack.c.b16 %v1633, %v1632
        %v1646 = vpack.c.b16 %v1635, %v1634
        %v1647 = vpack.c.b16 %v1637, %v1636
        %v1648 = vpack.c.b16 %v1639, %v1638
        %v1649 = vpack.c.b16 %v1641, %v1640
        %1658 = vmatprep.subr.bf16.mxu0 0
        %1659 = vmatpush1.bf16.msra.mxu0 %v1642
        %1660 = vmatprep.subr.bf16.mxu0 0
        %1661 = vmatpush1.bf16.msra.mxu0 %v1643
        %1662 = vmatprep.subr.bf16.mxu0 0
        %1663 = vmatpush1.bf16.msra.mxu0 %v1644
        %1664 = vmatprep.subr.bf16.mxu0 0
        %1665 = vmatpush1.bf16.msra.mxu0 %v1645
        %1666 = vmatprep.subr.bf16.mxu0 0
        %1667 = vmatpush1.bf16.msra.mxu0 %v1646
        %1668 = vmatprep.subr.bf16.mxu0 0
        %1669 = vmatpush1.bf16.msra.mxu0 %v1647
        %1670 = vmatprep.subr.bf16.mxu0 0
        %1671 = vmatpush1.bf16.msra.mxu0 %v1648
        %1672 = vmatprep.subr.bf16.mxu0 0
        %1673 = vmatpush1.bf16.msra.mxu0 %v1649
        %1674 = vmatprep.subr.bf16.mxu0 0
        %1675 = vmatpush1.bf16.msra.mxu0 0
        %1676 = vmatprep.subr.bf16.mxu0 0
        %1677 = vmatpush1.bf16.msra.mxu0 0
        %1678 = vmatprep.subr.bf16.mxu0 0
        %1679 = vmatpush1.bf16.msra.mxu0 0
        %1680 = vmatprep.subr.bf16.mxu0 0
        %1681 = vmatpush1.bf16.msra.mxu0 0
        %1682 = vmatprep.subr.bf16.mxu0 0
        %1683 = vmatpush1.bf16.msra.mxu0 0
        %1684 = vmatprep.subr.bf16.mxu0 0
        %1685 = vmatpush1.bf16.msra.mxu0 0
        %1686 = vmatprep.subr.bf16.mxu0 0
        %1687 = vmatpush1.bf16.msra.mxu0 0
        %1688 = vmatprep.subr.bf16.mxu0 0
        %1689 = vmatpush1.bf16.msra.mxu0 0
        %1690 = vmatprep.mubr.bf16.mxu0 0
        %1691 = vmatmul.mubr.bf16.gmra.mrb[0].mxu0 %v574
        %v1692 = vpop.f32.mrb[0].mxu0
        %v1693 = vadd.f32 0.0, %v1692
        %v1694 = vpop.f32.mrb[0].mxu0
        %v1695 = vpop.f32.mrb[0].mxu0
        %v1696 = vadd.f32 0.0, %v1695
        %v1697 = vpop.f32.mrb[0].mxu0
        %1698 = vmatprep.mubr.bf16.mxu0 0
        %1699 = vmatmul.mubr.bf16.gmra.mrb[0].mxu0 %v575
        %v1700 = vpop.f32.mrb[0].mxu0
        %v1701 = vadd.f32 0.0, %v1700
        %v1702 = vpop.f32.mrb[0].mxu0
        %v1703 = vpop.f32.mrb[0].mxu0
        %v1704 = vadd.f32 0.0, %v1703
        %v1705 = vpop.f32.mrb[0].mxu0
        %1706 = vmatprep.mubr.bf16.mxu0 0
        %1707 = vmatmul.mubr.bf16.gmra.mrb[0].mxu0 %v576
        %v1708 = vpop.f32.mrb[0].mxu0
        %v1709 = vadd.f32 0.0, %v1708
        %v1710 = vpop.f32.mrb[0].mxu0
        %v1711 = vpop.f32.mrb[0].mxu0
        %v1712 = vadd.f32 0.0, %v1711
        %v1713 = vpop.f32.mrb[0].mxu0
        %1714 = vmatprep.mubr.bf16.mxu0 0
        %1715 = vmatmul.mubr.bf16.gmra.mrb[0].mxu0 %v577
        %v1716 = vpop.f32.mrb[0].mxu0
        %v1717 = vadd.f32 0.0, %v1716
        %v1718 = vpop.f32.mrb[0].mxu0
        %v1719 = vpop.f32.mrb[0].mxu0
        %v1720 = vadd.f32 0.0, %v1719
        %v1721 = vpop.f32.mrb[0].mxu0
        %1722 = vdwg.mxu0
        %v1739 = vunpack.c.l.b16 %v932
        %v1740 = vunpack.c.l.b16 %v933
        %v1741 = vunpack.c.l.b16 %v934
        %v1742 = vunpack.c.l.b16 %v935
        %v1743 = vunpack.c.l.b16 %v936
        %v1744 = vunpack.c.l.b16 %v937
        %v1745 = vunpack.c.l.b16 %v938
        %v1746 = vunpack.c.l.b16 %v939
        %v1747 = vunpack.c.l.b16 %v940
        %v1748 = vunpack.c.l.b16 %v941
        %v1749 = vunpack.c.l.b16 %v942
        %v1750 = vunpack.c.l.b16 %v943
        %v1751 = vunpack.c.l.b16 %v944
        %v1752 = vunpack.c.l.b16 %v945
        %v1753 = vunpack.c.l.b16 %v946
        %v1754 = vunpack.c.l.b16 %v947
        %v1755 = vpack.c.b16 %v1740, %v1739
        %v1756 = vpack.c.b16 %v1742, %v1741
        %v1757 = vpack.c.b16 %v1744, %v1743
        %v1758 = vpack.c.b16 %v1746, %v1745
        %v1759 = vpack.c.b16 %v1748, %v1747
        %v1760 = vpack.c.b16 %v1750, %v1749
        %v1761 = vpack.c.b16 %v1752, %v1751
        %v1762 = vpack.c.b16 %v1754, %v1753
        %1771 = vmatprep.subr.bf16.mxu0 0
        %1772 = vmatpush1.bf16.msra.mxu0 %v1755
        %1773 = vmatprep.subr.bf16.mxu0 0
        %1774 = vmatpush1.bf16.msra.mxu0 %v1756
        %1775 = vmatprep.subr.bf16.mxu0 0
        %1776 = vmatpush1.bf16.msra.mxu0 %v1757
        %1777 = vmatprep.subr.bf16.mxu0 0
        %1778 = vmatpush1.bf16.msra.mxu0 %v1758
        %1779 = vmatprep.subr.bf16.mxu0 0
        %1780 = vmatpush1.bf16.msra.mxu0 %v1759
        %1781 = vmatprep.subr.bf16.mxu0 0
        %1782 = vmatpush1.bf16.msra.mxu0 %v1760
        %1783 = vmatprep.subr.bf16.mxu0 0
        %1784 = vmatpush1.bf16.msra.mxu0 %v1761
        %1785 = vmatprep.subr.bf16.mxu0 0
        %1786 = vmatpush1.bf16.msra.mxu0 %v1762
        %1787 = vmatprep.subr.bf16.mxu0 0
        %1788 = vmatpush1.bf16.msra.mxu0 0
        %1789 = vmatprep.subr.bf16.mxu0 0
        %1790 = vmatpush1.bf16.msra.mxu0 0
        %1791 = vmatprep.subr.bf16.mxu0 0
        %1792 = vmatpush1.bf16.msra.mxu0 0
        %1793 = vmatprep.subr.bf16.mxu0 0
        %1794 = vmatpush1.bf16.msra.mxu0 0
        %1795 = vmatprep.subr.bf16.mxu0 0
        %1796 = vmatpush1.bf16.msra.mxu0 0
        %1797 = vmatprep.subr.bf16.mxu0 0
        %1798 = vmatpush1.bf16.msra.mxu0 0
        %1799 = vmatprep.subr.bf16.mxu0 0
        %1800 = vmatpush1.bf16.msra.mxu0 0
        %1801 = vmatprep.subr.bf16.mxu0 0
        %1802 = vmatpush1.bf16.msra.mxu0 0
        %1803 = vmatprep.mubr.bf16.mxu0 0
        %1804 = vmatmul.mubr.bf16.gmra.mrb[0].mxu0 %v574
        %v1805 = vpop.f32.mrb[0].mxu0
        %v1806 = vadd.f32 0.0, %v1805
        %v1807 = vpop.f32.mrb[0].mxu0
        %v1808 = vpop.f32.mrb[0].mxu0
        %v1809 = vadd.f32 0.0, %v1808
        %v1810 = vpop.f32.mrb[0].mxu0
        %1811 = vmatprep.mubr.bf16.mxu0 0
        %1812 = vmatmul.mubr.bf16.gmra.mrb[0].mxu0 %v575
        %v1813 = vpop.f32.mrb[0].mxu0
        %v1814 = vadd.f32 0.0, %v1813
        %v1815 = vpop.f32.mrb[0].mxu0
        %v1816 = vpop.f32.mrb[0].mxu0
        %v1817 = vadd.f32 0.0, %v1816
        %v1818 = vpop.f32.mrb[0].mxu0
        %1819 = vmatprep.mubr.bf16.mxu0 0
        %1820 = vmatmul.mubr.bf16.gmra.mrb[0].mxu0 %v576
        %v1821 = vpop.f32.mrb[0].mxu0
        %v1822 = vadd.f32 0.0, %v1821
        %v1823 = vpop.f32.mrb[0].mxu0
        %v1824 = vpop.f32.mrb[0].mxu0
        %v1825 = vadd.f32 0.0, %v1824
        %v1826 = vpop.f32.mrb[0].mxu0
        %1827 = vmatprep.mubr.bf16.mxu0 0
        %1828 = vmatmul.mubr.bf16.gmra.mrb[0].mxu0 %v577
        %v1829 = vpop.f32.mrb[0].mxu0
        %v1830 = vadd.f32 0.0, %v1829
        %v1831 = vpop.f32.mrb[0].mxu0
        %v1832 = vpop.f32.mrb[0].mxu0
        %v1833 = vadd.f32 0.0, %v1832
        %v1834 = vpop.f32.mrb[0].mxu0
        %1835 = vdwg.mxu0
        %v1852 = vunpack.c.l.b16 %v948
        %v1853 = vunpack.c.l.b16 %v949
        %v1854 = vunpack.c.l.b16 %v950
        %v1855 = vunpack.c.l.b16 %v951
        %v1856 = vunpack.c.l.b16 %v952
        %v1857 = vunpack.c.l.b16 %v953
        %v1858 = vunpack.c.l.b16 %v954
        %v1859 = vunpack.c.l.b16 %v955
        %v1860 = vunpack.c.l.b16 %v956
        %v1861 = vunpack.c.l.b16 %v957
        %v1862 = vunpack.c.l.b16 %v958
        %v1863 = vunpack.c.l.b16 %v959
        %v1864 = vunpack.c.l.b16 %v960
        %v1865 = vunpack.c.l.b16 %v961
        %v1866 = vunpack.c.l.b16 %v962
        %v1867 = vunpack.c.l.b16 %v963
        %v1868 = vpack.c.b16 %v1853, %v1852
        %v1869 = vpack.c.b16 %v1855, %v1854
        %v1870 = vpack.c.b16 %v1857, %v1856
        %v1871 = vpack.c.b16 %v1859, %v1858
        %v1872 = vpack.c.b16 %v1861, %v1860
        %v1873 = vpack.c.b16 %v1863, %v1862
        %v1874 = vpack.c.b16 %v1865, %v1864
        %v1875 = vpack.c.b16 %v1867, %v1866
        %1884 = vmatprep.subr.bf16.mxu0 0
        %1885 = vmatpush1.bf16.msra.mxu0 %v1868
        %1886 = vmatprep.subr.bf16.mxu0 0
        %1887 = vmatpush1.bf16.msra.mxu0 %v1869
        %1888 = vmatprep.subr.bf16.mxu0 0
        %1889 = vmatpush1.bf16.msra.mxu0 %v1870
        %1890 = vmatprep.subr.bf16.mxu0 0
        %1891 = vmatpush1.bf16.msra.mxu0 %v1871
        %1892 = vmatprep.subr.bf16.mxu0 0
        %1893 = vmatpush1.bf16.msra.mxu0 %v1872
        %1894 = vmatprep.subr.bf16.mxu0 0
        %1895 = vmatpush1.bf16.msra.mxu0 %v1873
        %1896 = vmatprep.subr.bf16.mxu0 0
        %1897 = vmatpush1.bf16.msra.mxu0 %v1874
        %1898 = vmatprep.subr.bf16.mxu0 0
        %1899 = vmatpush1.bf16.msra.mxu0 %v1875
        %1900 = vmatprep.subr.bf16.mxu0 0
        %1901 = vmatpush1.bf16.msra.mxu0 0
        %1902 = vmatprep.subr.bf16.mxu0 0
        %1903 = vmatpush1.bf16.msra.mxu0 0
        %1904 = vmatprep.subr.bf16.mxu0 0
        %1905 = vmatpush1.bf16.msra.mxu0 0
        %1906 = vmatprep.subr.bf16.mxu0 0
        %1907 = vmatpush1.bf16.msra.mxu0 0
        %1908 = vmatprep.subr.bf16.mxu0 0
        %1909 = vmatpush1.bf16.msra.mxu0 0
        %1910 = vmatprep.subr.bf16.mxu0 0
        %1911 = vmatpush1.bf16.msra.mxu0 0
        %1912 = vmatprep.subr.bf16.mxu0 0
        %1913 = vmatpush1.bf16.msra.mxu0 0
        %1914 = vmatprep.subr.bf16.mxu0 0
        %1915 = vmatpush1.bf16.msra.mxu0 0
        %1916 = vmatprep.mubr.bf16.mxu0 0
        %1917 = vmatmul.mubr.bf16.gmra.mrb[0].mxu0 %v574
        %v1918 = vpop.f32.mrb[0].mxu0
        %v1919 = vadd.f32 0.0, %v1918
        %v1920 = vpop.f32.mrb[0].mxu0
        %v1921 = vpop.f32.mrb[0].mxu0
        %v1922 = vadd.f32 0.0, %v1921
        %v1923 = vpop.f32.mrb[0].mxu0
        %1924 = vmatprep.mubr.bf16.mxu0 0
        %1925 = vmatmul.mubr.bf16.gmra.mrb[0].mxu0 %v575
        %v1926 = vpop.f32.mrb[0].mxu0
        %v1927 = vadd.f32 0.0, %v1926
        %v1928 = vpop.f32.mrb[0].mxu0
        %v1929 = vpop.f32.mrb[0].mxu0
        %v1930 = vadd.f32 0.0, %v1929
        %v1931 = vpop.f32.mrb[0].mxu0
        %1932 = vmatprep.mubr.bf16.mxu0 0
        %1933 = vmatmul.mubr.bf16.gmra.mrb[0].mxu0 %v576
        %v1934 = vpop.f32.mrb[0].mxu0
        %v1935 = vadd.f32 0.0, %v1934
        %v1936 = vpop.f32.mrb[0].mxu0
        %v1937 = vpop.f32.mrb[0].mxu0
        %v1938 = vadd.f32 0.0, %v1937
        %v1939 = vpop.f32.mrb[0].mxu0
        %1940 = vmatprep.mubr.bf16.mxu0 0
        %1941 = vmatmul.mubr.bf16.gmra.mrb[0].mxu0 %v577
        %v1942 = vpop.f32.mrb[0].mxu0
        %v1943 = vadd.f32 0.0, %v1942
        %v1944 = vpop.f32.mrb[0].mxu0
        %v1945 = vpop.f32.mrb[0].mxu0
        %v1946 = vadd.f32 0.0, %v1945
        %v1947 = vpop.f32.mrb[0].mxu0
        %1948 = vdwg.mxu0
        %v1965 = vunpack.c.l.b16 %v964
        %v1966 = vunpack.c.l.b16 %v965
        %v1967 = vunpack.c.l.b16 %v966
        %v1968 = vunpack.c.l.b16 %v967
        %v1969 = vunpack.c.l.b16 %v968
        %v1970 = vunpack.c.l.b16 %v969
        %v1971 = vunpack.c.l.b16 %v970
        %v1972 = vunpack.c.l.b16 %v971
        %v1973 = vunpack.c.l.b16 %v972
        %v1974 = vunpack.c.l.b16 %v973
        %v1975 = vunpack.c.l.b16 %v974
        %v1976 = vunpack.c.l.b16 %v975
        %v1977 = vunpack.c.l.b16 %v976
        %v1978 = vunpack.c.l.b16 %v977
        %v1979 = vunpack.c.l.b16 %v978
        %v1980 = vunpack.c.l.b16 %v979
        %v1981 = vpack.c.b16 %v1966, %v1965
        %v1982 = vpack.c.b16 %v1968, %v1967
        %v1983 = vpack.c.b16 %v1970, %v1969
        %v1984 = vpack.c.b16 %v1972, %v1971
        %v1985 = vpack.c.b16 %v1974, %v1973
        %v1986 = vpack.c.b16 %v1976, %v1975
        %v1987 = vpack.c.b16 %v1978, %v1977
        %v1988 = vpack.c.b16 %v1980, %v1979
        %1997 = vmatprep.subr.bf16.mxu0 0
        %1998 = vmatpush1.bf16.msra.mxu0 %v1981
        %1999 = vmatprep.subr.bf16.mxu0 0
        %2000 = vmatpush1.bf16.msra.mxu0 %v1982
        %2001 = vmatprep.subr.bf16.mxu0 0
        %2002 = vmatpush1.bf16.msra.mxu0 %v1983
        %2003 = vmatprep.subr.bf16.mxu0 0
        %2004 = vmatpush1.bf16.msra.mxu0 %v1984
        %2005 = vmatprep.subr.bf16.mxu0 0
        %2006 = vmatpush1.bf16.msra.mxu0 %v1985
        %2007 = vmatprep.subr.bf16.mxu0 0
        %2008 = vmatpush1.bf16.msra.mxu0 %v1986
        %2009 = vmatprep.subr.bf16.mxu0 0
        %2010 = vmatpush1.bf16.msra.mxu0 %v1987
        %2011 = vmatprep.subr.bf16.mxu0 0
        %2012 = vmatpush1.bf16.msra.mxu0 %v1988
        %2013 = vmatprep.subr.bf16.mxu0 0
        %2014 = vmatpush1.bf16.msra.mxu0 0
        %2015 = vmatprep.subr.bf16.mxu0 0
        %2016 = vmatpush1.bf16.msra.mxu0 0
        %2017 = vmatprep.subr.bf16.mxu0 0
        %2018 = vmatpush1.bf16.msra.mxu0 0
        %2019 = vmatprep.subr.bf16.mxu0 0
        %2020 = vmatpush1.bf16.msra.mxu0 0
        %2021 = vmatprep.subr.bf16.mxu0 0
        %2022 = vmatpush1.bf16.msra.mxu0 0
        %2023 = vmatprep.subr.bf16.mxu0 0
        %2024 = vmatpush1.bf16.msra.mxu0 0
        %2025 = vmatprep.subr.bf16.mxu0 0
        %2026 = vmatpush1.bf16.msra.mxu0 0
        %2027 = vmatprep.subr.bf16.mxu0 0
        %2028 = vmatpush1.bf16.msra.mxu0 0
        %2029 = vmatprep.mubr.bf16.mxu0 0
        %2030 = vmatmul.mubr.bf16.gmra.mrb[0].mxu0 %v574
        %v2031 = vpop.f32.mrb[0].mxu0
        %v2032 = vadd.f32 0.0, %v2031
        %v2033 = vpop.f32.mrb[0].mxu0
        %v2034 = vpop.f32.mrb[0].mxu0
        %v2035 = vadd.f32 0.0, %v2034
        %v2036 = vpop.f32.mrb[0].mxu0
        %2037 = vmatprep.mubr.bf16.mxu0 0
        %2038 = vmatmul.mubr.bf16.gmra.mrb[0].mxu0 %v575
        %v2039 = vpop.f32.mrb[0].mxu0
        %v2040 = vadd.f32 0.0, %v2039
        %v2041 = vpop.f32.mrb[0].mxu0
        %v2042 = vpop.f32.mrb[0].mxu0
        %v2043 = vadd.f32 0.0, %v2042
        %v2044 = vpop.f32.mrb[0].mxu0
        %2045 = vmatprep.mubr.bf16.mxu0 0
        %2046 = vmatmul.mubr.bf16.gmra.mrb[0].mxu0 %v576
        %v2047 = vpop.f32.mrb[0].mxu0
        %v2048 = vadd.f32 0.0, %v2047
        %v2049 = vpop.f32.mrb[0].mxu0
        %v2050 = vpop.f32.mrb[0].mxu0
        %v2051 = vadd.f32 0.0, %v2050
        %v2052 = vpop.f32.mrb[0].mxu0
        %2053 = vmatprep.mubr.bf16.mxu0 0
        %2054 = vmatmul.mubr.bf16.gmra.mrb[0].mxu0 %v577
        %v2055 = vpop.f32.mrb[0].mxu0
        %v2056 = vadd.f32 0.0, %v2055
        %v2057 = vpop.f32.mrb[0].mxu0
        %v2058 = vpop.f32.mrb[0].mxu0
        %v2059 = vadd.f32 0.0, %v2058
        %v2060 = vpop.f32.mrb[0].mxu0
        %2061 = vdwg.mxu0
        %v2078 = vunpack.c.l.b16 %v980
        %v2079 = vunpack.c.l.b16 %v981
        %v2080 = vunpack.c.l.b16 %v982
        %v2081 = vunpack.c.l.b16 %v983
        %v2082 = vunpack.c.l.b16 %v984
        %v2083 = vunpack.c.l.b16 %v985
        %v2084 = vunpack.c.l.b16 %v986
        %v2085 = vunpack.c.l.b16 %v987
        %v2086 = vunpack.c.l.b16 %v988
        %v2087 = vunpack.c.l.b16 %v989
        %v2088 = vunpack.c.l.b16 %v990
        %v2089 = vunpack.c.l.b16 %v991
        %v2090 = vunpack.c.l.b16 %v992
        %v2091 = vunpack.c.l.b16 %v993
        %v2092 = vunpack.c.l.b16 %v994
        %v2093 = vunpack.c.l.b16 %v995
        %v2094 = vpack.c.b16 %v2079, %v2078
        %v2095 = vpack.c.b16 %v2081, %v2080
        %v2096 = vpack.c.b16 %v2083, %v2082
        %v2097 = vpack.c.b16 %v2085, %v2084
        %v2098 = vpack.c.b16 %v2087, %v2086
        %v2099 = vpack.c.b16 %v2089, %v2088
        %v2100 = vpack.c.b16 %v2091, %v2090
        %v2101 = vpack.c.b16 %v2093, %v2092
        %2110 = vmatprep.subr.bf16.mxu0 0
        %2111 = vmatpush1.bf16.msra.mxu0 %v2094
        %2112 = vmatprep.subr.bf16.mxu0 0
        %2113 = vmatpush1.bf16.msra.mxu0 %v2095
        %2114 = vmatprep.subr.bf16.mxu0 0
        %2115 = vmatpush1.bf16.msra.mxu0 %v2096
        %2116 = vmatprep.subr.bf16.mxu0 0
        %2117 = vmatpush1.bf16.msra.mxu0 %v2097
        %2118 = vmatprep.subr.bf16.mxu0 0
        %2119 = vmatpush1.bf16.msra.mxu0 %v2098
        %2120 = vmatprep.subr.bf16.mxu0 0
        %2121 = vmatpush1.bf16.msra.mxu0 %v2099
        %2122 = vmatprep.subr.bf16.mxu0 0
        %2123 = vmatpush1.bf16.msra.mxu0 %v2100
        %2124 = vmatprep.subr.bf16.mxu0 0
        %2125 = vmatpush1.bf16.msra.mxu0 %v2101
        %2126 = vmatprep.subr.bf16.mxu0 0
        %2127 = vmatpush1.bf16.msra.mxu0 0
        %2128 = vmatprep.subr.bf16.mxu0 0
        %2129 = vmatpush1.bf16.msra.mxu0 0
        %2130 = vmatprep.subr.bf16.mxu0 0
        %2131 = vmatpush1.bf16.msra.mxu0 0
        %2132 = vmatprep.subr.bf16.mxu0 0
        %2133 = vmatpush1.bf16.msra.mxu0 0
        %2134 = vmatprep.subr.bf16.mxu0 0
        %2135 = vmatpush1.bf16.msra.mxu0 0
        %2136 = vmatprep.subr.bf16.mxu0 0
        %2137 = vmatpush1.bf16.msra.mxu0 0
        %2138 = vmatprep.subr.bf16.mxu0 0
        %2139 = vmatpush1.bf16.msra.mxu0 0
        %2140 = vmatprep.subr.bf16.mxu0 0
        %2141 = vmatpush1.bf16.msra.mxu0 0
        %2142 = vmatprep.mubr.bf16.mxu0 0
        %2143 = vmatmul.mubr.bf16.gmra.mrb[0].mxu0 %v574
        %v2144 = vpop.f32.mrb[0].mxu0
        %v2145 = vadd.f32 0.0, %v2144
        %v2146 = vpop.f32.mrb[0].mxu0
        %v2147 = vpop.f32.mrb[0].mxu0
        %v2148 = vadd.f32 0.0, %v2147
        %v2149 = vpop.f32.mrb[0].mxu0
        %2150 = vmatprep.mubr.bf16.mxu0 0
        %2151 = vmatmul.mubr.bf16.gmra.mrb[0].mxu0 %v575
        %v2152 = vpop.f32.mrb[0].mxu0
        %v2153 = vadd.f32 0.0, %v2152
        %v2154 = vpop.f32.mrb[0].mxu0
        %v2155 = vpop.f32.mrb[0].mxu0
        %v2156 = vadd.f32 0.0, %v2155
        %v2157 = vpop.f32.mrb[0].mxu0
        %2158 = vmatprep.mubr.bf16.mxu0 0
        %2159 = vmatmul.mubr.bf16.gmra.mrb[0].mxu0 %v576
        %v2160 = vpop.f32.mrb[0].mxu0
        %v2161 = vadd.f32 0.0, %v2160
        %v2162 = vpop.f32.mrb[0].mxu0
        %v2163 = vpop.f32.mrb[0].mxu0
        %v2164 = vadd.f32 0.0, %v2163
        %v2165 = vpop.f32.mrb[0].mxu0
        %2166 = vmatprep.mubr.bf16.mxu0 0
        %2167 = vmatmul.mubr.bf16.gmra.mrb[0].mxu0 %v577
        %v2168 = vpop.f32.mrb[0].mxu0
        %v2169 = vadd.f32 0.0, %v2168
        %v2170 = vpop.f32.mrb[0].mxu0
        %v2171 = vpop.f32.mrb[0].mxu0
        %v2172 = vadd.f32 0.0, %v2171
        %v2173 = vpop.f32.mrb[0].mxu0
        %2174 = vdwg.mxu0
        %v2191 = vunpack.c.l.b16 %v996
        %v2192 = vunpack.c.l.b16 %v997
        %v2193 = vunpack.c.l.b16 %v998
        %v2194 = vunpack.c.l.b16 %v999
        %v2195 = vunpack.c.l.b16 %v1000
        %v2196 = vunpack.c.l.b16 %v1001
        %v2197 = vunpack.c.l.b16 %v1002
        %v2198 = vunpack.c.l.b16 %v1003
        %v2199 = vunpack.c.l.b16 %v1004
        %v2200 = vunpack.c.l.b16 %v1005
        %v2201 = vunpack.c.l.b16 %v1006
        %v2202 = vunpack.c.l.b16 %v1007
        %v2203 = vunpack.c.l.b16 %v1008
        %v2204 = vunpack.c.l.b16 %v1009
        %v2205 = vunpack.c.l.b16 %v1010
        %v2206 = vunpack.c.l.b16 %v1011
        %v2207 = vpack.c.b16 %v2192, %v2191
        %v2208 = vpack.c.b16 %v2194, %v2193
        %v2209 = vpack.c.b16 %v2196, %v2195
        %v2210 = vpack.c.b16 %v2198, %v2197
        %v2211 = vpack.c.b16 %v2200, %v2199
        %v2212 = vpack.c.b16 %v2202, %v2201
        %v2213 = vpack.c.b16 %v2204, %v2203
        %v2214 = vpack.c.b16 %v2206, %v2205
        %2223 = vmatprep.subr.bf16.mxu0 0
        %2224 = vmatpush1.bf16.msra.mxu0 %v2207
        %2225 = vmatprep.subr.bf16.mxu0 0
        %2226 = vmatpush1.bf16.msra.mxu0 %v2208
        %2227 = vmatprep.subr.bf16.mxu0 0
        %2228 = vmatpush1.bf16.msra.mxu0 %v2209
        %2229 = vmatprep.subr.bf16.mxu0 0
        %2230 = vmatpush1.bf16.msra.mxu0 %v2210
        %2231 = vmatprep.subr.bf16.mxu0 0
        %2232 = vmatpush1.bf16.msra.mxu0 %v2211
        %2233 = vmatprep.subr.bf16.mxu0 0
        %2234 = vmatpush1.bf16.msra.mxu0 %v2212
        %2235 = vmatprep.subr.bf16.mxu0 0
        %2236 = vmatpush1.bf16.msra.mxu0 %v2213
        %2237 = vmatprep.subr.bf16.mxu0 0
        %2238 = vmatpush1.bf16.msra.mxu0 %v2214
        %2239 = vmatprep.subr.bf16.mxu0 0
        %2240 = vmatpush1.bf16.msra.mxu0 0
        %2241 = vmatprep.subr.bf16.mxu0 0
        %2242 = vmatpush1.bf16.msra.mxu0 0
        %2243 = vmatprep.subr.bf16.mxu0 0
        %2244 = vmatpush1.bf16.msra.mxu0 0
        %2245 = vmatprep.subr.bf16.mxu0 0
        %2246 = vmatpush1.bf16.msra.mxu0 0
        %2247 = vmatprep.subr.bf16.mxu0 0
        %2248 = vmatpush1.bf16.msra.mxu0 0
        %2249 = vmatprep.subr.bf16.mxu0 0
        %2250 = vmatpush1.bf16.msra.mxu0 0
        %2251 = vmatprep.subr.bf16.mxu0 0
        %2252 = vmatpush1.bf16.msra.mxu0 0
        %2253 = vmatprep.subr.bf16.mxu0 0
        %2254 = vmatpush1.bf16.msra.mxu0 0
        %2255 = vmatprep.mubr.bf16.mxu0 0
        %2256 = vmatmul.mubr.bf16.gmra.mrb[0].mxu0 %v574
        %v2257 = vpop.f32.mrb[0].mxu0
        %v2258 = vadd.f32 0.0, %v2257
        %v2259 = vpop.f32.mrb[0].mxu0
        %v2260 = vpop.f32.mrb[0].mxu0
        %v2261 = vadd.f32 0.0, %v2260
        %v2262 = vpop.f32.mrb[0].mxu0
        %2263 = vmatprep.mubr.bf16.mxu0 0
        %2264 = vmatmul.mubr.bf16.gmra.mrb[0].mxu0 %v575
        %v2265 = vpop.f32.mrb[0].mxu0
        %v2266 = vadd.f32 0.0, %v2265
        %v2267 = vpop.f32.mrb[0].mxu0
        %v2268 = vpop.f32.mrb[0].mxu0
        %v2269 = vadd.f32 0.0, %v2268
        %v2270 = vpop.f32.mrb[0].mxu0
        %2271 = vmatprep.mubr.bf16.mxu0 0
        %2272 = vmatmul.mubr.bf16.gmra.mrb[0].mxu0 %v576
        %v2273 = vpop.f32.mrb[0].mxu0
        %v2274 = vadd.f32 0.0, %v2273
        %v2275 = vpop.f32.mrb[0].mxu0
        %v2276 = vpop.f32.mrb[0].mxu0
        %v2277 = vadd.f32 0.0, %v2276
        %v2278 = vpop.f32.mrb[0].mxu0
        %2279 = vmatprep.mubr.bf16.mxu0 0
        %2280 = vmatmul.mubr.bf16.gmra.mrb[0].mxu0 %v577
        %v2281 = vpop.f32.mrb[0].mxu0
        %v2282 = vadd.f32 0.0, %v2281
        %v2283 = vpop.f32.mrb[0].mxu0
        %v2284 = vpop.f32.mrb[0].mxu0
        %v2285 = vadd.f32 0.0, %v2284
        %v2286 = vpop.f32.mrb[0].mxu0
        %2287 = vdwg.mxu0
        %v2304 = vunpack.c.l.b16 %v1012
        %v2305 = vunpack.c.l.b16 %v1013
        %v2306 = vunpack.c.l.b16 %v1014
        %v2307 = vunpack.c.l.b16 %v1015
        %v2308 = vunpack.c.l.b16 %v1016
        %v2309 = vunpack.c.l.b16 %v1017
        %v2310 = vunpack.c.l.b16 %v1018
        %v2311 = vunpack.c.l.b16 %v1019
        %v2312 = vunpack.c.l.b16 %v1020
        %v2313 = vunpack.c.l.b16 %v1021
        %v2314 = vunpack.c.l.b16 %v1022
        %v2315 = vunpack.c.l.b16 %v1023
        %v2316 = vunpack.c.l.b16 %v1024
        %v2317 = vunpack.c.l.b16 %v1025
        %v2318 = vunpack.c.l.b16 %v1026
        %v2319 = vunpack.c.l.b16 %v1027
        %v2320 = vpack.c.b16 %v2305, %v2304
        %v2321 = vpack.c.b16 %v2307, %v2306
        %v2322 = vpack.c.b16 %v2309, %v2308
        %v2323 = vpack.c.b16 %v2311, %v2310
        %v2324 = vpack.c.b16 %v2313, %v2312
        %v2325 = vpack.c.b16 %v2315, %v2314
        %v2326 = vpack.c.b16 %v2317, %v2316
        %v2327 = vpack.c.b16 %v2319, %v2318
        %2336 = vmatprep.subr.bf16.mxu0 0
        %2337 = vmatpush1.bf16.msra.mxu0 %v2320
        %2338 = vmatprep.subr.bf16.mxu0 0
        %2339 = vmatpush1.bf16.msra.mxu0 %v2321
        %2340 = vmatprep.subr.bf16.mxu0 0
        %2341 = vmatpush1.bf16.msra.mxu0 %v2322
        %2342 = vmatprep.subr.bf16.mxu0 0
        %2343 = vmatpush1.bf16.msra.mxu0 %v2323
        %2344 = vmatprep.subr.bf16.mxu0 0
        %2345 = vmatpush1.bf16.msra.mxu0 %v2324
        %2346 = vmatprep.subr.bf16.mxu0 0
        %2347 = vmatpush1.bf16.msra.mxu0 %v2325
        %2348 = vmatprep.subr.bf16.mxu0 0
        %2349 = vmatpush1.bf16.msra.mxu0 %v2326
        %2350 = vmatprep.subr.bf16.mxu0 0
        %2351 = vmatpush1.bf16.msra.mxu0 %v2327
        %2352 = vmatprep.subr.bf16.mxu0 0
        %2353 = vmatpush1.bf16.msra.mxu0 0
        %2354 = vmatprep.subr.bf16.mxu0 0
        %2355 = vmatpush1.bf16.msra.mxu0 0
        %2356 = vmatprep.subr.bf16.mxu0 0
        %2357 = vmatpush1.bf16.msra.mxu0 0
        %2358 = vmatprep.subr.bf16.mxu0 0
        %2359 = vmatpush1.bf16.msra.mxu0 0
        %2360 = vmatprep.subr.bf16.mxu0 0
        %2361 = vmatpush1.bf16.msra.mxu0 0
        %2362 = vmatprep.subr.bf16.mxu0 0
        %2363 = vmatpush1.bf16.msra.mxu0 0
        %2364 = vmatprep.subr.bf16.mxu0 0
        %2365 = vmatpush1.bf16.msra.mxu0 0
        %2366 = vmatprep.subr.bf16.mxu0 0
        %2367 = vmatpush1.bf16.msra.mxu0 0
        %2368 = vmatprep.mubr.bf16.mxu0 0
        %2369 = vmatmul.mubr.bf16.gmra.mrb[0].mxu0 %v574
        %v2370 = vpop.f32.mrb[0].mxu0
        %v2371 = vadd.f32 0.0, %v2370
        %v2372 = vpop.f32.mrb[0].mxu0
        %v2373 = vpop.f32.mrb[0].mxu0
        %v2374 = vadd.f32 0.0, %v2373
        %v2375 = vpop.f32.mrb[0].mxu0
        %2376 = vmatprep.mubr.bf16.mxu0 0
        %2377 = vmatmul.mubr.bf16.gmra.mrb[0].mxu0 %v575
        %v2378 = vpop.f32.mrb[0].mxu0
        %v2379 = vadd.f32 0.0, %v2378
        %v2380 = vpop.f32.mrb[0].mxu0
        %v2381 = vpop.f32.mrb[0].mxu0
        %v2382 = vadd.f32 0.0, %v2381
        %v2383 = vpop.f32.mrb[0].mxu0
        %2384 = vmatprep.mubr.bf16.mxu0 0
        %2385 = vmatmul.mubr.bf16.gmra.mrb[0].mxu0 %v576
        %v2386 = vpop.f32.mrb[0].mxu0
        %v2387 = vadd.f32 0.0, %v2386
        %v2388 = vpop.f32.mrb[0].mxu0
        %v2389 = vpop.f32.mrb[0].mxu0
        %v2390 = vadd.f32 0.0, %v2389
        %v2391 = vpop.f32.mrb[0].mxu0
        %2392 = vmatprep.mubr.bf16.mxu0 0
        %2393 = vmatmul.mubr.bf16.gmra.mrb[0].mxu0 %v577
        %v2394 = vpop.f32.mrb[0].mxu0
        %v2395 = vadd.f32 0.0, %v2394
        %v2396 = vpop.f32.mrb[0].mxu0
        %v2397 = vpop.f32.mrb[0].mxu0
        %v2398 = vadd.f32 0.0, %v2397
        %v2399 = vpop.f32.mrb[0].mxu0
        %2400 = vdwg.mxu0
        %v2401 = vpack.c.bf16 %v1131, %v1128
        %v2402 = vpack.c.bf16 %v1139, %v1136
        %v2403 = vpack.c.bf16 %v1147, %v1144
        %v2404 = vpack.c.bf16 %v1155, %v1152
        %v2405 = vpack.c.bf16 %v1244, %v1241
        %v2406 = vpack.c.bf16 %v1252, %v1249
        %v2407 = vpack.c.bf16 %v1260, %v1257
        %v2408 = vpack.c.bf16 %v1268, %v1265
        %v2409 = vpack.c.bf16 %v1357, %v1354
        %v2410 = vpack.c.bf16 %v1365, %v1362
        %v2411 = vpack.c.bf16 %v1373, %v1370
        %v2412 = vpack.c.bf16 %v1381, %v1378
        %v2413 = vpack.c.bf16 %v1470, %v1467
        %v2414 = vpack.c.bf16 %v1478, %v1475
        %v2415 = vpack.c.bf16 %v1486, %v1483
        %v2416 = vpack.c.bf16 %v1494, %v1491
        %v2417 = vpack.c.bf16 %v1583, %v1580
        %v2418 = vpack.c.bf16 %v1591, %v1588
        %v2419 = vpack.c.bf16 %v1599, %v1596
        %v2420 = vpack.c.bf16 %v1607, %v1604
        %v2421 = vpack.c.bf16 %v1696, %v1693
        %v2422 = vpack.c.bf16 %v1704, %v1701
        %v2423 = vpack.c.bf16 %v1712, %v1709
        %v2424 = vpack.c.bf16 %v1720, %v1717
        %v2425 = vpack.c.bf16 %v1809, %v1806
        %v2426 = vpack.c.bf16 %v1817, %v1814
        %v2427 = vpack.c.bf16 %v1825, %v1822
        %v2428 = vpack.c.bf16 %v1833, %v1830
        %v2429 = vpack.c.bf16 %v1922, %v1919
        %v2430 = vpack.c.bf16 %v1930, %v1927
        %v2431 = vpack.c.bf16 %v1938, %v1935
        %v2432 = vpack.c.bf16 %v1946, %v1943
        %vm2433 = vcmask 261120
        %v2435 = vsel %vm2433, %v2401, 0
        %v2438 = vsel %vm2433, %v2402, 0
        %v2441 = vsel %vm2433, %v2403, 0
        %v2444 = vsel %vm2433, %v2404, 0
        %v2447 = vsel %vm2433, %v2417, 0
        %v2450 = vsel %vm2433, %v2418, 0
        %v2453 = vsel %vm2433, %v2419, 0
        %v2456 = vsel %vm2433, %v2420, 0
        %2458 = vmatprep.subr.bf16.mxu0 0
        %2459 = vmatpush1.bf16.xpose.msra.mxu0 %v2447
        %2460 = vmatprep.subr.bf16.mxu0 0
        %2461 = vmatpush1.bf16.xpose.msra.mxu0 %v2450
        %2462 = vmatprep.subr.bf16.mxu0 0
        %2463 = vmatpush1.bf16.xpose.msra.mxu0 %v2453
        %2464 = vmatprep.subr.bf16.mxu0 0
        %2465 = vmatpush1.bf16.xpose.msra.mxu0 %v2456
        %2466 = vmatprep.subr.bf16.mxu0 0
        %2467 = vmatpush1.bf16.xpose.msra.mxu0 0
        %2468 = vmatprep.subr.bf16.mxu0 0
        %2469 = vmatpush1.bf16.xpose.msra.mxu0 0
        %2470 = vmatprep.subr.bf16.mxu0 0
        %2471 = vmatpush1.bf16.xpose.msra.mxu0 0
        %2472 = vmatprep.subr.bf16.mxu0 0
        %2473 = vmatpush1.bf16.xpose.msra.mxu0 0
        %2474 = vmatprep.subr.bf16.mxu0 0
        %2475 = vmatpush1.bf16.xpose.msra.mxu0 0
        %2476 = vmatprep.subr.bf16.mxu0 0
        %2477 = vmatpush1.bf16.xpose.msra.mxu0 0
        %2478 = vmatprep.subr.bf16.mxu0 0
        %2479 = vmatpush1.bf16.xpose.msra.mxu0 0
        %2480 = vmatprep.subr.bf16.mxu0 0
        %2481 = vmatpush1.bf16.xpose.msra.mxu0 0
        %2482 = vmatprep.subr.bf16.mxu0 0
        %2483 = vmatpush1.bf16.xpose.msra.mxu0 0
        %2484 = vmatprep.subr.bf16.mxu0 0
        %2485 = vmatpush1.bf16.xpose.msra.mxu0 0
        %2486 = vmatprep.subr.bf16.mxu0 0
        %2487 = vmatpush1.bf16.xpose.msra.mxu0 0
        %2488 = vmatprep.subr.bf16.mxu0 0
        %2489 = vmatpush1.bf16.xpose.msra.mxu0 0
        %2490 = vmatprep.mubr.bf16.mxu0 0
        %2491 = vmatmul.mubr.bf16.gmra.mrb[0].mxu0 %v2435
        %v2492 = vpop.f32.mrb[0].mxu0
        %v2493 = vadd.f32 0.0, %v2492
        %v2494 = vpop.f32.mrb[0].mxu0
        %v2495 = vpop.f32.mrb[0].mxu0
        %v2496 = vadd.f32 0.0, %v2495
        %v2497 = vpop.f32.mrb[0].mxu0
        %2498 = vmatprep.mubr.bf16.mxu0 0
        %2499 = vmatmul.mubr.bf16.gmra.mrb[0].mxu0 %v2438
        %v2500 = vpop.f32.mrb[0].mxu0
        %v2501 = vadd.f32 0.0, %v2500
        %v2502 = vpop.f32.mrb[0].mxu0
        %v2503 = vpop.f32.mrb[0].mxu0
        %v2504 = vadd.f32 0.0, %v2503
        %v2505 = vpop.f32.mrb[0].mxu0
        %2506 = vmatprep.mubr.bf16.mxu0 0
        %2507 = vmatmul.mubr.bf16.gmra.mrb[0].mxu0 %v2441
        %v2508 = vpop.f32.mrb[0].mxu0
        %v2509 = vadd.f32 0.0, %v2508
        %v2510 = vpop.f32.mrb[0].mxu0
        %v2511 = vpop.f32.mrb[0].mxu0
        %v2512 = vadd.f32 0.0, %v2511
        %v2513 = vpop.f32.mrb[0].mxu0
        %2514 = vmatprep.mubr.bf16.mxu0 0
        %2515 = vmatmul.mubr.bf16.gmra.mrb[0].mxu0 %v2444
        %v2516 = vpop.f32.mrb[0].mxu0
        %v2517 = vadd.f32 0.0, %v2516
        %v2518 = vpop.f32.mrb[0].mxu0
        %v2519 = vpop.f32.mrb[0].mxu0
        %v2520 = vadd.f32 0.0, %v2519
        %v2521 = vpop.f32.mrb[0].mxu0
        %2522 = vdwg.mxu0
        %v2524 = vsel %vm2433, %v2405, 0
        %v2527 = vsel %vm2433, %v2406, 0
        %v2530 = vsel %vm2433, %v2407, 0
        %v2533 = vsel %vm2433, %v2408, 0
        %v2536 = vsel %vm2433, %v2421, 0
        %v2539 = vsel %vm2433, %v2422, 0
        %v2542 = vsel %vm2433, %v2423, 0
        %v2545 = vsel %vm2433, %v2424, 0
        %2547 = vmatprep.subr.bf16.mxu0 0
        %2548 = vmatpush1.bf16.xpose.msra.mxu0 %v2536
        %2549 = vmatprep.subr.bf16.mxu0 0
        %2550 = vmatpush1.bf16.xpose.msra.mxu0 %v2539
        %2551 = vmatprep.subr.bf16.mxu0 0
        %2552 = vmatpush1.bf16.xpose.msra.mxu0 %v2542
        %2553 = vmatprep.subr.bf16.mxu0 0
        %2554 = vmatpush1.bf16.xpose.msra.mxu0 %v2545
        %2555 = vmatprep.subr.bf16.mxu0 0
        %2556 = vmatpush1.bf16.xpose.msra.mxu0 0
        %2557 = vmatprep.subr.bf16.mxu0 0
        %2558 = vmatpush1.bf16.xpose.msra.mxu0 0
        %2559 = vmatprep.subr.bf16.mxu0 0
        %2560 = vmatpush1.bf16.xpose.msra.mxu0 0
        %2561 = vmatprep.subr.bf16.mxu0 0
        %2562 = vmatpush1.bf16.xpose.msra.mxu0 0
        %2563 = vmatprep.subr.bf16.mxu0 0
        %2564 = vmatpush1.bf16.xpose.msra.mxu0 0
        %2565 = vmatprep.subr.bf16.mxu0 0
        %2566 = vmatpush1.bf16.xpose.msra.mxu0 0
        %2567 = vmatprep.subr.bf16.mxu0 0
        %2568 = vmatpush1.bf16.xpose.msra.mxu0 0
        %2569 = vmatprep.subr.bf16.mxu0 0
        %2570 = vmatpush1.bf16.xpose.msra.mxu0 0
        %2571 = vmatprep.subr.bf16.mxu0 0
        %2572 = vmatpush1.bf16.xpose.msra.mxu0 0
        %2573 = vmatprep.subr.bf16.mxu0 0
        %2574 = vmatpush1.bf16.xpose.msra.mxu0 0
        %2575 = vmatprep.subr.bf16.mxu0 0
        %2576 = vmatpush1.bf16.xpose.msra.mxu0 0
        %2577 = vmatprep.subr.bf16.mxu0 0
        %2578 = vmatpush1.bf16.xpose.msra.mxu0 0
        %2579 = vmatprep.mubr.bf16.mxu0 0
        %2580 = vmatmul.mubr.bf16.gmra.mrb[0].mxu0 %v2524
        %v2581 = vpop.f32.mrb[0].mxu0
        %v2582 = vadd.f32 0.0, %v2581
        %v2583 = vpop.f32.mrb[0].mxu0
        %v2584 = vpop.f32.mrb[0].mxu0
        %v2585 = vadd.f32 0.0, %v2584
        %v2586 = vpop.f32.mrb[0].mxu0
        %2587 = vmatprep.mubr.bf16.mxu0 0
        %2588 = vmatmul.mubr.bf16.gmra.mrb[0].mxu0 %v2527
        %v2589 = vpop.f32.mrb[0].mxu0
        %v2590 = vadd.f32 0.0, %v2589
        %v2591 = vpop.f32.mrb[0].mxu0
        %v2592 = vpop.f32.mrb[0].mxu0
        %v2593 = vadd.f32 0.0, %v2592
        %v2594 = vpop.f32.mrb[0].mxu0
        %2595 = vmatprep.mubr.bf16.mxu0 0
        %2596 = vmatmul.mubr.bf16.gmra.mrb[0].mxu0 %v2530
        %v2597 = vpop.f32.mrb[0].mxu0
        %v2598 = vadd.f32 0.0, %v2597
        %v2599 = vpop.f32.mrb[0].mxu0
        %v2600 = vpop.f32.mrb[0].mxu0
        %v2601 = vadd.f32 0.0, %v2600
        %v2602 = vpop.f32.mrb[0].mxu0
        %2603 = vmatprep.mubr.bf16.mxu0 0
        %2604 = vmatmul.mubr.bf16.gmra.mrb[0].mxu0 %v2533
        %v2605 = vpop.f32.mrb[0].mxu0
        %v2606 = vadd.f32 0.0, %v2605
        %v2607 = vpop.f32.mrb[0].mxu0
        %v2608 = vpop.f32.mrb[0].mxu0
        %v2609 = vadd.f32 0.0, %v2608
        %v2610 = vpop.f32.mrb[0].mxu0
        %2611 = vdwg.mxu0
        %v2613 = vsel %vm2433, %v2409, 0
        %v2616 = vsel %vm2433, %v2410, 0
        %v2619 = vsel %vm2433, %v2411, 0
        %v2622 = vsel %vm2433, %v2412, 0
        %v2625 = vsel %vm2433, %v2425, 0
        %v2628 = vsel %vm2433, %v2426, 0
        %v2631 = vsel %vm2433, %v2427, 0
        %v2634 = vsel %vm2433, %v2428, 0
        %2636 = vmatprep.subr.bf16.mxu0 0
        %2637 = vmatpush1.bf16.xpose.msra.mxu0 %v2625
        %2638 = vmatprep.subr.bf16.mxu0 0
        %2639 = vmatpush1.bf16.xpose.msra.mxu0 %v2628
        %2640 = vmatprep.subr.bf16.mxu0 0
        %2641 = vmatpush1.bf16.xpose.msra.mxu0 %v2631
        %2642 = vmatprep.subr.bf16.mxu0 0
        %2643 = vmatpush1.bf16.xpose.msra.mxu0 %v2634
        %2644 = vmatprep.subr.bf16.mxu0 0
        %2645 = vmatpush1.bf16.xpose.msra.mxu0 0
        %2646 = vmatprep.subr.bf16.mxu0 0
        %2647 = vmatpush1.bf16.xpose.msra.mxu0 0
        %2648 = vmatprep.subr.bf16.mxu0 0
        %2649 = vmatpush1.bf16.xpose.msra.mxu0 0
        %2650 = vmatprep.subr.bf16.mxu0 0
        %2651 = vmatpush1.bf16.xpose.msra.mxu0 0
        %2652 = vmatprep.subr.bf16.mxu0 0
        %2653 = vmatpush1.bf16.xpose.msra.mxu0 0
        %2654 = vmatprep.subr.bf16.mxu0 0
        %2655 = vmatpush1.bf16.xpose.msra.mxu0 0
        %2656 = vmatprep.subr.bf16.mxu0 0
        %2657 = vmatpush1.bf16.xpose.msra.mxu0 0
        %2658 = vmatprep.subr.bf16.mxu0 0
        %2659 = vmatpush1.bf16.xpose.msra.mxu0 0
        %2660 = vmatprep.subr.bf16.mxu0 0
        %2661 = vmatpush1.bf16.xpose.msra.mxu0 0
        %2662 = vmatprep.subr.bf16.mxu0 0
        %2663 = vmatpush1.bf16.xpose.msra.mxu0 0
        %2664 = vmatprep.subr.bf16.mxu0 0
        %2665 = vmatpush1.bf16.xpose.msra.mxu0 0
        %2666 = vmatprep.subr.bf16.mxu0 0
        %2667 = vmatpush1.bf16.xpose.msra.mxu0 0
        %2668 = vmatprep.mubr.bf16.mxu0 0
        %2669 = vmatmul.mubr.bf16.gmra.mrb[0].mxu0 %v2613
        %v2670 = vpop.f32.mrb[0].mxu0
        %v2671 = vadd.f32 0.0, %v2670
        %v2672 = vpop.f32.mrb[0].mxu0
        %v2673 = vpop.f32.mrb[0].mxu0
        %v2674 = vadd.f32 0.0, %v2673
        %v2675 = vpop.f32.mrb[0].mxu0
        %2676 = vmatprep.mubr.bf16.mxu0 0
        %2677 = vmatmul.mubr.bf16.gmra.mrb[0].mxu0 %v2616
        %v2678 = vpop.f32.mrb[0].mxu0
        %v2679 = vadd.f32 0.0, %v2678
        %v2680 = vpop.f32.mrb[0].mxu0
        %v2681 = vpop.f32.mrb[0].mxu0
        %v2682 = vadd.f32 0.0, %v2681
        %v2683 = vpop.f32.mrb[0].mxu0
        %2684 = vmatprep.mubr.bf16.mxu0 0
        %2685 = vmatmul.mubr.bf16.gmra.mrb[0].mxu0 %v2619
        %v2686 = vpop.f32.mrb[0].mxu0
        %v2687 = vadd.f32 0.0, %v2686
        %v2688 = vpop.f32.mrb[0].mxu0
        %v2689 = vpop.f32.mrb[0].mxu0
        %v2690 = vadd.f32 0.0, %v2689
        %v2691 = vpop.f32.mrb[0].mxu0
        %2692 = vmatprep.mubr.bf16.mxu0 0
        %2693 = vmatmul.mubr.bf16.gmra.mrb[0].mxu0 %v2622
        %v2694 = vpop.f32.mrb[0].mxu0
        %v2695 = vadd.f32 0.0, %v2694
        %v2696 = vpop.f32.mrb[0].mxu0
        %v2697 = vpop.f32.mrb[0].mxu0
        %v2698 = vadd.f32 0.0, %v2697
        %v2699 = vpop.f32.mrb[0].mxu0
        %2700 = vdwg.mxu0
        %v2702 = vsel %vm2433, %v2413, 0
        %v2705 = vsel %vm2433, %v2414, 0
        %v2708 = vsel %vm2433, %v2415, 0
        %v2711 = vsel %vm2433, %v2416, 0
        %v2714 = vsel %vm2433, %v2429, 0
        %v2717 = vsel %vm2433, %v2430, 0
        %v2720 = vsel %vm2433, %v2431, 0
        %v2723 = vsel %vm2433, %v2432, 0
        %2725 = vmatprep.subr.bf16.mxu0 0
        %2726 = vmatpush1.bf16.xpose.msra.mxu0 %v2714
        %2727 = vmatprep.subr.bf16.mxu0 0
        %2728 = vmatpush1.bf16.xpose.msra.mxu0 %v2717
        %2729 = vmatprep.subr.bf16.mxu0 0
        %2730 = vmatpush1.bf16.xpose.msra.mxu0 %v2720
        %2731 = vmatprep.subr.bf16.mxu0 0
        %2732 = vmatpush1.bf16.xpose.msra.mxu0 %v2723
        %2733 = vmatprep.subr.bf16.mxu0 0
        %2734 = vmatpush1.bf16.xpose.msra.mxu0 0
        %2735 = vmatprep.subr.bf16.mxu0 0
        %2736 = vmatpush1.bf16.xpose.msra.mxu0 0
        %2737 = vmatprep.subr.bf16.mxu0 0
        %2738 = vmatpush1.bf16.xpose.msra.mxu0 0
        %2739 = vmatprep.subr.bf16.mxu0 0
        %2740 = vmatpush1.bf16.xpose.msra.mxu0 0
        %2741 = vmatprep.subr.bf16.mxu0 0
        %2742 = vmatpush1.bf16.xpose.msra.mxu0 0
        %2743 = vmatprep.subr.bf16.mxu0 0
        %2744 = vmatpush1.bf16.xpose.msra.mxu0 0
        %2745 = vmatprep.subr.bf16.mxu0 0
        %2746 = vmatpush1.bf16.xpose.msra.mxu0 0
        %2747 = vmatprep.subr.bf16.mxu0 0
        %2748 = vmatpush1.bf16.xpose.msra.mxu0 0
        %2749 = vmatprep.subr.bf16.mxu0 0
        %2750 = vmatpush1.bf16.xpose.msra.mxu0 0
        %2751 = vmatprep.subr.bf16.mxu0 0
        %2752 = vmatpush1.bf16.xpose.msra.mxu0 0
        %2753 = vmatprep.subr.bf16.mxu0 0
        %2754 = vmatpush1.bf16.xpose.msra.mxu0 0
        %2755 = vmatprep.subr.bf16.mxu0 0
        %2756 = vmatpush1.bf16.xpose.msra.mxu0 0
        %2757 = vmatprep.mubr.bf16.mxu0 0
        %2758 = vmatmul.mubr.bf16.gmra.mrb[0].mxu0 %v2702
        %v2759 = vpop.f32.mrb[0].mxu0
        %v2760 = vadd.f32 0.0, %v2759
        %v2761 = vpop.f32.mrb[0].mxu0
        %v2762 = vpop.f32.mrb[0].mxu0
        %v2763 = vadd.f32 0.0, %v2762
        %v2764 = vpop.f32.mrb[0].mxu0
        %2765 = vmatprep.mubr.bf16.mxu0 0
        %2766 = vmatmul.mubr.bf16.gmra.mrb[0].mxu0 %v2705
        %v2767 = vpop.f32.mrb[0].mxu0
        %v2768 = vadd.f32 0.0, %v2767
        %v2769 = vpop.f32.mrb[0].mxu0
        %v2770 = vpop.f32.mrb[0].mxu0
        %v2771 = vadd.f32 0.0, %v2770
        %v2772 = vpop.f32.mrb[0].mxu0
        %2773 = vmatprep.mubr.bf16.mxu0 0
        %2774 = vmatmul.mubr.bf16.gmra.mrb[0].mxu0 %v2708
        %v2775 = vpop.f32.mrb[0].mxu0
        %v2776 = vadd.f32 0.0, %v2775
        %v2777 = vpop.f32.mrb[0].mxu0
        %v2778 = vpop.f32.mrb[0].mxu0
        %v2779 = vadd.f32 0.0, %v2778
        %v2780 = vpop.f32.mrb[0].mxu0
        %2781 = vmatprep.mubr.bf16.mxu0 0
        %2782 = vmatmul.mubr.bf16.gmra.mrb[0].mxu0 %v2711
        %v2783 = vpop.f32.mrb[0].mxu0
        %v2784 = vadd.f32 0.0, %v2783
        %v2785 = vpop.f32.mrb[0].mxu0
        %v2786 = vpop.f32.mrb[0].mxu0
        %v2787 = vadd.f32 0.0, %v2786
        %v2788 = vpop.f32.mrb[0].mxu0
        %2789 = vdwg.mxu0
        %v2790 = vmul.f32 %v2493, 0.17677669
        %v2791 = vmul.f32 %v2496, 0.17677669
        %v2792 = vmul.f32 %v2501, 0.17677669
        %v2793 = vmul.f32 %v2504, 0.17677669
        %v2794 = vmul.f32 %v2509, 0.17677669
        %v2795 = vmul.f32 %v2512, 0.17677669
        %v2796 = vmul.f32 %v2517, 0.17677669
        %v2797 = vmul.f32 %v2520, 0.17677669
        %v2798 = vmul.f32 %v2582, 0.17677669
        %v2799 = vmul.f32 %v2585, 0.17677669
        %v2800 = vmul.f32 %v2590, 0.17677669
        %v2801 = vmul.f32 %v2593, 0.17677669
        %v2802 = vmul.f32 %v2598, 0.17677669
        %v2803 = vmul.f32 %v2601, 0.17677669
        %v2804 = vmul.f32 %v2606, 0.17677669
        %v2805 = vmul.f32 %v2609, 0.17677669
        %v2806 = vmul.f32 %v2671, 0.17677669
        %v2807 = vmul.f32 %v2674, 0.17677669
        %v2808 = vmul.f32 %v2679, 0.17677669
        %v2809 = vmul.f32 %v2682, 0.17677669
        %v2810 = vmul.f32 %v2687, 0.17677669
        %v2811 = vmul.f32 %v2690, 0.17677669
        %v2812 = vmul.f32 %v2695, 0.17677669
        %v2813 = vmul.f32 %v2698, 0.17677669
        %v2814 = vmul.f32 %v2760, 0.17677669
        %v2815 = vmul.f32 %v2763, 0.17677669
        %v2816 = vmul.f32 %v2768, 0.17677669
        %v2817 = vmul.f32 %v2771, 0.17677669
        %v2818 = vmul.f32 %v2776, 0.17677669
        %v2819 = vmul.f32 %v2779, 0.17677669
        %v2820 = vmul.f32 %v2784, 0.17677669
        %v2821 = vmul.f32 %v2787, 0.17677669
        %vm2822 = vcmask 523264
        %v2823 = vsel %vm2822, %v2790, -inf
        %2824 = vmax.xlane.f32.xlu0 %v2823
        %v2825 = vpop.xlane.xlu0 %2824
        %v2826 = vsel %vm2822, %v2791, -inf
        %2827 = vmax.xlane.f32.xlu0 %v2826
        %v2828 = vpop.xlane.xlu0 %2827
        %v2829 = vsel %vm2822, %v2792, -inf
        %2830 = vmax.xlane.f32.xlu0 %v2829
        %v2831 = vpop.xlane.xlu0 %2830
        %v2832 = vsel %vm2822, %v2793, -inf
        %2833 = vmax.xlane.f32.xlu0 %v2832
        %v2834 = vpop.xlane.xlu0 %2833
        %v2835 = vsel %vm2822, %v2794, -inf
        %2836 = vmax.xlane.f32.xlu0 %v2835
        %v2837 = vpop.xlane.xlu0 %2836
        %v2838 = vsel %vm2822, %v2795, -inf
        %2839 = vmax.xlane.f32.xlu0 %v2838
        %v2840 = vpop.xlane.xlu0 %2839
        %v2841 = vsel %vm2822, %v2796, -inf
        %2842 = vmax.xlane.f32.xlu0 %v2841
        %v2843 = vpop.xlane.xlu0 %2842
        %v2844 = vsel %vm2822, %v2797, -inf
        %2845 = vmax.xlane.f32.xlu0 %v2844
        %v2846 = vpop.xlane.xlu0 %2845
        %v2847 = vsel %vm2822, %v2798, -inf
        %2848 = vmax.xlane.f32.xlu0 %v2847
        %v2849 = vpop.xlane.xlu0 %2848
        %v2850 = vsel %vm2822, %v2799, -inf
        %2851 = vmax.xlane.f32.xlu0 %v2850
        %v2852 = vpop.xlane.xlu0 %2851
        %v2853 = vsel %vm2822, %v2800, -inf
        %2854 = vmax.xlane.f32.xlu0 %v2853
        %v2855 = vpop.xlane.xlu0 %2854
        %v2856 = vsel %vm2822, %v2801, -inf
        %2857 = vmax.xlane.f32.xlu0 %v2856
        %v2858 = vpop.xlane.xlu0 %2857
        %v2859 = vsel %vm2822, %v2802, -inf
        %2860 = vmax.xlane.f32.xlu0 %v2859
        %v2861 = vpop.xlane.xlu0 %2860
        %v2862 = vsel %vm2822, %v2803, -inf
        %2863 = vmax.xlane.f32.xlu0 %v2862
        %v2864 = vpop.xlane.xlu0 %2863
        %v2865 = vsel %vm2822, %v2804, -inf
        %2866 = vmax.xlane.f32.xlu0 %v2865
        %v2867 = vpop.xlane.xlu0 %2866
        %v2868 = vsel %vm2822, %v2805, -inf
        %2869 = vmax.xlane.f32.xlu0 %v2868
        %v2870 = vpop.xlane.xlu0 %2869
        %v2871 = vsel %vm2822, %v2806, -inf
        %2872 = vmax.xlane.f32.xlu0 %v2871
        %v2873 = vpop.xlane.xlu0 %2872
        %v2874 = vsel %vm2822, %v2807, -inf
        %2875 = vmax.xlane.f32.xlu0 %v2874
        %v2876 = vpop.xlane.xlu0 %2875
        %v2877 = vsel %vm2822, %v2808, -inf
        %2878 = vmax.xlane.f32.xlu0 %v2877
        %v2879 = vpop.xlane.xlu0 %2878
        %v2880 = vsel %vm2822, %v2809, -inf
        %2881 = vmax.xlane.f32.xlu0 %v2880
        %v2882 = vpop.xlane.xlu0 %2881
        %v2883 = vsel %vm2822, %v2810, -inf
        %2884 = vmax.xlane.f32.xlu0 %v2883
        %v2885 = vpop.xlane.xlu0 %2884
        %v2886 = vsel %vm2822, %v2811, -inf
        %2887 = vmax.xlane.f32.xlu0 %v2886
        %v2888 = vpop.xlane.xlu0 %2887
        %v2889 = vsel %vm2822, %v2812, -inf
        %2890 = vmax.xlane.f32.xlu0 %v2889
        %v2891 = vpop.xlane.xlu0 %2890
        %v2892 = vsel %vm2822, %v2813, -inf
        %2893 = vmax.xlane.f32.xlu0 %v2892
        %v2894 = vpop.xlane.xlu0 %2893
        %v2895 = vsel %vm2822, %v2814, -inf
        %2896 = vmax.xlane.f32.xlu0 %v2895
        %v2897 = vpop.xlane.xlu0 %2896
        %v2898 = vsel %vm2822, %v2815, -inf
        %2899 = vmax.xlane.f32.xlu0 %v2898
        %v2900 = vpop.xlane.xlu0 %2899
        %v2901 = vsel %vm2822, %v2816, -inf
        %2902 = vmax.xlane.f32.xlu0 %v2901
        %v2903 = vpop.xlane.xlu0 %2902
        %v2904 = vsel %vm2822, %v2817, -inf
        %2905 = vmax.xlane.f32.xlu0 %v2904
        %v2906 = vpop.xlane.xlu0 %2905
        %v2907 = vsel %vm2822, %v2818, -inf
        %2908 = vmax.xlane.f32.xlu0 %v2907
        %v2909 = vpop.xlane.xlu0 %2908
        %v2910 = vsel %vm2822, %v2819, -inf
        %2911 = vmax.xlane.f32.xlu0 %v2910
        %v2912 = vpop.xlane.xlu0 %2911
        %v2913 = vsel %vm2822, %v2820, -inf
        %2914 = vmax.xlane.f32.xlu0 %v2913
        %v2915 = vpop.xlane.xlu0 %2914
        %v2916 = vsel %vm2822, %v2821, -inf
        %2917 = vmax.xlane.f32.xlu0 %v2916
        %v2918 = vpop.xlane.xlu0 %2917
        %v2919 = vsub.f32 %v2790, %v2825
        %v2920 = vsub.f32 %v2791, %v2828
        %v2921 = vsub.f32 %v2792, %v2831
        %v2922 = vsub.f32 %v2793, %v2834
        %v2923 = vsub.f32 %v2794, %v2837
        %v2924 = vsub.f32 %v2795, %v2840
        %v2925 = vsub.f32 %v2796, %v2843
        %v2926 = vsub.f32 %v2797, %v2846
        %v2927 = vsub.f32 %v2798, %v2849
        %v2928 = vsub.f32 %v2799, %v2852
        %v2929 = vsub.f32 %v2800, %v2855
        %v2930 = vsub.f32 %v2801, %v2858
        %v2931 = vsub.f32 %v2802, %v2861
        %v2932 = vsub.f32 %v2803, %v2864
        %v2933 = vsub.f32 %v2804, %v2867
        %v2934 = vsub.f32 %v2805, %v2870
        %v2935 = vsub.f32 %v2806, %v2873
        %v2936 = vsub.f32 %v2807, %v2876
        %v2937 = vsub.f32 %v2808, %v2879
        %v2938 = vsub.f32 %v2809, %v2882
        %v2939 = vsub.f32 %v2810, %v2885
        %v2940 = vsub.f32 %v2811, %v2888
        %v2941 = vsub.f32 %v2812, %v2891
        %v2942 = vsub.f32 %v2813, %v2894
        %v2943 = vsub.f32 %v2814, %v2897
        %v2944 = vsub.f32 %v2815, %v2900
        %v2945 = vsub.f32 %v2816, %v2903
        %v2946 = vsub.f32 %v2817, %v2906
        %v2947 = vsub.f32 %v2818, %v2909
        %v2948 = vsub.f32 %v2819, %v2912
        %v2949 = vsub.f32 %v2820, %v2915
        %v2950 = vsub.f32 %v2821, %v2918
        %v2951 = vmul.f32 %v2919, 1.442695
        %v2952 = vpow.pop %v2951
        %v2953 = vmul.f32 %v2920, 1.442695
        %v2954 = vpow.pop %v2953
        %v2955 = vmul.f32 %v2921, 1.442695
        %v2956 = vpow.pop %v2955
        %v2957 = vmul.f32 %v2922, 1.442695
        %v2958 = vpow.pop %v2957
        %v2959 = vmul.f32 %v2923, 1.442695
        %v2960 = vpow.pop %v2959
        %v2961 = vmul.f32 %v2924, 1.442695
        %v2962 = vpow.pop %v2961
        %v2963 = vmul.f32 %v2925, 1.442695
        %v2964 = vpow.pop %v2963
        %v2965 = vmul.f32 %v2926, 1.442695
        %v2966 = vpow.pop %v2965
        %v2967 = vmul.f32 %v2927, 1.442695
        %v2968 = vpow.pop %v2967
        %v2969 = vmul.f32 %v2928, 1.442695
        %v2970 = vpow.pop %v2969
        %v2971 = vmul.f32 %v2929, 1.442695
        %v2972 = vpow.pop %v2971
        %v2973 = vmul.f32 %v2930, 1.442695
        %v2974 = vpow.pop %v2973
        %v2975 = vmul.f32 %v2931, 1.442695
        %v2976 = vpow.pop %v2975
        %v2977 = vmul.f32 %v2932, 1.442695
        %v2978 = vpow.pop %v2977
        %v2979 = vmul.f32 %v2933, 1.442695
        %v2980 = vpow.pop %v2979
        %v2981 = vmul.f32 %v2934, 1.442695
        %v2982 = vpow.pop %v2981
        %v2983 = vmul.f32 %v2935, 1.442695
        %v2984 = vpow.pop %v2983
        %v2985 = vmul.f32 %v2936, 1.442695
        %v2986 = vpow.pop %v2985
        %v2987 = vmul.f32 %v2937, 1.442695
        %v2988 = vpow.pop %v2987
        %v2989 = vmul.f32 %v2938, 1.442695
        %v2990 = vpow.pop %v2989
        %v2991 = vmul.f32 %v2939, 1.442695
        %v2992 = vpow.pop %v2991
        %v2993 = vmul.f32 %v2940, 1.442695
        %v2994 = vpow.pop %v2993
        %v2995 = vmul.f32 %v2941, 1.442695
        %v2996 = vpow.pop %v2995
        %v2997 = vmul.f32 %v2942, 1.442695
        %v2998 = vpow.pop %v2997
        %v2999 = vmul.f32 %v2943, 1.442695
        %v3000 = vpow.pop %v2999
        %v3001 = vmul.f32 %v2944, 1.442695
        %v3002 = vpow.pop %v3001
        %v3003 = vmul.f32 %v2945, 1.442695
        %v3004 = vpow.pop %v3003
        %v3005 = vmul.f32 %v2946, 1.442695
        %v3006 = vpow.pop %v3005
        %v3007 = vmul.f32 %v2947, 1.442695
        %v3008 = vpow.pop %v3007
        %v3009 = vmul.f32 %v2948, 1.442695
        %v3010 = vpow.pop %v3009
        %v3011 = vmul.f32 %v2949, 1.442695
        %v3012 = vpow.pop %v3011
        %v3013 = vmul.f32 %v2950, 1.442695
        %v3014 = vpow.pop %v3013
        %v3015 = vsel %vm2822, %v2952, 0.0
        %3016 = vadd.xlane.f32.xlu0 %v3015
        %v3017 = vpop.xlane.xlu0 %3016
        %v3018 = vsel %vm2822, %v2954, 0.0
        %3019 = vadd.xlane.f32.xlu0 %v3018
        %v3020 = vpop.xlane.xlu0 %3019
        %v3021 = vsel %vm2822, %v2956, 0.0
        %3022 = vadd.xlane.f32.xlu0 %v3021
        %v3023 = vpop.xlane.xlu0 %3022
        %v3024 = vsel %vm2822, %v2958, 0.0
        %3025 = vadd.xlane.f32.xlu0 %v3024
        %v3026 = vpop.xlane.xlu0 %3025
        %v3027 = vsel %vm2822, %v2960, 0.0
        %3028 = vadd.xlane.f32.xlu0 %v3027
        %v3029 = vpop.xlane.xlu0 %3028
        %v3030 = vsel %vm2822, %v2962, 0.0
        %3031 = vadd.xlane.f32.xlu0 %v3030
        %v3032 = vpop.xlane.xlu0 %3031
        %v3033 = vsel %vm2822, %v2964, 0.0
        %3034 = vadd.xlane.f32.xlu0 %v3033
        %v3035 = vpop.xlane.xlu0 %3034
        %v3036 = vsel %vm2822, %v2966, 0.0
        %3037 = vadd.xlane.f32.xlu0 %v3036
        %v3038 = vpop.xlane.xlu0 %3037
        %v3039 = vsel %vm2822, %v2968, 0.0
        %3040 = vadd.xlane.f32.xlu0 %v3039
        %v3041 = vpop.xlane.xlu0 %3040
        %v3042 = vsel %vm2822, %v2970, 0.0
        %3043 = vadd.xlane.f32.xlu0 %v3042
        %v3044 = vpop.xlane.xlu0 %3043
        %v3045 = vsel %vm2822, %v2972, 0.0
        %3046 = vadd.xlane.f32.xlu0 %v3045
        %v3047 = vpop.xlane.xlu0 %3046
        %v3048 = vsel %vm2822, %v2974, 0.0
        %3049 = vadd.xlane.f32.xlu0 %v3048
        %v3050 = vpop.xlane.xlu0 %3049
        %v3051 = vsel %vm2822, %v2976, 0.0
        %3052 = vadd.xlane.f32.xlu0 %v3051
        %v3053 = vpop.xlane.xlu0 %3052
        %v3054 = vsel %vm2822, %v2978, 0.0
        %3055 = vadd.xlane.f32.xlu0 %v3054
        %v3056 = vpop.xlane.xlu0 %3055
        %v3057 = vsel %vm2822, %v2980, 0.0
        %3058 = vadd.xlane.f32.xlu0 %v3057
        %v3059 = vpop.xlane.xlu0 %3058
        %v3060 = vsel %vm2822, %v2982, 0.0
        %3061 = vadd.xlane.f32.xlu0 %v3060
        %v3062 = vpop.xlane.xlu0 %3061
        %v3063 = vsel %vm2822, %v2984, 0.0
        %3064 = vadd.xlane.f32.xlu0 %v3063
        %v3065 = vpop.xlane.xlu0 %3064
        %v3066 = vsel %vm2822, %v2986, 0.0
        %3067 = vadd.xlane.f32.xlu0 %v3066
        %v3068 = vpop.xlane.xlu0 %3067
        %v3069 = vsel %vm2822, %v2988, 0.0
        %3070 = vadd.xlane.f32.xlu0 %v3069
        %v3071 = vpop.xlane.xlu0 %3070
        %v3072 = vsel %vm2822, %v2990, 0.0
        %3073 = vadd.xlane.f32.xlu0 %v3072
        %v3074 = vpop.xlane.xlu0 %3073
        %v3075 = vsel %vm2822, %v2992, 0.0
        %3076 = vadd.xlane.f32.xlu0 %v3075
        %v3077 = vpop.xlane.xlu0 %3076
        %v3078 = vsel %vm2822, %v2994, 0.0
        %3079 = vadd.xlane.f32.xlu0 %v3078
        %v3080 = vpop.xlane.xlu0 %3079
        %v3081 = vsel %vm2822, %v2996, 0.0
        %3082 = vadd.xlane.f32.xlu0 %v3081
        %v3083 = vpop.xlane.xlu0 %3082
        %v3084 = vsel %vm2822, %v2998, 0.0
        %3085 = vadd.xlane.f32.xlu0 %v3084
        %v3086 = vpop.xlane.xlu0 %3085
        %v3087 = vsel %vm2822, %v3000, 0.0
        %3088 = vadd.xlane.f32.xlu0 %v3087
        %v3089 = vpop.xlane.xlu0 %3088
        %v3090 = vsel %vm2822, %v3002, 0.0
        %3091 = vadd.xlane.f32.xlu0 %v3090
        %v3092 = vpop.xlane.xlu0 %3091
        %v3093 = vsel %vm2822, %v3004, 0.0
        %3094 = vadd.xlane.f32.xlu0 %v3093
        %v3095 = vpop.xlane.xlu0 %3094
        %v3096 = vsel %vm2822, %v3006, 0.0
        %3097 = vadd.xlane.f32.xlu0 %v3096
        %v3098 = vpop.xlane.xlu0 %3097
        %v3099 = vsel %vm2822, %v3008, 0.0
        %3100 = vadd.xlane.f32.xlu0 %v3099
        %v3101 = vpop.xlane.xlu0 %3100
        %v3102 = vsel %vm2822, %v3010, 0.0
        %3103 = vadd.xlane.f32.xlu0 %v3102
        %v3104 = vpop.xlane.xlu0 %3103
        %v3105 = vsel %vm2822, %v3012, 0.0
        %3106 = vadd.xlane.f32.xlu0 %v3105
        %v3107 = vpop.xlane.xlu0 %3106
        %v3108 = vsel %vm2822, %v3014, 0.0
        %3109 = vadd.xlane.f32.xlu0 %v3108
        %v3110 = vpop.xlane.xlu0 %3109
        %v3111 = vrcp.pop %v3017
        %v3112 = vrcp.pop %v3020
        %v3113 = vrcp.pop %v3023
        %v3114 = vrcp.pop %v3026
        %v3115 = vrcp.pop %v3029
        %v3116 = vrcp.pop %v3032
        %v3117 = vrcp.pop %v3035
        %v3118 = vrcp.pop %v3038
        %v3119 = vrcp.pop %v3041
        %v3120 = vrcp.pop %v3044
        %v3121 = vrcp.pop %v3047
        %v3122 = vrcp.pop %v3050
        %v3123 = vrcp.pop %v3053
        %v3124 = vrcp.pop %v3056
        %v3125 = vrcp.pop %v3059
        %v3126 = vrcp.pop %v3062
        %v3127 = vrcp.pop %v3065
        %v3128 = vrcp.pop %v3068
        %v3129 = vrcp.pop %v3071
        %v3130 = vrcp.pop %v3074
        %v3131 = vrcp.pop %v3077
        %v3132 = vrcp.pop %v3080
        %v3133 = vrcp.pop %v3083
        %v3134 = vrcp.pop %v3086
        %v3135 = vrcp.pop %v3089
        %v3136 = vrcp.pop %v3092
        %v3137 = vrcp.pop %v3095
        %v3138 = vrcp.pop %v3098
        %v3139 = vrcp.pop %v3101
        %v3140 = vrcp.pop %v3104
        %v3141 = vrcp.pop %v3107
        %v3142 = vrcp.pop %v3110
        %v3143 = vmul.f32 %v2952, %v3111
        %v3144 = vmul.f32 %v2954, %v3112
        %v3145 = vmul.f32 %v2956, %v3113
        %v3146 = vmul.f32 %v2958, %v3114
        %v3147 = vmul.f32 %v2960, %v3115
        %v3148 = vmul.f32 %v2962, %v3116
        %v3149 = vmul.f32 %v2964, %v3117
        %v3150 = vmul.f32 %v2966, %v3118
        %v3151 = vmul.f32 %v2968, %v3119
        %v3152 = vmul.f32 %v2970, %v3120
        %v3153 = vmul.f32 %v2972, %v3121
        %v3154 = vmul.f32 %v2974, %v3122
        %v3155 = vmul.f32 %v2976, %v3123
        %v3156 = vmul.f32 %v2978, %v3124
        %v3157 = vmul.f32 %v2980, %v3125
        %v3158 = vmul.f32 %v2982, %v3126
        %v3159 = vmul.f32 %v2984, %v3127
        %v3160 = vmul.f32 %v2986, %v3128
        %v3161 = vmul.f32 %v2988, %v3129
        %v3162 = vmul.f32 %v2990, %v3130
        %v3163 = vmul.f32 %v2992, %v3131
        %v3164 = vmul.f32 %v2994, %v3132
        %v3165 = vmul.f32 %v2996, %v3133
        %v3166 = vmul.f32 %v2998, %v3134
        %v3167 = vmul.f32 %v3000, %v3135
        %v3168 = vmul.f32 %v3002, %v3136
        %v3169 = vmul.f32 %v3004, %v3137
        %v3170 = vmul.f32 %v3006, %v3138
        %v3171 = vmul.f32 %v3008, %v3139
        %v3172 = vmul.f32 %v3010, %v3140
        %v3173 = vmul.f32 %v3012, %v3141
        %v3174 = vmul.f32 %v3014, %v3142
        %v3175 = vpack.c.bf16 %v3144, %v3143
        %v3176 = vpack.c.bf16 %v3146, %v3145
        %v3177 = vpack.c.bf16 %v3148, %v3147
        %v3178 = vpack.c.bf16 %v3150, %v3149
        %v3179 = vpack.c.bf16 %v3152, %v3151
        %v3180 = vpack.c.bf16 %v3154, %v3153
        %v3181 = vpack.c.bf16 %v3156, %v3155
        %v3182 = vpack.c.bf16 %v3158, %v3157
        %v3183 = vpack.c.bf16 %v3160, %v3159
        %v3184 = vpack.c.bf16 %v3162, %v3161
        %v3185 = vpack.c.bf16 %v3164, %v3163
        %v3186 = vpack.c.bf16 %v3166, %v3165
        %v3187 = vpack.c.bf16 %v3168, %v3167
        %v3188 = vpack.c.bf16 %v3170, %v3169
        %v3189 = vpack.c.bf16 %v3172, %v3171
        %v3190 = vpack.c.bf16 %v3174, %v3173
        %v3191 = vpack.c.bf16 %v2035, %v2032
        %v3192 = vpack.c.bf16 %v2043, %v2040
        %v3193 = vpack.c.bf16 %v2051, %v2048
        %v3194 = vpack.c.bf16 %v2059, %v2056
        %v3195 = vpack.c.bf16 %v2148, %v2145
        %v3196 = vpack.c.bf16 %v2156, %v2153
        %v3197 = vpack.c.bf16 %v2164, %v2161
        %v3198 = vpack.c.bf16 %v2172, %v2169
        %v3199 = vpack.c.bf16 %v2261, %v2258
        %v3200 = vpack.c.bf16 %v2269, %v2266
        %v3201 = vpack.c.bf16 %v2277, %v2274
        %v3202 = vpack.c.bf16 %v2285, %v2282
        %v3203 = vpack.c.bf16 %v2374, %v2371
        %v3204 = vpack.c.bf16 %v2382, %v2379
        %v3205 = vpack.c.bf16 %v2390, %v2387
        %v3206 = vpack.c.bf16 %v2398, %v2395
        %v3208 = vsel %vm2822, %v3175, 0
        %v3211 = vsel %vm2822, %v3176, 0
        %v3214 = vsel %vm2822, %v3177, 0
        %v3217 = vsel %vm2822, %v3178, 0
        %3219 = vmatprep.subr.bf16.mxu0 0
        %3220 = vmatpush1.bf16.msra.mxu0 %v3191
        %3221 = vmatprep.subr.bf16.mxu0 0
        %3222 = vmatpush1.bf16.msra.mxu0 %v3192
        %3223 = vmatprep.subr.bf16.mxu0 0
        %3224 = vmatpush1.bf16.msra.mxu0 %v3193
        %3225 = vmatprep.subr.bf16.mxu0 0
        %3226 = vmatpush1.bf16.msra.mxu0 %v3194
        %3227 = vmatprep.subr.bf16.mxu0 0
        %3228 = vmatpush1.bf16.msra.mxu0 0
        %3229 = vmatprep.subr.bf16.mxu0 0
        %3230 = vmatpush1.bf16.msra.mxu0 0
        %3231 = vmatprep.subr.bf16.mxu0 0
        %3232 = vmatpush1.bf16.msra.mxu0 0
        %3233 = vmatprep.subr.bf16.mxu0 0
        %3234 = vmatpush1.bf16.msra.mxu0 0
        %3235 = vmatprep.subr.bf16.mxu0 0
        %3236 = vmatpush1.bf16.msra.mxu0 0
        %3237 = vmatprep.subr.bf16.mxu0 0
        %3238 = vmatpush1.bf16.msra.mxu0 0
        %3239 = vmatprep.subr.bf16.mxu0 0
        %3240 = vmatpush1.bf16.msra.mxu0 0
        %3241 = vmatprep.subr.bf16.mxu0 0
        %3242 = vmatpush1.bf16.msra.mxu0 0
        %3243 = vmatprep.subr.bf16.mxu0 0
        %3244 = vmatpush1.bf16.msra.mxu0 0
        %3245 = vmatprep.subr.bf16.mxu0 0
        %3246 = vmatpush1.bf16.msra.mxu0 0
        %3247 = vmatprep.subr.bf16.mxu0 0
        %3248 = vmatpush1.bf16.msra.mxu0 0
        %3249 = vmatprep.subr.bf16.mxu0 0
        %3250 = vmatpush1.bf16.msra.mxu0 0
        %3251 = vmatprep.mubr.bf16.mxu0 0
        %3252 = vmatmul.mubr.bf16.gmra.mrb[0].mxu0 %v3208
        %v3253 = vpop.f32.mrb[0].mxu0
        %v3254 = vadd.f32 0.0, %v3253
        %v3255 = vpop.f32.mrb[0].mxu0
        %v3256 = vpop.f32.mrb[0].mxu0
        %v3257 = vadd.f32 0.0, %v3256
        %v3258 = vpop.f32.mrb[0].mxu0
        %3259 = vmatprep.mubr.bf16.mxu0 0
        %3260 = vmatmul.mubr.bf16.gmra.mrb[0].mxu0 %v3211
        %v3261 = vpop.f32.mrb[0].mxu0
        %v3262 = vadd.f32 0.0, %v3261
        %v3263 = vpop.f32.mrb[0].mxu0
        %v3264 = vpop.f32.mrb[0].mxu0
        %v3265 = vadd.f32 0.0, %v3264
        %v3266 = vpop.f32.mrb[0].mxu0
        %3267 = vmatprep.mubr.bf16.mxu0 0
        %3268 = vmatmul.mubr.bf16.gmra.mrb[0].mxu0 %v3214
        %v3269 = vpop.f32.mrb[0].mxu0
        %v3270 = vadd.f32 0.0, %v3269
        %v3271 = vpop.f32.mrb[0].mxu0
        %v3272 = vpop.f32.mrb[0].mxu0
        %v3273 = vadd.f32 0.0, %v3272
        %v3274 = vpop.f32.mrb[0].mxu0
        %3275 = vmatprep.mubr.bf16.mxu0 0
        %3276 = vmatmul.mubr.bf16.gmra.mrb[0].mxu0 %v3217
        %v3277 = vpop.f32.mrb[0].mxu0
        %v3278 = vadd.f32 0.0, %v3277
        %v3279 = vpop.f32.mrb[0].mxu0
        %v3280 = vpop.f32.mrb[0].mxu0
        %v3281 = vadd.f32 0.0, %v3280
        %v3282 = vpop.f32.mrb[0].mxu0
        %3283 = vdwg.mxu0
        %v3285 = vsel %vm2822, %v3179, 0
        %v3288 = vsel %vm2822, %v3180, 0
        %v3291 = vsel %vm2822, %v3181, 0
        %v3294 = vsel %vm2822, %v3182, 0
        %3296 = vmatprep.subr.bf16.mxu0 0
        %3297 = vmatpush1.bf16.msra.mxu0 %v3195
        %3298 = vmatprep.subr.bf16.mxu0 0
        %3299 = vmatpush1.bf16.msra.mxu0 %v3196
        %3300 = vmatprep.subr.bf16.mxu0 0
        %3301 = vmatpush1.bf16.msra.mxu0 %v3197
        %3302 = vmatprep.subr.bf16.mxu0 0
        %3303 = vmatpush1.bf16.msra.mxu0 %v3198
        %3304 = vmatprep.subr.bf16.mxu0 0
        %3305 = vmatpush1.bf16.msra.mxu0 0
        %3306 = vmatprep.subr.bf16.mxu0 0
        %3307 = vmatpush1.bf16.msra.mxu0 0
        %3308 = vmatprep.subr.bf16.mxu0 0
        %3309 = vmatpush1.bf16.msra.mxu0 0
        %3310 = vmatprep.subr.bf16.mxu0 0
        %3311 = vmatpush1.bf16.msra.mxu0 0
        %3312 = vmatprep.subr.bf16.mxu0 0
        %3313 = vmatpush1.bf16.msra.mxu0 0
        %3314 = vmatprep.subr.bf16.mxu0 0
        %3315 = vmatpush1.bf16.msra.mxu0 0
        %3316 = vmatprep.subr.bf16.mxu0 0
        %3317 = vmatpush1.bf16.msra.mxu0 0
        %3318 = vmatprep.subr.bf16.mxu0 0
        %3319 = vmatpush1.bf16.msra.mxu0 0
        %3320 = vmatprep.subr.bf16.mxu0 0
        %3321 = vmatpush1.bf16.msra.mxu0 0
        %3322 = vmatprep.subr.bf16.mxu0 0
        %3323 = vmatpush1.bf16.msra.mxu0 0
        %3324 = vmatprep.subr.bf16.mxu0 0
        %3325 = vmatpush1.bf16.msra.mxu0 0
        %3326 = vmatprep.subr.bf16.mxu0 0
        %3327 = vmatpush1.bf16.msra.mxu0 0
        %3328 = vmatprep.mubr.bf16.mxu0 0
        %3329 = vmatmul.mubr.bf16.gmra.mrb[0].mxu0 %v3285
        %v3330 = vpop.f32.mrb[0].mxu0
        %v3331 = vadd.f32 0.0, %v3330
        %v3332 = vpop.f32.mrb[0].mxu0
        %v3333 = vpop.f32.mrb[0].mxu0
        %v3334 = vadd.f32 0.0, %v3333
        %v3335 = vpop.f32.mrb[0].mxu0
        %3336 = vmatprep.mubr.bf16.mxu0 0
        %3337 = vmatmul.mubr.bf16.gmra.mrb[0].mxu0 %v3288
        %v3338 = vpop.f32.mrb[0].mxu0
        %v3339 = vadd.f32 0.0, %v3338
        %v3340 = vpop.f32.mrb[0].mxu0
        %v3341 = vpop.f32.mrb[0].mxu0
        %v3342 = vadd.f32 0.0, %v3341
        %v3343 = vpop.f32.mrb[0].mxu0
        %3344 = vmatprep.mubr.bf16.mxu0 0
        %3345 = vmatmul.mubr.bf16.gmra.mrb[0].mxu0 %v3291
        %v3346 = vpop.f32.mrb[0].mxu0
        %v3347 = vadd.f32 0.0, %v3346
        %v3348 = vpop.f32.mrb[0].mxu0
        %v3349 = vpop.f32.mrb[0].mxu0
        %v3350 = vadd.f32 0.0, %v3349
        %v3351 = vpop.f32.mrb[0].mxu0
        %3352 = vmatprep.mubr.bf16.mxu0 0
        %3353 = vmatmul.mubr.bf16.gmra.mrb[0].mxu0 %v3294
        %v3354 = vpop.f32.mrb[0].mxu0
        %v3355 = vadd.f32 0.0, %v3354
        %v3356 = vpop.f32.mrb[0].mxu0
        %v3357 = vpop.f32.mrb[0].mxu0
        %v3358 = vadd.f32 0.0, %v3357
        %v3359 = vpop.f32.mrb[0].mxu0
        %3360 = vdwg.mxu0
        %v3362 = vsel %vm2822, %v3183, 0
        %v3365 = vsel %vm2822, %v3184, 0
        %v3368 = vsel %vm2822, %v3185, 0
        %v3371 = vsel %vm2822, %v3186, 0
        %3373 = vmatprep.subr.bf16.mxu0 0
        %3374 = vmatpush1.bf16.msra.mxu0 %v3199
        %3375 = vmatprep.subr.bf16.mxu0 0
        %3376 = vmatpush1.bf16.msra.mxu0 %v3200
        %3377 = vmatprep.subr.bf16.mxu0 0
        %3378 = vmatpush1.bf16.msra.mxu0 %v3201
        %3379 = vmatprep.subr.bf16.mxu0 0
        %3380 = vmatpush1.bf16.msra.mxu0 %v3202
        %3381 = vmatprep.subr.bf16.mxu0 0
        %3382 = vmatpush1.bf16.msra.mxu0 0
        %3383 = vmatprep.subr.bf16.mxu0 0
        %3384 = vmatpush1.bf16.msra.mxu0 0
        %3385 = vmatprep.subr.bf16.mxu0 0
        %3386 = vmatpush1.bf16.msra.mxu0 0
        %3387 = vmatprep.subr.bf16.mxu0 0
        %3388 = vmatpush1.bf16.msra.mxu0 0
        %3389 = vmatprep.subr.bf16.mxu0 0
        %3390 = vmatpush1.bf16.msra.mxu0 0
        %3391 = vmatprep.subr.bf16.mxu0 0
        %3392 = vmatpush1.bf16.msra.mxu0 0
        %3393 = vmatprep.subr.bf16.mxu0 0
        %3394 = vmatpush1.bf16.msra.mxu0 0
        %3395 = vmatprep.subr.bf16.mxu0 0
        %3396 = vmatpush1.bf16.msra.mxu0 0
        %3397 = vmatprep.subr.bf16.mxu0 0
        %3398 = vmatpush1.bf16.msra.mxu0 0
        %3399 = vmatprep.subr.bf16.mxu0 0
        %3400 = vmatpush1.bf16.msra.mxu0 0
        %3401 = vmatprep.subr.bf16.mxu0 0
        %3402 = vmatpush1.bf16.msra.mxu0 0
        %3403 = vmatprep.subr.bf16.mxu0 0
        %3404 = vmatpush1.bf16.msra.mxu0 0
        %3405 = vmatprep.mubr.bf16.mxu0 0
        %3406 = vmatmul.mubr.bf16.gmra.mrb[0].mxu0 %v3362
        %v3407 = vpop.f32.mrb[0].mxu0
        %v3408 = vadd.f32 0.0, %v3407
        %v3409 = vpop.f32.mrb[0].mxu0
        %v3410 = vpop.f32.mrb[0].mxu0
        %v3411 = vadd.f32 0.0, %v3410
        %v3412 = vpop.f32.mrb[0].mxu0
        %3413 = vmatprep.mubr.bf16.mxu0 0
        %3414 = vmatmul.mubr.bf16.gmra.mrb[0].mxu0 %v3365
        %v3415 = vpop.f32.mrb[0].mxu0
        %v3416 = vadd.f32 0.0, %v3415
        %v3417 = vpop.f32.mrb[0].mxu0
        %v3418 = vpop.f32.mrb[0].mxu0
        %v3419 = vadd.f32 0.0, %v3418
        %v3420 = vpop.f32.mrb[0].mxu0
        %3421 = vmatprep.mubr.bf16.mxu0 0
        %3422 = vmatmul.mubr.bf16.gmra.mrb[0].mxu0 %v3368
        %v3423 = vpop.f32.mrb[0].mxu0
        %v3424 = vadd.f32 0.0, %v3423
        %v3425 = vpop.f32.mrb[0].mxu0
        %v3426 = vpop.f32.mrb[0].mxu0
        %v3427 = vadd.f32 0.0, %v3426
        %v3428 = vpop.f32.mrb[0].mxu0
        %3429 = vmatprep.mubr.bf16.mxu0 0
        %3430 = vmatmul.mubr.bf16.gmra.mrb[0].mxu0 %v3371
        %v3431 = vpop.f32.mrb[0].mxu0
        %v3432 = vadd.f32 0.0, %v3431
        %v3433 = vpop.f32.mrb[0].mxu0
        %v3434 = vpop.f32.mrb[0].mxu0
        %v3435 = vadd.f32 0.0, %v3434
        %v3436 = vpop.f32.mrb[0].mxu0
        %3437 = vdwg.mxu0
        %v3439 = vsel %vm2822, %v3187, 0
        %v3442 = vsel %vm2822, %v3188, 0
        %v3445 = vsel %vm2822, %v3189, 0
        %v3448 = vsel %vm2822, %v3190, 0
        %3450 = vmatprep.subr.bf16.mxu0 0
        %3451 = vmatpush1.bf16.msra.mxu0 %v3203
        %3452 = vmatprep.subr.bf16.mxu0 0
        %3453 = vmatpush1.bf16.msra.mxu0 %v3204
        %3454 = vmatprep.subr.bf16.mxu0 0
        %3455 = vmatpush1.bf16.msra.mxu0 %v3205
        %3456 = vmatprep.subr.bf16.mxu0 0
        %3457 = vmatpush1.bf16.msra.mxu0 %v3206
        %3458 = vmatprep.subr.bf16.mxu0 0
        %3459 = vmatpush1.bf16.msra.mxu0 0
        %3460 = vmatprep.subr.bf16.mxu0 0
        %3461 = vmatpush1.bf16.msra.mxu0 0
        %3462 = vmatprep.subr.bf16.mxu0 0
        %3463 = vmatpush1.bf16.msra.mxu0 0
        %3464 = vmatprep.subr.bf16.mxu0 0
        %3465 = vmatpush1.bf16.msra.mxu0 0
        %3466 = vmatprep.subr.bf16.mxu0 0
        %3467 = vmatpush1.bf16.msra.mxu0 0
        %3468 = vmatprep.subr.bf16.mxu0 0
        %3469 = vmatpush1.bf16.msra.mxu0 0
        %3470 = vmatprep.subr.bf16.mxu0 0
        %3471 = vmatpush1.bf16.msra.mxu0 0
        %3472 = vmatprep.subr.bf16.mxu0 0
        %3473 = vmatpush1.bf16.msra.mxu0 0
        %3474 = vmatprep.subr.bf16.mxu0 0
        %3475 = vmatpush1.bf16.msra.mxu0 0
        %3476 = vmatprep.subr.bf16.mxu0 0
        %3477 = vmatpush1.bf16.msra.mxu0 0
        %3478 = vmatprep.subr.bf16.mxu0 0
        %3479 = vmatpush1.bf16.msra.mxu0 0
        %3480 = vmatprep.subr.bf16.mxu0 0
        %3481 = vmatpush1.bf16.msra.mxu0 0
        %3482 = vmatprep.mubr.bf16.mxu0 0
        %3483 = vmatmul.mubr.bf16.gmra.mrb[0].mxu0 %v3439
        %v3484 = vpop.f32.mrb[0].mxu0
        %v3485 = vadd.f32 0.0, %v3484
        %v3486 = vpop.f32.mrb[0].mxu0
        %v3487 = vpop.f32.mrb[0].mxu0
        %v3488 = vadd.f32 0.0, %v3487
        %v3489 = vpop.f32.mrb[0].mxu0
        %3490 = vmatprep.mubr.bf16.mxu0 0
        %3491 = vmatmul.mubr.bf16.gmra.mrb[0].mxu0 %v3442
        %v3492 = vpop.f32.mrb[0].mxu0
        %v3493 = vadd.f32 0.0, %v3492
        %v3494 = vpop.f32.mrb[0].mxu0
        %v3495 = vpop.f32.mrb[0].mxu0
        %v3496 = vadd.f32 0.0, %v3495
        %v3497 = vpop.f32.mrb[0].mxu0
        %3498 = vmatprep.mubr.bf16.mxu0 0
        %3499 = vmatmul.mubr.bf16.gmra.mrb[0].mxu0 %v3445
        %v3500 = vpop.f32.mrb[0].mxu0
        %v3501 = vadd.f32 0.0, %v3500
        %v3502 = vpop.f32.mrb[0].mxu0
        %v3503 = vpop.f32.mrb[0].mxu0
        %v3504 = vadd.f32 0.0, %v3503
        %v3505 = vpop.f32.mrb[0].mxu0
        %3506 = vmatprep.mubr.bf16.mxu0 0
        %3507 = vmatmul.mubr.bf16.gmra.mrb[0].mxu0 %v3448
        %v3508 = vpop.f32.mrb[0].mxu0
        %v3509 = vadd.f32 0.0, %v3508
        %v3510 = vpop.f32.mrb[0].mxu0
        %v3511 = vpop.f32.mrb[0].mxu0
        %v3512 = vadd.f32 0.0, %v3511
        %v3513 = vpop.f32.mrb[0].mxu0
        %3514 = vdwg.mxu0
        %v3515 = vpack.c.bf16 %v3257, %v3254
        %v3516 = vpack.c.bf16 %v3265, %v3262
        %v3517 = vpack.c.bf16 %v3273, %v3270
        %v3518 = vpack.c.bf16 %v3281, %v3278
        %v3519 = vpack.c.bf16 %v3334, %v3331
        %v3520 = vpack.c.bf16 %v3342, %v3339
        %v3521 = vpack.c.bf16 %v3350, %v3347
        %v3522 = vpack.c.bf16 %v3358, %v3355
        %v3523 = vpack.c.bf16 %v3411, %v3408
        %v3524 = vpack.c.bf16 %v3419, %v3416
        %v3525 = vpack.c.bf16 %v3427, %v3424
        %v3526 = vpack.c.bf16 %v3435, %v3432
        %v3527 = vpack.c.bf16 %v3488, %v3485
        %v3528 = vpack.c.bf16 %v3496, %v3493
        %v3529 = vpack.c.bf16 %v3504, %v3501
        %v3530 = vpack.c.bf16 %v3512, %v3509
        %v3535 = vunpack.c.l.b16 %v1028
        %v3536 = vunpack.c.l.b16 %v1029
        %v3537 = vunpack.c.l.b16 %v1030
        %v3538 = vunpack.c.l.b16 %v1031
        %v3539 = vpack.c.b16 %v3536, %v3535
        %v3540 = vpack.c.b16 %v3538, %v3537
        %v3544 = vsel %vm2433, %v3515, 0
        %v3547 = vsel %vm2433, %v3516, 0
        %v3550 = vsel %vm2433, %v3517, 0
        %v3553 = vsel %vm2433, %v3518, 0
        %3555 = vmatprep.subr.bf16.mxu0 0
        %3556 = vmatpush1.bf16.msra.mxu0 %v3539
        %3557 = vmatprep.subr.bf16.mxu0 0
        %3558 = vmatpush1.bf16.msra.mxu0 %v3540
        %3559 = vmatprep.subr.bf16.mxu0 0
        %3560 = vmatpush1.bf16.msra.mxu0 0
        %3561 = vmatprep.subr.bf16.mxu0 0
        %3562 = vmatpush1.bf16.msra.mxu0 0
        %3563 = vmatprep.subr.bf16.mxu0 0
        %3564 = vmatpush1.bf16.msra.mxu0 0
        %3565 = vmatprep.subr.bf16.mxu0 0
        %3566 = vmatpush1.bf16.msra.mxu0 0
        %3567 = vmatprep.subr.bf16.mxu0 0
        %3568 = vmatpush1.bf16.msra.mxu0 0
        %3569 = vmatprep.subr.bf16.mxu0 0
        %3570 = vmatpush1.bf16.msra.mxu0 0
        %3571 = vmatprep.subr.bf16.mxu0 0
        %3572 = vmatpush1.bf16.msra.mxu0 0
        %3573 = vmatprep.subr.bf16.mxu0 0
        %3574 = vmatpush1.bf16.msra.mxu0 0
        %3575 = vmatprep.subr.bf16.mxu0 0
        %3576 = vmatpush1.bf16.msra.mxu0 0
        %3577 = vmatprep.subr.bf16.mxu0 0
        %3578 = vmatpush1.bf16.msra.mxu0 0
        %3579 = vmatprep.subr.bf16.mxu0 0
        %3580 = vmatpush1.bf16.msra.mxu0 0
        %3581 = vmatprep.subr.bf16.mxu0 0
        %3582 = vmatpush1.bf16.msra.mxu0 0
        %3583 = vmatprep.subr.bf16.mxu0 0
        %3584 = vmatpush1.bf16.msra.mxu0 0
        %3585 = vmatprep.subr.bf16.mxu0 0
        %3586 = vmatpush1.bf16.msra.mxu0 0
        %3587 = vmatprep.mubr.bf16.mxu0 0
        %3588 = vmatmul.mubr.bf16.gmra.mrb[0].mxu0 %v3544
        %v3589 = vpop.f32.mrb[0].mxu0
        %v3590 = vadd.f32 0.0, %v3589
        %v3591 = vpop.f32.mrb[0].mxu0
        %v3592 = vpop.f32.mrb[0].mxu0
        %v3593 = vadd.f32 0.0, %v3592
        %v3594 = vpop.f32.mrb[0].mxu0
        %3595 = vmatprep.mubr.bf16.mxu0 0
        %3596 = vmatmul.mubr.bf16.gmra.mrb[0].mxu0 %v3547
        %v3597 = vpop.f32.mrb[0].mxu0
        %v3598 = vadd.f32 0.0, %v3597
        %v3599 = vpop.f32.mrb[0].mxu0
        %v3600 = vpop.f32.mrb[0].mxu0
        %v3601 = vadd.f32 0.0, %v3600
        %v3602 = vpop.f32.mrb[0].mxu0
        %3603 = vmatprep.mubr.bf16.mxu0 0
        %3604 = vmatmul.mubr.bf16.gmra.mrb[0].mxu0 %v3550
        %v3605 = vpop.f32.mrb[0].mxu0
        %v3606 = vadd.f32 0.0, %v3605
        %v3607 = vpop.f32.mrb[0].mxu0
        %v3608 = vpop.f32.mrb[0].mxu0
        %v3609 = vadd.f32 0.0, %v3608
        %v3610 = vpop.f32.mrb[0].mxu0
        %3611 = vmatprep.mubr.bf16.mxu0 0
        %3612 = vmatmul.mubr.bf16.gmra.mrb[0].mxu0 %v3553
        %v3613 = vpop.f32.mrb[0].mxu0
        %v3614 = vadd.f32 0.0, %v3613
        %v3615 = vpop.f32.mrb[0].mxu0
        %v3616 = vpop.f32.mrb[0].mxu0
        %v3617 = vadd.f32 0.0, %v3616
        %v3618 = vpop.f32.mrb[0].mxu0
        %3619 = vdwg.mxu0
        %v3624 = vunpack.c.l.b16 %v1032
        %v3625 = vunpack.c.l.b16 %v1033
        %v3626 = vunpack.c.l.b16 %v1034
        %v3627 = vunpack.c.l.b16 %v1035
        %v3628 = vpack.c.b16 %v3625, %v3624
        %v3629 = vpack.c.b16 %v3627, %v3626
        %v3633 = vsel %vm2433, %v3519, 0
        %v3636 = vsel %vm2433, %v3520, 0
        %v3639 = vsel %vm2433, %v3521, 0
        %v3642 = vsel %vm2433, %v3522, 0
        %3644 = vmatprep.subr.bf16.mxu0 0
        %3645 = vmatpush1.bf16.msra.mxu0 %v3628
        %3646 = vmatprep.subr.bf16.mxu0 0
        %3647 = vmatpush1.bf16.msra.mxu0 %v3629
        %3648 = vmatprep.subr.bf16.mxu0 0
        %3649 = vmatpush1.bf16.msra.mxu0 0
        %3650 = vmatprep.subr.bf16.mxu0 0
        %3651 = vmatpush1.bf16.msra.mxu0 0
        %3652 = vmatprep.subr.bf16.mxu0 0
        %3653 = vmatpush1.bf16.msra.mxu0 0
        %3654 = vmatprep.subr.bf16.mxu0 0
        %3655 = vmatpush1.bf16.msra.mxu0 0
        %3656 = vmatprep.subr.bf16.mxu0 0
        %3657 = vmatpush1.bf16.msra.mxu0 0
        %3658 = vmatprep.subr.bf16.mxu0 0
        %3659 = vmatpush1.bf16.msra.mxu0 0
        %3660 = vmatprep.subr.bf16.mxu0 0
        %3661 = vmatpush1.bf16.msra.mxu0 0
        %3662 = vmatprep.subr.bf16.mxu0 0
        %3663 = vmatpush1.bf16.msra.mxu0 0
        %3664 = vmatprep.subr.bf16.mxu0 0
        %3665 = vmatpush1.bf16.msra.mxu0 0
        %3666 = vmatprep.subr.bf16.mxu0 0
        %3667 = vmatpush1.bf16.msra.mxu0 0
        %3668 = vmatprep.subr.bf16.mxu0 0
        %3669 = vmatpush1.bf16.msra.mxu0 0
        %3670 = vmatprep.subr.bf16.mxu0 0
        %3671 = vmatpush1.bf16.msra.mxu0 0
        %3672 = vmatprep.subr.bf16.mxu0 0
        %3673 = vmatpush1.bf16.msra.mxu0 0
        %3674 = vmatprep.subr.bf16.mxu0 0
        %3675 = vmatpush1.bf16.msra.mxu0 0
        %3676 = vmatprep.mubr.bf16.mxu0 0
        %3677 = vmatmul.mubr.bf16.gmra.mrb[0].mxu0 %v3633
        %v3678 = vpop.f32.mrb[0].mxu0
        %v3679 = vadd.f32 0.0, %v3678
        %v3680 = vpop.f32.mrb[0].mxu0
        %v3681 = vpop.f32.mrb[0].mxu0
        %v3682 = vadd.f32 0.0, %v3681
        %v3683 = vpop.f32.mrb[0].mxu0
        %3684 = vmatprep.mubr.bf16.mxu0 0
        %3685 = vmatmul.mubr.bf16.gmra.mrb[0].mxu0 %v3636
        %v3686 = vpop.f32.mrb[0].mxu0
        %v3687 = vadd.f32 0.0, %v3686
        %v3688 = vpop.f32.mrb[0].mxu0
        %v3689 = vpop.f32.mrb[0].mxu0
        %v3690 = vadd.f32 0.0, %v3689
        %v3691 = vpop.f32.mrb[0].mxu0
        %3692 = vmatprep.mubr.bf16.mxu0 0
        %3693 = vmatmul.mubr.bf16.gmra.mrb[0].mxu0 %v3639
        %v3694 = vpop.f32.mrb[0].mxu0
        %v3695 = vadd.f32 0.0, %v3694
        %v3696 = vpop.f32.mrb[0].mxu0
        %v3697 = vpop.f32.mrb[0].mxu0
        %v3698 = vadd.f32 0.0, %v3697
        %v3699 = vpop.f32.mrb[0].mxu0
        %3700 = vmatprep.mubr.bf16.mxu0 0
        %3701 = vmatmul.mubr.bf16.gmra.mrb[0].mxu0 %v3642
        %v3702 = vpop.f32.mrb[0].mxu0
        %v3703 = vadd.f32 0.0, %v3702
        %v3704 = vpop.f32.mrb[0].mxu0
        %v3705 = vpop.f32.mrb[0].mxu0
        %v3706 = vadd.f32 0.0, %v3705
        %v3707 = vpop.f32.mrb[0].mxu0
        %3708 = vdwg.mxu0
        %v3713 = vunpack.c.l.b16 %v1036
        %v3714 = vunpack.c.l.b16 %v1037
        %v3715 = vunpack.c.l.b16 %v1038
        %v3716 = vunpack.c.l.b16 %v1039
        %v3717 = vpack.c.b16 %v3714, %v3713
        %v3718 = vpack.c.b16 %v3716, %v3715
        %v3722 = vsel %vm2433, %v3523, 0
        %v3725 = vsel %vm2433, %v3524, 0
        %v3728 = vsel %vm2433, %v3525, 0
        %v3731 = vsel %vm2433, %v3526, 0
        %3733 = vmatprep.subr.bf16.mxu0 0
        %3734 = vmatpush1.bf16.msra.mxu0 %v3717
        %3735 = vmatprep.subr.bf16.mxu0 0
        %3736 = vmatpush1.bf16.msra.mxu0 %v3718
        %3737 = vmatprep.subr.bf16.mxu0 0
        %3738 = vmatpush1.bf16.msra.mxu0 0
        %3739 = vmatprep.subr.bf16.mxu0 0
        %3740 = vmatpush1.bf16.msra.mxu0 0
        %3741 = vmatprep.subr.bf16.mxu0 0
        %3742 = vmatpush1.bf16.msra.mxu0 0
        %3743 = vmatprep.subr.bf16.mxu0 0
        %3744 = vmatpush1.bf16.msra.mxu0 0
        %3745 = vmatprep.subr.bf16.mxu0 0
        %3746 = vmatpush1.bf16.msra.mxu0 0
        %3747 = vmatprep.subr.bf16.mxu0 0
        %3748 = vmatpush1.bf16.msra.mxu0 0
        %3749 = vmatprep.subr.bf16.mxu0 0
        %3750 = vmatpush1.bf16.msra.mxu0 0
        %3751 = vmatprep.subr.bf16.mxu0 0
        %3752 = vmatpush1.bf16.msra.mxu0 0
        %3753 = vmatprep.subr.bf16.mxu0 0
        %3754 = vmatpush1.bf16.msra.mxu0 0
        %3755 = vmatprep.subr.bf16.mxu0 0
        %3756 = vmatpush1.bf16.msra.mxu0 0
        %3757 = vmatprep.subr.bf16.mxu0 0
        %3758 = vmatpush1.bf16.msra.mxu0 0
        %3759 = vmatprep.subr.bf16.mxu0 0
        %3760 = vmatpush1.bf16.msra.mxu0 0
        %3761 = vmatprep.subr.bf16.mxu0 0
        %3762 = vmatpush1.bf16.msra.mxu0 0
        %3763 = vmatprep.subr.bf16.mxu0 0
        %3764 = vmatpush1.bf16.msra.mxu0 0
        %3765 = vmatprep.mubr.bf16.mxu0 0
        %3766 = vmatmul.mubr.bf16.gmra.mrb[0].mxu0 %v3722
        %v3767 = vpop.f32.mrb[0].mxu0
        %v3768 = vadd.f32 0.0, %v3767
        %v3769 = vpop.f32.mrb[0].mxu0
        %v3770 = vpop.f32.mrb[0].mxu0
        %v3771 = vadd.f32 0.0, %v3770
        %v3772 = vpop.f32.mrb[0].mxu0
        %3773 = vmatprep.mubr.bf16.mxu0 0
        %3774 = vmatmul.mubr.bf16.gmra.mrb[0].mxu0 %v3725
        %v3775 = vpop.f32.mrb[0].mxu0
        %v3776 = vadd.f32 0.0, %v3775
        %v3777 = vpop.f32.mrb[0].mxu0
        %v3778 = vpop.f32.mrb[0].mxu0
        %v3779 = vadd.f32 0.0, %v3778
        %v3780 = vpop.f32.mrb[0].mxu0
        %3781 = vmatprep.mubr.bf16.mxu0 0
        %3782 = vmatmul.mubr.bf16.gmra.mrb[0].mxu0 %v3728
        %v3783 = vpop.f32.mrb[0].mxu0
        %v3784 = vadd.f32 0.0, %v3783
        %v3785 = vpop.f32.mrb[0].mxu0
        %v3786 = vpop.f32.mrb[0].mxu0
        %v3787 = vadd.f32 0.0, %v3786
        %v3788 = vpop.f32.mrb[0].mxu0
        %3789 = vmatprep.mubr.bf16.mxu0 0
        %3790 = vmatmul.mubr.bf16.gmra.mrb[0].mxu0 %v3731
        %v3791 = vpop.f32.mrb[0].mxu0
        %v3792 = vadd.f32 0.0, %v3791
        %v3793 = vpop.f32.mrb[0].mxu0
        %v3794 = vpop.f32.mrb[0].mxu0
        %v3795 = vadd.f32 0.0, %v3794
        %v3796 = vpop.f32.mrb[0].mxu0
        %3797 = vdwg.mxu0
        %v3802 = vunpack.c.l.b16 %v1040
        %v3803 = vunpack.c.l.b16 %v1041
        %v3804 = vunpack.c.l.b16 %v1042
        %v3805 = vunpack.c.l.b16 %v1043
        %v3806 = vpack.c.b16 %v3803, %v3802
        %v3807 = vpack.c.b16 %v3805, %v3804
        %v3811 = vsel %vm2433, %v3527, 0
        %v3814 = vsel %vm2433, %v3528, 0
        %v3817 = vsel %vm2433, %v3529, 0
        %v3820 = vsel %vm2433, %v3530, 0
        %3822 = vmatprep.subr.bf16.mxu0 0
        %3823 = vmatpush1.bf16.msra.mxu0 %v3806
        %3824 = vmatprep.subr.bf16.mxu0 0
        %3825 = vmatpush1.bf16.msra.mxu0 %v3807
        %3826 = vmatprep.subr.bf16.mxu0 0
        %3827 = vmatpush1.bf16.msra.mxu0 0
        %3828 = vmatprep.subr.bf16.mxu0 0
        %3829 = vmatpush1.bf16.msra.mxu0 0
        %3830 = vmatprep.subr.bf16.mxu0 0
        %3831 = vmatpush1.bf16.msra.mxu0 0
        %3832 = vmatprep.subr.bf16.mxu0 0
        %3833 = vmatpush1.bf16.msra.mxu0 0
        %3834 = vmatprep.subr.bf16.mxu0 0
        %3835 = vmatpush1.bf16.msra.mxu0 0
        %3836 = vmatprep.subr.bf16.mxu0 0
        %3837 = vmatpush1.bf16.msra.mxu0 0
        %3838 = vmatprep.subr.bf16.mxu0 0
        %3839 = vmatpush1.bf16.msra.mxu0 0
        %3840 = vmatprep.subr.bf16.mxu0 0
        %3841 = vmatpush1.bf16.msra.mxu0 0
        %3842 = vmatprep.subr.bf16.mxu0 0
        %3843 = vmatpush1.bf16.msra.mxu0 0
        %3844 = vmatprep.subr.bf16.mxu0 0
        %3845 = vmatpush1.bf16.msra.mxu0 0
        %3846 = vmatprep.subr.bf16.mxu0 0
        %3847 = vmatpush1.bf16.msra.mxu0 0
        %3848 = vmatprep.subr.bf16.mxu0 0
        %3849 = vmatpush1.bf16.msra.mxu0 0
        %3850 = vmatprep.subr.bf16.mxu0 0
        %3851 = vmatpush1.bf16.msra.mxu0 0
        %3852 = vmatprep.subr.bf16.mxu0 0
        %3853 = vmatpush1.bf16.msra.mxu0 0
        %3854 = vmatprep.mubr.bf16.mxu0 0
        %3855 = vmatmul.mubr.bf16.gmra.mrb[0].mxu0 %v3811
        %v3856 = vpop.f32.mrb[0].mxu0
        %v3857 = vadd.f32 0.0, %v3856
        %v3858 = vpop.f32.mrb[0].mxu0
        %v3859 = vpop.f32.mrb[0].mxu0
        %v3860 = vadd.f32 0.0, %v3859
        %v3861 = vpop.f32.mrb[0].mxu0
        %3862 = vmatprep.mubr.bf16.mxu0 0
        %3863 = vmatmul.mubr.bf16.gmra.mrb[0].mxu0 %v3814
        %v3864 = vpop.f32.mrb[0].mxu0
        %v3865 = vadd.f32 0.0, %v3864
        %v3866 = vpop.f32.mrb[0].mxu0
        %v3867 = vpop.f32.mrb[0].mxu0
        %v3868 = vadd.f32 0.0, %v3867
        %v3869 = vpop.f32.mrb[0].mxu0
        %3870 = vmatprep.mubr.bf16.mxu0 0
        %3871 = vmatmul.mubr.bf16.gmra.mrb[0].mxu0 %v3817
        %v3872 = vpop.f32.mrb[0].mxu0
        %v3873 = vadd.f32 0.0, %v3872
        %v3874 = vpop.f32.mrb[0].mxu0
        %v3875 = vpop.f32.mrb[0].mxu0
        %v3876 = vadd.f32 0.0, %v3875
        %v3877 = vpop.f32.mrb[0].mxu0
        %3878 = vmatprep.mubr.bf16.mxu0 0
        %3879 = vmatmul.mubr.bf16.gmra.mrb[0].mxu0 %v3820
        %v3880 = vpop.f32.mrb[0].mxu0
        %v3881 = vadd.f32 0.0, %v3880
        %v3882 = vpop.f32.mrb[0].mxu0
        %v3883 = vpop.f32.mrb[0].mxu0
        %v3884 = vadd.f32 0.0, %v3883
        %v3885 = vpop.f32.mrb[0].mxu0
        %3886 = vdwg.mxu0
        %v3887 = vadd.f32 %v3590, %v3679
        %v3888 = vadd.f32 %v3887, %v3768
        %v3889 = vadd.f32 %v3888, %v3857
        %v3890 = vadd.f32 %v3593, %v3682
        %v3891 = vadd.f32 %v3890, %v3771
        %v3892 = vadd.f32 %v3891, %v3860
        %v3893 = vadd.f32 %v3598, %v3687
        %v3894 = vadd.f32 %v3893, %v3776
        %v3895 = vadd.f32 %v3894, %v3865
        %v3896 = vadd.f32 %v3601, %v3690
        %v3897 = vadd.f32 %v3896, %v3779
        %v3898 = vadd.f32 %v3897, %v3868
        %v3899 = vadd.f32 %v3606, %v3695
        %v3900 = vadd.f32 %v3899, %v3784
        %v3901 = vadd.f32 %v3900, %v3873
        %v3902 = vadd.f32 %v3609, %v3698
        %v3903 = vadd.f32 %v3902, %v3787
        %v3904 = vadd.f32 %v3903, %v3876
        %v3905 = vadd.f32 %v3614, %v3703
        %v3906 = vadd.f32 %v3905, %v3792
        %v3907 = vadd.f32 %v3906, %v3881
        %v3908 = vadd.f32 %v3617, %v3706
        %v3909 = vadd.f32 %v3908, %v3795
        %v3910 = vadd.f32 %v3909, %v3884
        %v3912 = vlaneseq
        %v3913 = vshrl.u32 %v3912, 7
        %v3914 = vsub.s32 0, %v3913
        %v3915 = vrot.slane %v1044, %v3914
        %v3917 = vadd.f32 %v3889, %v3915
        %v3918 = vadd.f32 %v3892, %v3915
        %v3919 = vadd.f32 %v3895, %v3915
        %v3920 = vadd.f32 %v3898, %v3915
        %v3921 = vadd.f32 %v3901, %v3915
        %v3922 = vadd.f32 %v3904, %v3915
        %v3923 = vadd.f32 %v3907, %v3915
        %v3924 = vadd.f32 %v3910, %v3915
        %v3925 = vadd.f32 %v431, %v3917
        %v3926 = vadd.f32 %v432, %v3918
        %v3927 = vadd.f32 %v433, %v3919
        %v3928 = vadd.f32 %v434, %v3920
        %v3929 = vadd.f32 %v435, %v3921
        %v3930 = vadd.f32 %v436, %v3922
        %v3931 = vadd.f32 %v437, %v3923
        %v3932 = vadd.f32 %v438, %v3924
        %3933 = vst [vmem:[%s410] sm:$0xff] %v3925
        %3934 = vst [vmem:[%s410 + $0x8] sm:$0xff] %v3926
        %3935 = vst [vmem:[%s410 + $0x10] sm:$0xff] %v3927
        %3936 = vst [vmem:[%s410 + $0x18] sm:$0xff] %v3928
        %3937 = vst [vmem:[%s410 + $0x20] sm:$0xff] %v3929
        %3938 = vst [vmem:[%s410 + $0x28] sm:$0xff] %v3930
        %3939 = vst [vmem:[%s410 + $0x30] sm:$0xff] %v3931
        %3940 = vst [vmem:[%s410 + $0x38] sm:$0xff] %v3932
        %s3941 = sand.u32 %s253, 1
        %s3942 = scalar_lea.sflag [#allocation3], %s3941
        %s3943 = sand.u32 %s253, 1
        %s3944 = smul.addr %s3943, 64
        %s3945 = scalar_lea.vmem [#allocation2], %s3944
        %s3946 = sand.u32 %s30, 1
        %s3947 = scalar_lea.sflag [#allocation5], %s3946
        %s3948 = sand.u32 %s279, 1
        %s3949 = smul.addr %s3948, 64
        %s3950 = scalar_lea.vmem [#allocation4], %s3949
        %s3951 = sand.u32 %s30, 1
        %s3952 = scalar_lea.sflag [#allocation5], %s3951
        %s3953 = sand.u32 %s305, 1
        %s3954 = smul.addr %s3953, 64
        %s3955 = scalar_lea.vmem [#allocation6], %s3954
        // Predicated region
        $region61: #{tpu_custom_call.1} parent=59 // pred_check
          %p3956 = pneg %p263
        $region62: #{tpu_custom_call.1} parent=59 // pred_check_branch
          %3958 = sbr.rel (%p3956) target = $region64
        $region63: #{tpu_custom_call.1} parent=59 // pred_region
          %s3960 = ssub.s32 1024, 1024
          %3961 = vsyncadd %s3942, %s3960
          %s3962 = smul.addr %s30, 8
          %s3963 = smul.addr %s3962, 128
          %s3964 = scalar_lea.hbm %s10, %s3963
          %s3965 = sshll.u32 %s3945, 4
          %s3966 = int_to_ptr.vmem [resolvable:$true] %s3965
          %3971 = dma.vmem_to_hbm [thread:$0]  %s3966, 1024, %s3964, %s3942, 128, 128, 8
        $region64: #{tpu_custom_call.1} parent=59 // pred_fallthru
          _
        // Predicated region
        $region65: #{tpu_custom_call.1} parent=59 // pred_check
          %p3972 = pneg %p289
        $region66: #{tpu_custom_call.1} parent=59 // pred_check_branch
          %3974 = sbr.rel (%p3972) target = $region68
        $region67: #{tpu_custom_call.1} parent=59 // pred_region
          %s3976 = ssub.s32 1024, 1024
          %3977 = vsyncadd %s3947, %s3976
          %s3978 = smul.addr %s30, 8
          %s3979 = smul.addr %s3978, 128
          %s3980 = scalar_lea.hbm %s11, %s3979
          %s3981 = sshll.u32 %s3950, 4
          %s3982 = int_to_ptr.vmem [resolvable:$true] %s3981
          %3987 = dma.vmem_to_hbm [thread:$0]  %s3982, 1024, %s3980, %s3947, 128, 128, 8
        $region68: #{tpu_custom_call.1} parent=59 // pred_fallthru
          _
        // Predicated region
        $region69: #{tpu_custom_call.1} parent=59 // pred_check
          %p3988 = pneg %p315
        $region70: #{tpu_custom_call.1} parent=59 // pred_check_branch
          %3990 = sbr.rel (%p3988) target = $region72
        $region71: #{tpu_custom_call.1} parent=59 // pred_region
          %s3992 = ssub.s32 1024, 1024
          %3993 = vsyncadd %s3952, %s3992
          %s3994 = smul.addr %s30, 8
          %s3995 = smul.addr %s3994, 128
          %s3996 = scalar_lea.hbm %s12, %s3995
          %s3997 = sshll.u32 %s3955, 4
          %s3998 = int_to_ptr.vmem [resolvable:$true] %s3997
          %4003 = dma.vmem_to_hbm [thread:$0]  %s3998, 1024, %s3996, %s3952, 128, 128, 8
        $region72: #{tpu_custom_call.1} parent=59 // pred_fallthru
          _
      $region60: #{tpu_custom_call.1} parent=5 // pred_fallthru
        _
      %p4004 = scmp.le.s32.totalorder 2, %s25
      // Predicated region
      $region73: #{tpu_custom_call.1} parent=5 // pred_check
        %p4005 = pneg %p4004
      $region74: #{tpu_custom_call.1} parent=5 // pred_check_branch
        %4007 = sbr.rel (%p4005) target = $region76
      $region75: #{tpu_custom_call.1} parent=5 // pred_region
        %s4008 = ssub.s32 %s25, 2
        // Predicated region
        $region77: #{tpu_custom_call.1} parent=75 // pred_check
          %p4009 = pneg %p269
        $region78: #{tpu_custom_call.1} parent=75 // pred_check_branch
          %4011 = sbr.rel (%p4009) target = $region80
        $region79: #{tpu_custom_call.1} parent=75 // pred_region
          %s4012 = sand.u32 %s254, 1
          %s4013 = scalar_lea.sflag [#allocation3], %s4012
          %s4014 = sand.u32 %s254, 1
          %s4015 = smul.addr %s4014, 64
          %s4016 = scalar_lea.vmem [#allocation2], %s4015
          %4017 = dma.done %s4013, 1024
        $region80: #{tpu_custom_call.1} parent=75 // pred_fallthru
          _
        // Predicated region
        $region81: #{tpu_custom_call.1} parent=75 // pred_check
          %p4018 = pneg %p295
        $region82: #{tpu_custom_call.1} parent=75 // pred_check_branch
          %4020 = sbr.rel (%p4018) target = $region84
        $region83: #{tpu_custom_call.1} parent=75 // pred_region
          %s4021 = sand.u32 %s31, 1
          %s4022 = scalar_lea.sflag [#allocation5], %s4021
          %s4023 = sand.u32 %s280, 1
          %s4024 = smul.addr %s4023, 64
          %s4025 = scalar_lea.vmem [#allocation4], %s4024
          %4026 = dma.done %s4022, 1024
        $region84: #{tpu_custom_call.1} parent=75 // pred_fallthru
          _
        // Predicated region
        $region85: #{tpu_custom_call.1} parent=75 // pred_check
          %p4027 = pneg %p321
        $region86: #{tpu_custom_call.1} parent=75 // pred_check_branch
          %4029 = sbr.rel (%p4027) target = $region88
        $region87: #{tpu_custom_call.1} parent=75 // pred_region
          %s4030 = sand.u32 %s31, 1
          %s4031 = scalar_lea.sflag [#allocation5], %s4030
          %s4032 = sand.u32 %s306, 1
          %s4033 = smul.addr %s4032, 64
          %s4034 = scalar_lea.vmem [#allocation6], %s4033
          %4035 = dma.done %s4031, 1024
        $region88: #{tpu_custom_call.1} parent=75 // pred_fallthru
          _
      $region76: #{tpu_custom_call.1} parent=5 // pred_fallthru
        _
    $region6: #{tpu_custom_call.1} parent=1 // loop_footer
      %s29 = sadd.s32 1, %s25
    $region7: #{tpu_custom_call.1} parent=1 // loop_footer_branch
      %24 = sbr.rel target = $region3
    $region8: #{tpu_custom_call.1} parent=1 // loop_exit
      _
    %4036 = vsyncpa [#allocation3], 1
    %s4037 = scalar_lea.sflag [#allocation3], 1
    %4038 = vsyncpa %s4037, 1
    %4039 = vsyncpa [#allocation5], 1
    %s4040 = scalar_lea.sflag [#allocation5], 1
    %4041 = vsyncpa %s4040, 1

</llo_original>
